<compile_context>
chip_gen: v6e
topology: v6e:2x2x1
jax: 0.10.0
libtpu: 0.0.40
codegen_flags: <defaults>
</compile_context>

<pallas_src>
import math

import jax
import jax.numpy as jnp
from jax.experimental import pallas as pl
from jax.experimental.pallas import tpu as pltpu


# ----------------------------------------------------------------------------
# Fused kernel factory: n_layer LSTM layers + Linear classifier, one kernel.
# ----------------------------------------------------------------------------
def _make_fused_kernel(n_layer, T, B, H):
    n_seq_bufs = 0 if n_layer == 1 else (1 if n_layer == 2 else 2)
    # Full unroll only for short static sequences; partial unroll otherwise.
    unroll_amt = True if T <= 16 else 8

    def kernel(*refs):
        # ---- unpack refs: inputs..., output, scratch... --------------------
        x_ref = refs[0]                              # (T*B, D0) f32
        p = 1
        layer_refs = []
        for _ in range(n_layer):
            layer_refs.append((refs[p], refs[p + 1], refs[p + 2]))
            p += 3                                   # wih (D,4H) bf16, whh (H,4H) bf16, b (1,4H) f32
        wcls_ref = refs[p]                           # (H, C) bf16
        bcls_ref = refs[p + 1]                       # (1, C) f32
        out_ref = refs[p + 2]                        # (B, C) f32
        xproj_sc = refs[p + 3]                       # (T*B, 4H) f32 scratch
        h_sc = refs[p + 4]                           # (B, H)    f32 scratch
        c_sc = refs[p + 5]                           # (B, H)    f32 scratch
        seq_bufs = refs[p + 6:p + 6 + n_seq_bufs]    # (T*B, H)  bf16 scratch(s)

        for l in range(n_layer):
            wih_ref, whh_ref, b_ref = layer_refs[l]
            in_ref = x_ref if l == 0 else seq_bufs[(l - 1) % n_seq_bufs]
            # Last layer: only the final hidden state is needed -> no seq write.
            seq_out = None if l == n_layer - 1 else seq_bufs[l % n_seq_bufs]

            # ---- hoisted input projection for ALL timesteps (one matmul) ----
            # bf16 x bf16 MXU operands, f32 accumulation; bias folded here
            # (off the serial path).
            src = in_ref[...]
            if src.dtype != jnp.bfloat16:
                src = src.astype(jnp.bfloat16)
            xproj_sc[...] = (
                jnp.dot(src, wih_ref[...], preferred_element_type=jnp.float32)
                + b_ref[...]
            )
            # TODO(synk): at large T*B, chunk this matmul over time blocks and
            # start layer l+1's chunks as soon as layer l has produced them
            # (software-pipeline across the layer boundary).

            h_sc[...] = jnp.zeros_like(h_sc)
            c_sc[...] = jnp.zeros_like(c_sc)

            def step(t, carry, whh_ref=whh_ref, seq_out=seq_out):
                row = pl.multiple_of(t * B, B)       # sublane-aligned row offset
                gx = xproj_sc[pl.ds(row, B), :]      # (B, 4H) precomputed x-part
                # TODO(synk): W_hh is loop-invariant; if a bundle dump shows the
                # (H,4H) RHS being re-pushed every step, switch to explicit
                # weight-stationary MXU driving (pltpu.matmul_push_rhs once per
                # layer + matmul_acc_lhs / matmul_pop per step).
                gates = gx + jnp.dot(
                    h_sc[...].astype(jnp.bfloat16), whh_ref[...],
                    preferred_element_type=jnp.float32)

                # Packed gate order is (i, f, o, g): sigmoid on the first 3H
                # lanes, tanh on the last H lanes -> half the per-step EUP work
                # of running both nonlinearities over the full 4H block.
                sig = jax.nn.sigmoid(gates[:, :3 * H])
                g = jnp.tanh(gates[:, 3 * H:])
                i = sig[:, 0 * H:1 * H]
                f = sig[:, 1 * H:2 * H]
                o = sig[:, 2 * H:3 * H]

                c_new = f * c_sc[...] + i * g        # f32 cell state
                h_new = o * jnp.tanh(c_new)
                c_sc[...] = c_new
                h_sc[...] = h_new
                if seq_out is not None:
                    seq_out[pl.ds(row, B), :] = h_new.astype(jnp.bfloat16)
                return carry

            jax.lax.fori_loop(0, T, step, 0, unroll=unroll_amt)

        # ---- fused classifier on the final hidden state ---------------------
        out_ref[...] = (
            jnp.dot(h_sc[...].astype(jnp.bfloat16), wcls_ref[...],
                    preferred_element_type=jnp.float32)
            + bcls_ref[...]
        )

    return kernel


# ----------------------------------------------------------------------------
# Forward wrapper: one pallas_call for the whole module.
# ----------------------------------------------------------------------------
def rnn_forward(x_btd, packed):
    """x_btd: (B, T, in_dim) batch-first (PyTorch layout).
    packed: params pre-packed by pack_params()."""
    B, T, D = x_btd.shape
    layers = packed["lstm"]
    n_layer = len(layers)
    H = layers[0]["whh"].shape[0]
    C = packed["cls_w"].shape[1]

    # TODO(synk): at production T*B*D this transpose is an extra HBM read+write
    # of the whole input; keep batch-major upstream and read timestep t inside
    # the kernel with a strided slice (pl.ds(t, B, stride=T)) instead.
    x_flat = jnp.transpose(x_btd, (1, 0, 2)).astype(jnp.float32).reshape(T * B, D)

    inputs = [x_flat]
    in_specs = [pl.BlockSpec((T * B, D), lambda: (0, 0))]
    for l, lay in enumerate(layers):
        d_in = D if l == 0 else H
        inputs += [lay["wih"], lay["whh"], lay["bias"]]
        in_specs += [
            pl.BlockSpec((d_in, 4 * H), lambda: (0, 0)),
            pl.BlockSpec((H, 4 * H), lambda: (0, 0)),
            pl.BlockSpec((1, 4 * H), lambda: (0, 0)),
        ]
    inputs += [packed["cls_w"], packed["cls_b"]]
    in_specs += [
        pl.BlockSpec((H, C), lambda: (0, 0)),
        pl.BlockSpec((1, C), lambda: (0, 0)),
    ]

    n_seq_bufs = 0 if n_layer == 1 else (1 if n_layer == 2 else 2)
    scratch_shapes = [
        pltpu.VMEM((T * B, 4 * H), jnp.float32),   # hoisted input projection
        pltpu.VMEM((B, H), jnp.float32),           # h state (f32 for accuracy)
        pltpu.VMEM((B, H), jnp.float32),           # c state (f32 for accuracy)
    ] + [pltpu.VMEM((T * B, H), jnp.bfloat16) for _ in range(n_seq_bufs)]

    # Re-derive the VMEM budget (f32 = 4B, bf16 = 2B) and pass it explicitly so
    # scaled-up configs don't silently hit the default scoped limit; cap at
    # v7x's 64 MiB physical VMEM.
    def _nbytes(shape, dtype):
        return math.prod(shape) * (2 if dtype == jnp.bfloat16 else 4)

    total = _nbytes((T * B, D), jnp.float32) + _nbytes((B, C), jnp.float32)
    for l in range(n_layer):
        d_in = D if l == 0 else H
        total += (_nbytes((d_in, 4 * H), jnp.bfloat16)
                  + _nbytes((H, 4 * H), jnp.bfloat16)
                  + _nbytes((1, 4 * H), jnp.float32))
    total += _nbytes((H, C), jnp.bfloat16) + _nbytes((1, C), jnp.float32)
    total += _nbytes((T * B, 4 * H), jnp.float32) + 2 * _nbytes((B, H), jnp.float32)
    total += n_seq_bufs * _nbytes((T * B, H), jnp.bfloat16)
    vmem_limit = int(min(64 << 20, max(8 << 20, 2 * total + (2 << 20))))

    # TODO(synk): for B >= 16 on v7x, split the batch across the two
    # TensorCores: grid=(2,), batch-half index_maps for x/out/scratch,
    # dimension_semantics=("parallel",).  Not done here (B=8 -> 4-row halves).
    # TODO(synk): for deep/wide configs, turn the Python layer loop into a
    # grid axis with stacked (n_layer, H, 4H) weights so BlockSpec prefetches
    # layer l+1's weights behind layer l's recurrence.
    return pl.pallas_call(
        _make_fused_kernel(n_layer, T, B, H),
        out_shape=jax.ShapeDtypeStruct((B, C), jnp.float32),
        in_specs=in_specs,
        out_specs=pl.BlockSpec((B, C), lambda: (0, 0)),
        scratch_shapes=scratch_shapes,
        compiler_params=pltpu.CompilerParams(vmem_limit_bytes=vmem_limit),
    )(*inputs)


# ----------------------------------------------------------------------------
# One-time parameter packing (no per-call transposes / bias adds; gate columns
# permuted (i,f,g,o) -> (i,f,o,g); MXU operands stored in bf16).
# ----------------------------------------------------------------------------
def _reorder_gates_ifgo_to_ifog(a, axis=0):
    i, f, g, o = jnp.split(a, 4, axis=axis)
    return jnp.concatenate([i, f, o, g], axis=axis)


def pack_params(params):
    packed_layers = []
    for lay in params["lstm"]:
        wih = _reorder_gates_ifgo_to_ifog(lay["w_ih"], axis=0).T        # (D, 4H)
        whh = _reorder_gates_ifgo_to_ifog(lay["w_hh"], axis=0).T        # (H, 4H)
        bias = _reorder_gates_ifgo_to_ifog(lay["b_ih"] + lay["b_hh"], axis=0)
        packed_layers.append({
            "wih": jnp.asarray(wih, jnp.bfloat16),
            "whh": jnp.asarray(whh, jnp.bfloat16),
            "bias": bias.reshape(1, -1).astype(jnp.float32),
        })
    return {
        "lstm": packed_layers,
        "cls_w": jnp.asarray(params["cls_w"].T, jnp.bfloat16),          # (H, C)
        "cls_b": params["cls_b"].reshape(1, -1).astype(jnp.float32),    # (1, C)
    }


# ----------------------------------------------------------------------------
# Deterministic parameter init (PyTorch-style uniform(-1/sqrt(H), 1/sqrt(H)))
# ----------------------------------------------------------------------------
def init_params(key, in_dim, hidden_dim, n_layer, n_class):
    k = 1.0 / jnp.sqrt(hidden_dim)
    layers = []
    for l in range(n_layer):
        d = in_dim if l == 0 else hidden_dim
        key, k1, k2, k3, k4 = jax.random.split(key, 5)
        layers.append({
            "w_ih": jax.random.uniform(k1, (4 * hidden_dim, d), jnp.float32, -k, k),
            "w_hh": jax.random.uniform(k2, (4 * hidden_dim, hidden_dim), jnp.float32, -k, k),
            "b_ih": jax.random.uniform(k3, (4 * hidden_dim,), jnp.float32, -k, k),
            "b_hh": jax.random.uniform(k4, (4 * hidden_dim,), jnp.float32, -k, k),
        })
    key, k5, k6 = jax.random.split(key, 3)
    return {
        "lstm": layers,
        "cls_w": jax.random.uniform(k5, (n_class, hidden_dim), jnp.float32, -k, k),
        "cls_b": jax.random.uniform(k6, (n_class,), jnp.float32, -k, k),
    }


# ----------------------------------------------------------------------------
# Pure-JAX f32 reference (PyTorch gate order) for correctness sanity check.
# ----------------------------------------------------------------------------
def rnn_forward_ref(x_btd, params):
    x = jnp.transpose(x_btd, (1, 0, 2))
    for layer in params["lstm"]:
        H = layer["w_hh"].shape[1]
        wih_t = layer["w_ih"].T
        whh_t = layer["w_hh"].T
        bias = layer["b_ih"] + layer["b_hh"]

        def step(carry, x_t):
            h, c = carry
            gates = x_t @ wih_t + h @ whh_t + bias
            i = jax.nn.sigmoid(gates[:, 0 * H:1 * H])
            f = jax.nn.sigmoid(gates[:, 1 * H:2 * H])
            g = jnp.tanh(gates[:, 2 * H:3 * H])
            o = jax.nn.sigmoid(gates[:, 3 * H:4 * H])
            c = f * c + i * g
            h = o * jnp.tanh(c)
            return (h, c), h

        B = x.shape[1]
        h0 = jnp.zeros((B, H), jnp.float32)
        (_, _), ys = jax.lax.scan(step, (h0, h0), x)
        x = ys
    return x[-1] @ params["cls_w"].T + params["cls_b"]


if __name__ == "__main__":
    # Small shapes consistent with the module: batch=8, seq=8, in_dim=16,
    # hidden_dim=32, n_layer=2, n_class=8.
    B, T, IN_DIM, HIDDEN, N_LAYER, N_CLASS = 8, 8, 16, 32, 2, 8

    key = jax.random.PRNGKey(0)
    key, kx, kp = jax.random.split(key, 3)
    x = jax.random.normal(kx, (B, T, IN_DIM), jnp.float32)
    params = init_params(kp, IN_DIM, HIDDEN, N_LAYER, N_CLASS)
    packed = pack_params(params)          # pack weights once, outside forward

    fwd = jax.jit(rnn_forward)
    out = jax.block_until_ready(fwd(x, packed))

    ref = jax.block_until_ready(rnn_forward_ref(x, params))
    assert out.shape == (B, N_CLASS)
    # bf16 MXU operands vs f32 reference -> relaxed tolerance (review note).
    max_err = float(jnp.max(jnp.abs(out - ref)))
    assert max_err < 5e-2, f"mismatch vs reference: max abs err {max_err}"

    print("KERNEL_OK")
</pallas_src>

<mosaic_0001>
module attributes {stable_mosaic.version = 11 : i64} {
  func.func @kernel(%arg0: memref<64x16xf32, #tpu.memory_space<vmem>>, %arg1: memref<16x128xbf16, #tpu.memory_space<vmem>>, %arg2: memref<32x128xbf16, #tpu.memory_space<vmem>>, %arg3: memref<1x128xf32, #tpu.memory_space<vmem>>, %arg4: memref<32x128xbf16, #tpu.memory_space<vmem>>, %arg5: memref<32x128xbf16, #tpu.memory_space<vmem>>, %arg6: memref<1x128xf32, #tpu.memory_space<vmem>>, %arg7: memref<32x8xbf16, #tpu.memory_space<vmem>>, %arg8: memref<1x8xf32, #tpu.memory_space<vmem>>, %arg9: memref<8x8xf32, #tpu.memory_space<vmem>>, %arg10: memref<64x128xf32, #tpu.memory_space<vmem>>, %arg11: memref<8x32xf32, #tpu.memory_space<vmem>>, %arg12: memref<8x32xf32, #tpu.memory_space<vmem>>, %arg13: memref<64x32xbf16, #tpu.memory_space<vmem>>) attributes {dimension_semantics = [], scalar_prefetch = 0 : i64, scratch_operands = 4 : i64, tpu.core_type = #tpu.core_type<tc>} {
    %c0 = arith.constant 0 : index
    %c0_0 = arith.constant 0 : index
    %0 = vector.load %arg0[%c0, %c0_0] : memref<64x16xf32, #tpu.memory_space<vmem>>, vector<64x16xf32>
    %1 = arith.truncf %0 : vector<64x16xf32> to vector<64x16xbf16>
    %c0_1 = arith.constant 0 : index
    %c0_2 = arith.constant 0 : index
    %2 = vector.load %arg1[%c0_1, %c0_2] : memref<16x128xbf16, #tpu.memory_space<vmem>>, vector<16x128xbf16>
    %cst = arith.constant dense<0.000000e+00> : vector<64x128xf32>
    %3 = tpu.matmul %1, %2, %cst {dimension_numbers = #tpu.dot_dimension_numbers<[1], [0], [0], [1], [0, 0, 1, 1], [], []>} : vector<64x16xbf16>, vector<16x128xbf16>, vector<64x128xf32> -> vector<64x128xf32>
    %c0_3 = arith.constant 0 : index
    %c0_4 = arith.constant 0 : index
    %4 = vector.load %arg3[%c0_3, %c0_4] : memref<1x128xf32, #tpu.memory_space<vmem>>, vector<1x128xf32>
    %5 = vector.broadcast %4 : vector<1x128xf32> to vector<64x128xf32>
    %6 = arith.addf %3, %5 : vector<64x128xf32>
    %c0_5 = arith.constant 0 : index
    %c0_6 = arith.constant 0 : index
    %7 = vector.load %arg10[%c0_5, %c0_6] : memref<64x128xf32, #tpu.memory_space<vmem>>, vector<64x128xf32>
    tpu.vector_store %arg10[%c0_5, %c0_6], %6 {strides = array<i32>} : memref<64x128xf32, #tpu.memory_space<vmem>>, vector<64x128xf32>,
    %cst_7 = arith.constant 0.000000e+00 : f32
    %8 = vector.broadcast %cst_7 : f32 to vector<8x32xf32>
    %c0_8 = arith.constant 0 : index
    %c0_9 = arith.constant 0 : index
    %9 = vector.load %arg11[%c0_8, %c0_9] : memref<8x32xf32, #tpu.memory_space<vmem>>, vector<8x32xf32>
    tpu.vector_store %arg11[%c0_8, %c0_9], %8 {strides = array<i32>} : memref<8x32xf32, #tpu.memory_space<vmem>>, vector<8x32xf32>,
    %cst_10 = arith.constant 0.000000e+00 : f32
    %10 = vector.broadcast %cst_10 : f32 to vector<8x32xf32>
    %c0_11 = arith.constant 0 : index
    %c0_12 = arith.constant 0 : index
    %11 = vector.load %arg12[%c0_11, %c0_12] : memref<8x32xf32, #tpu.memory_space<vmem>>, vector<8x32xf32>
    tpu.vector_store %arg12[%c0_11, %c0_12], %10 {strides = array<i32>} : memref<8x32xf32, #tpu.memory_space<vmem>>, vector<8x32xf32>,
    %c0_i32 = arith.constant 0 : i32
    %c8_i32 = arith.constant 8 : i32
    %12 = arith.muli %c0_i32, %c8_i32 : i32
    %13 = tpu.assume_multiple %12, 8 : i32
    %14 = arith.index_cast %13 : i32 to index
    %c0_13 = arith.constant 0 : index
    %15 = vector.load %arg10[%14, %c0_13] : memref<64x128xf32, #tpu.memory_space<vmem>>, vector<8x128xf32>
    %c0_14 = arith.constant 0 : index
    %c0_15 = arith.constant 0 : index
    %16 = vector.load %arg11[%c0_14, %c0_15] : memref<8x32xf32, #tpu.memory_space<vmem>>, vector<8x32xf32>
    %17 = arith.truncf %16 : vector<8x32xf32> to vector<8x32xbf16>
    %c0_16 = arith.constant 0 : index
    %c0_17 = arith.constant 0 : index
    %18 = vector.load %arg2[%c0_16, %c0_17] : memref<32x128xbf16, #tpu.memory_space<vmem>>, vector<32x128xbf16>
    %cst_18 = arith.constant dense<0.000000e+00> : vector<8x128xf32>
    %19 = tpu.matmul %17, %18, %cst_18 {dimension_numbers = #tpu.dot_dimension_numbers<[1], [0], [0], [1], [0, 0, 1, 1], [], []>} : vector<8x32xbf16>, vector<32x128xbf16>, vector<8x128xf32> -> vector<8x128xf32>
    %20 = arith.addf %15, %19 : vector<8x128xf32>
    %21 = vector.extract_strided_slice %20 {offsets = [0, 0], sizes = [8, 96], strides = [1, 1]} : vector<8x128xf32> to vector<8x96xf32>
    %22 = arith.negf %21 : vector<8x96xf32>
    %23 = math.exp %22 : vector<8x96xf32>
    %cst_19 = arith.constant 1.000000e+00 : f32
    %24 = vector.broadcast %cst_19 : f32 to vector<8x96xf32>
    %25 = arith.addf %24, %23 : vector<8x96xf32>
    %26 = arith.divf %24, %25 : vector<8x96xf32>
    %27 = vector.extract_strided_slice %20 {offsets = [0, 96], sizes = [8, 32], strides = [1, 1]} : vector<8x128xf32> to vector<8x32xf32>
    %28 = math.tanh %27 : vector<8x32xf32>
    %29 = vector.extract_strided_slice %26 {offsets = [0, 0], sizes = [8, 32], strides = [1, 1]} : vector<8x96xf32> to vector<8x32xf32>
    %30 = vector.extract_strided_slice %26 {offsets = [0, 32], sizes = [8, 32], strides = [1, 1]} : vector<8x96xf32> to vector<8x32xf32>
    %31 = vector.extract_strided_slice %26 {offsets = [0, 64], sizes = [8, 32], strides = [1, 1]} : vector<8x96xf32> to vector<8x32xf32>
    %c0_20 = arith.constant 0 : index
    %c0_21 = arith.constant 0 : index
    %32 = vector.load %arg12[%c0_20, %c0_21] : memref<8x32xf32, #tpu.memory_space<vmem>>, vector<8x32xf32>
    %33 = arith.mulf %30, %32 : vector<8x32xf32>
    %34 = arith.mulf %29, %28 : vector<8x32xf32>
    %35 = arith.addf %33, %34 : vector<8x32xf32>
    %36 = math.tanh %35 : vector<8x32xf32>
    %37 = arith.mulf %31, %36 : vector<8x32xf32>
    %c0_22 = arith.constant 0 : index
    %c0_23 = arith.constant 0 : index
    %38 = vector.load %arg12[%c0_22, %c0_23] : memref<8x32xf32, #tpu.memory_space<vmem>>, vector<8x32xf32>
    tpu.vector_store %arg12[%c0_22, %c0_23], %35 {strides = array<i32>} : memref<8x32xf32, #tpu.memory_space<vmem>>, vector<8x32xf32>,
    %c0_24 = arith.constant 0 : index
    %c0_25 = arith.constant 0 : index
    %39 = vector.load %arg11[%c0_24, %c0_25] : memref<8x32xf32, #tpu.memory_space<vmem>>, vector<8x32xf32>
    tpu.vector_store %arg11[%c0_24, %c0_25], %37 {strides = array<i32>} : memref<8x32xf32, #tpu.memory_space<vmem>>, vector<8x32xf32>,
    %40 = arith.truncf %37 : vector<8x32xf32> to vector<8x32xbf16>
    %41 = arith.index_cast %13 : i32 to index
    %c0_26 = arith.constant 0 : index
    %42 = vector.load %arg13[%41, %c0_26] : memref<64x32xbf16, #tpu.memory_space<vmem>>, vector<8x32xbf16>
    tpu.vector_store %arg13[%41, %c0_26], %40 {strides = array<i32>} : memref<64x32xbf16, #tpu.memory_space<vmem>>, vector<8x32xbf16>,
    %c1_i32 = arith.constant 1 : i32
    %c8_i32_27 = arith.constant 8 : i32
    %43 = arith.muli %c1_i32, %c8_i32_27 : i32
    %44 = tpu.assume_multiple %43, 8 : i32
    %45 = arith.index_cast %44 : i32 to index
    %c0_28 = arith.constant 0 : index
    %46 = vector.load %arg10[%45, %c0_28] : memref<64x128xf32, #tpu.memory_space<vmem>>, vector<8x128xf32>
    %c0_29 = arith.constant 0 : index
    %c0_30 = arith.constant 0 : index
    %47 = vector.load %arg11[%c0_29, %c0_30] : memref<8x32xf32, #tpu.memory_space<vmem>>, vector<8x32xf32>
    %48 = arith.truncf %47 : vector<8x32xf32> to vector<8x32xbf16>
    %c0_31 = arith.constant 0 : index
    %c0_32 = arith.constant 0 : index
    %49 = vector.load %arg2[%c0_31, %c0_32] : memref<32x128xbf16, #tpu.memory_space<vmem>>, vector<32x128xbf16>
    %cst_33 = arith.constant dense<0.000000e+00> : vector<8x128xf32>
    %50 = tpu.matmul %48, %49, %cst_33 {dimension_numbers = #tpu.dot_dimension_numbers<[1], [0], [0], [1], [0, 0, 1, 1], [], []>} : vector<8x32xbf16>, vector<32x128xbf16>, vector<8x128xf32> -> vector<8x128xf32>
    %51 = arith.addf %46, %50 : vector<8x128xf32>
    %52 = vector.extract_strided_slice %51 {offsets = [0, 0], sizes = [8, 96], strides = [1, 1]} : vector<8x128xf32> to vector<8x96xf32>
    %53 = arith.negf %52 : vector<8x96xf32>
    %54 = math.exp %53 : vector<8x96xf32>
    %cst_34 = arith.constant 1.000000e+00 : f32
    %55 = vector.broadcast %cst_34 : f32 to vector<8x96xf32>
    %56 = arith.addf %55, %54 : vector<8x96xf32>
    %57 = arith.divf %55, %56 : vector<8x96xf32>
    %58 = vector.extract_strided_slice %51 {offsets = [0, 96], sizes = [8, 32], strides = [1, 1]} : vector<8x128xf32> to vector<8x32xf32>
    %59 = math.tanh %58 : vector<8x32xf32>
    %60 = vector.extract_strided_slice %57 {offsets = [0, 0], sizes = [8, 32], strides = [1, 1]} : vector<8x96xf32> to vector<8x32xf32>
    %61 = vector.extract_strided_slice %57 {offsets = [0, 32], sizes = [8, 32], strides = [1, 1]} : vector<8x96xf32> to vector<8x32xf32>
    %62 = vector.extract_strided_slice %57 {offsets = [0, 64], sizes = [8, 32], strides = [1, 1]} : vector<8x96xf32> to vector<8x32xf32>
    %c0_35 = arith.constant 0 : index
    %c0_36 = arith.constant 0 : index
    %63 = vector.load %arg12[%c0_35, %c0_36] : memref<8x32xf32, #tpu.memory_space<vmem>>, vector<8x32xf32>
    %64 = arith.mulf %61, %63 : vector<8x32xf32>
    %65 = arith.mulf %60, %59 : vector<8x32xf32>
    %66 = arith.addf %64, %65 : vector<8x32xf32>
    %67 = math.tanh %66 : vector<8x32xf32>
    %68 = arith.mulf %62, %67 : vector<8x32xf32>
    %c0_37 = arith.constant 0 : index
    %c0_38 = arith.constant 0 : index
    %69 = vector.load %arg12[%c0_37, %c0_38] : memref<8x32xf32, #tpu.memory_space<vmem>>, vector<8x32xf32>
    tpu.vector_store %arg12[%c0_37, %c0_38], %66 {strides = array<i32>} : memref<8x32xf32, #tpu.memory_space<vmem>>, vector<8x32xf32>,
    %c0_39 = arith.constant 0 : index
    %c0_40 = arith.constant 0 : index
    %70 = vector.load %arg11[%c0_39, %c0_40] : memref<8x32xf32, #tpu.memory_space<vmem>>, vector<8x32xf32>
    tpu.vector_store %arg11[%c0_39, %c0_40], %68 {strides = array<i32>} : memref<8x32xf32, #tpu.memory_space<vmem>>, vector<8x32xf32>,
    %71 = arith.truncf %68 : vector<8x32xf32> to vector<8x32xbf16>
    %72 = arith.index_cast %44 : i32 to index
    %c0_41 = arith.constant 0 : index
    %73 = vector.load %arg13[%72, %c0_41] : memref<64x32xbf16, #tpu.memory_space<vmem>>, vector<8x32xbf16>
    tpu.vector_store %arg13[%72, %c0_41], %71 {strides = array<i32>} : memref<64x32xbf16, #tpu.memory_space<vmem>>, vector<8x32xbf16>,
    %c2_i32 = arith.constant 2 : i32
    %c8_i32_42 = arith.constant 8 : i32
    %74 = arith.muli %c2_i32, %c8_i32_42 : i32
    %75 = tpu.assume_multiple %74, 8 : i32
    %76 = arith.index_cast %75 : i32 to index
    %c0_43 = arith.constant 0 : index
    %77 = vector.load %arg10[%76, %c0_43] : memref<64x128xf32, #tpu.memory_space<vmem>>, vector<8x128xf32>
    %c0_44 = arith.constant 0 : index
    %c0_45 = arith.constant 0 : index
    %78 = vector.load %arg11[%c0_44, %c0_45] : memref<8x32xf32, #tpu.memory_space<vmem>>, vector<8x32xf32>
    %79 = arith.truncf %78 : vector<8x32xf32> to vector<8x32xbf16>
    %c0_46 = arith.constant 0 : index
    %c0_47 = arith.constant 0 : index
    %80 = vector.load %arg2[%c0_46, %c0_47] : memref<32x128xbf16, #tpu.memory_space<vmem>>, vector<32x128xbf16>
    %cst_48 = arith.constant dense<0.000000e+00> : vector<8x128xf32>
    %81 = tpu.matmul %79, %80, %cst_48 {dimension_numbers = #tpu.dot_dimension_numbers<[1], [0], [0], [1], [0, 0, 1, 1], [], []>} : vector<8x32xbf16>, vector<32x128xbf16>, vector<8x128xf32> -> vector<8x128xf32>
    %82 = arith.addf %77, %81 : vector<8x128xf32>
    %83 = vector.extract_strided_slice %82 {offsets = [0, 0], sizes = [8, 96], strides = [1, 1]} : vector<8x128xf32> to vector<8x96xf32>
    %84 = arith.negf %83 : vector<8x96xf32>
    %85 = math.exp %84 : vector<8x96xf32>
    %cst_49 = arith.constant 1.000000e+00 : f32
    %86 = vector.broadcast %cst_49 : f32 to vector<8x96xf32>
    %87 = arith.addf %86, %85 : vector<8x96xf32>
    %88 = arith.divf %86, %87 : vector<8x96xf32>
    %89 = vector.extract_strided_slice %82 {offsets = [0, 96], sizes = [8, 32], strides = [1, 1]} : vector<8x128xf32> to vector<8x32xf32>
    %90 = math.tanh %89 : vector<8x32xf32>
    %91 = vector.extract_strided_slice %88 {offsets = [0, 0], sizes = [8, 32], strides = [1, 1]} : vector<8x96xf32> to vector<8x32xf32>
    %92 = vector.extract_strided_slice %88 {offsets = [0, 32], sizes = [8, 32], strides = [1, 1]} : vector<8x96xf32> to vector<8x32xf32>
    %93 = vector.extract_strided_slice %88 {offsets = [0, 64], sizes = [8, 32], strides = [1, 1]} : vector<8x96xf32> to vector<8x32xf32>
    %c0_50 = arith.constant 0 : index
    %c0_51 = arith.constant 0 : index
    %94 = vector.load %arg12[%c0_50, %c0_51] : memref<8x32xf32, #tpu.memory_space<vmem>>, vector<8x32xf32>
    %95 = arith.mulf %92, %94 : vector<8x32xf32>
    %96 = arith.mulf %91, %90 : vector<8x32xf32>
    %97 = arith.addf %95, %96 : vector<8x32xf32>
    %98 = math.tanh %97 : vector<8x32xf32>
    %99 = arith.mulf %93, %98 : vector<8x32xf32>
    %c0_52 = arith.constant 0 : index
    %c0_53 = arith.constant 0 : index
    %100 = vector.load %arg12[%c0_52, %c0_53] : memref<8x32xf32, #tpu.memory_space<vmem>>, vector<8x32xf32>
    tpu.vector_store %arg12[%c0_52, %c0_53], %97 {strides = array<i32>} : memref<8x32xf32, #tpu.memory_space<vmem>>, vector<8x32xf32>,
    %c0_54 = arith.constant 0 : index
    %c0_55 = arith.constant 0 : index
    %101 = vector.load %arg11[%c0_54, %c0_55] : memref<8x32xf32, #tpu.memory_space<vmem>>, vector<8x32xf32>
    tpu.vector_store %arg11[%c0_54, %c0_55], %99 {strides = array<i32>} : memref<8x32xf32, #tpu.memory_space<vmem>>, vector<8x32xf32>,
    %102 = arith.truncf %99 : vector<8x32xf32> to vector<8x32xbf16>
    %103 = arith.index_cast %75 : i32 to index
    %c0_56 = arith.constant 0 : index
    %104 = vector.load %arg13[%103, %c0_56] : memref<64x32xbf16, #tpu.memory_space<vmem>>, vector<8x32xbf16>
    tpu.vector_store %arg13[%103, %c0_56], %102 {strides = array<i32>} : memref<64x32xbf16, #tpu.memory_space<vmem>>, vector<8x32xbf16>,
    %c3_i32 = arith.constant 3 : i32
    %c8_i32_57 = arith.constant 8 : i32
    %105 = arith.muli %c3_i32, %c8_i32_57 : i32
    %106 = tpu.assume_multiple %105, 8 : i32
    %107 = arith.index_cast %106 : i32 to index
    %c0_58 = arith.constant 0 : index
    %108 = vector.load %arg10[%107, %c0_58] : memref<64x128xf32, #tpu.memory_space<vmem>>, vector<8x128xf32>
    %c0_59 = arith.constant 0 : index
    %c0_60 = arith.constant 0 : index
    %109 = vector.load %arg11[%c0_59, %c0_60] : memref<8x32xf32, #tpu.memory_space<vmem>>, vector<8x32xf32>
    %110 = arith.truncf %109 : vector<8x32xf32> to vector<8x32xbf16>
    %c0_61 = arith.constant 0 : index
    %c0_62 = arith.constant 0 : index
    %111 = vector.load %arg2[%c0_61, %c0_62] : memref<32x128xbf16, #tpu.memory_space<vmem>>, vector<32x128xbf16>
    %cst_63 = arith.constant dense<0.000000e+00> : vector<8x128xf32>
    %112 = tpu.matmul %110, %111, %cst_63 {dimension_numbers = #tpu.dot_dimension_numbers<[1], [0], [0], [1], [0, 0, 1, 1], [], []>} : vector<8x32xbf16>, vector<32x128xbf16>, vector<8x128xf32> -> vector<8x128xf32>
    %113 = arith.addf %108, %112 : vector<8x128xf32>
    %114 = vector.extract_strided_slice %113 {offsets = [0, 0], sizes = [8, 96], strides = [1, 1]} : vector<8x128xf32> to vector<8x96xf32>
    %115 = arith.negf %114 : vector<8x96xf32>
    %116 = math.exp %115 : vector<8x96xf32>
    %cst_64 = arith.constant 1.000000e+00 : f32
    %117 = vector.broadcast %cst_64 : f32 to vector<8x96xf32>
    %118 = arith.addf %117, %116 : vector<8x96xf32>
    %119 = arith.divf %117, %118 : vector<8x96xf32>
    %120 = vector.extract_strided_slice %113 {offsets = [0, 96], sizes = [8, 32], strides = [1, 1]} : vector<8x128xf32> to vector<8x32xf32>
    %121 = math.tanh %120 : vector<8x32xf32>
    %122 = vector.extract_strided_slice %119 {offsets = [0, 0], sizes = [8, 32], strides = [1, 1]} : vector<8x96xf32> to vector<8x32xf32>
    %123 = vector.extract_strided_slice %119 {offsets = [0, 32], sizes = [8, 32], strides = [1, 1]} : vector<8x96xf32> to vector<8x32xf32>
    %124 = vector.extract_strided_slice %119 {offsets = [0, 64], sizes = [8, 32], strides = [1, 1]} : vector<8x96xf32> to vector<8x32xf32>
    %c0_65 = arith.constant 0 : index
    %c0_66 = arith.constant 0 : index
    %125 = vector.load %arg12[%c0_65, %c0_66] : memref<8x32xf32, #tpu.memory_space<vmem>>, vector<8x32xf32>
    %126 = arith.mulf %123, %125 : vector<8x32xf32>
    %127 = arith.mulf %122, %121 : vector<8x32xf32>
    %128 = arith.addf %126, %127 : vector<8x32xf32>
    %129 = math.tanh %128 : vector<8x32xf32>
    %130 = arith.mulf %124, %129 : vector<8x32xf32>
    %c0_67 = arith.constant 0 : index
    %c0_68 = arith.constant 0 : index
    %131 = vector.load %arg12[%c0_67, %c0_68] : memref<8x32xf32, #tpu.memory_space<vmem>>, vector<8x32xf32>
    tpu.vector_store %arg12[%c0_67, %c0_68], %128 {strides = array<i32>} : memref<8x32xf32, #tpu.memory_space<vmem>>, vector<8x32xf32>,
    %c0_69 = arith.constant 0 : index
    %c0_70 = arith.constant 0 : index
    %132 = vector.load %arg11[%c0_69, %c0_70] : memref<8x32xf32, #tpu.memory_space<vmem>>, vector<8x32xf32>
    tpu.vector_store %arg11[%c0_69, %c0_70], %130 {strides = array<i32>} : memref<8x32xf32, #tpu.memory_space<vmem>>, vector<8x32xf32>,
    %133 = arith.truncf %130 : vector<8x32xf32> to vector<8x32xbf16>
    %134 = arith.index_cast %106 : i32 to index
    %c0_71 = arith.constant 0 : index
    %135 = vector.load %arg13[%134, %c0_71] : memref<64x32xbf16, #tpu.memory_space<vmem>>, vector<8x32xbf16>
    tpu.vector_store %arg13[%134, %c0_71], %133 {strides = array<i32>} : memref<64x32xbf16, #tpu.memory_space<vmem>>, vector<8x32xbf16>,
    %c4_i32 = arith.constant 4 : i32
    %c8_i32_72 = arith.constant 8 : i32
    %136 = arith.muli %c4_i32, %c8_i32_72 : i32
    %137 = tpu.assume_multiple %136, 8 : i32
    %138 = arith.index_cast %137 : i32 to index
    %c0_73 = arith.constant 0 : index
    %139 = vector.load %arg10[%138, %c0_73] : memref<64x128xf32, #tpu.memory_space<vmem>>, vector<8x128xf32>
    %c0_74 = arith.constant 0 : index
    %c0_75 = arith.constant 0 : index
    %140 = vector.load %arg11[%c0_74, %c0_75] : memref<8x32xf32, #tpu.memory_space<vmem>>, vector<8x32xf32>
    %141 = arith.truncf %140 : vector<8x32xf32> to vector<8x32xbf16>
    %c0_76 = arith.constant 0 : index
    %c0_77 = arith.constant 0 : index
    %142 = vector.load %arg2[%c0_76, %c0_77] : memref<32x128xbf16, #tpu.memory_space<vmem>>, vector<32x128xbf16>
    %cst_78 = arith.constant dense<0.000000e+00> : vector<8x128xf32>
    %143 = tpu.matmul %141, %142, %cst_78 {dimension_numbers = #tpu.dot_dimension_numbers<[1], [0], [0], [1], [0, 0, 1, 1], [], []>} : vector<8x32xbf16>, vector<32x128xbf16>, vector<8x128xf32> -> vector<8x128xf32>
    %144 = arith.addf %139, %143 : vector<8x128xf32>
    %145 = vector.extract_strided_slice %144 {offsets = [0, 0], sizes = [8, 96], strides = [1, 1]} : vector<8x128xf32> to vector<8x96xf32>
    %146 = arith.negf %145 : vector<8x96xf32>
    %147 = math.exp %146 : vector<8x96xf32>
    %cst_79 = arith.constant 1.000000e+00 : f32
    %148 = vector.broadcast %cst_79 : f32 to vector<8x96xf32>
    %149 = arith.addf %148, %147 : vector<8x96xf32>
    %150 = arith.divf %148, %149 : vector<8x96xf32>
    %151 = vector.extract_strided_slice %144 {offsets = [0, 96], sizes = [8, 32], strides = [1, 1]} : vector<8x128xf32> to vector<8x32xf32>
    %152 = math.tanh %151 : vector<8x32xf32>
    %153 = vector.extract_strided_slice %150 {offsets = [0, 0], sizes = [8, 32], strides = [1, 1]} : vector<8x96xf32> to vector<8x32xf32>
    %154 = vector.extract_strided_slice %150 {offsets = [0, 32], sizes = [8, 32], strides = [1, 1]} : vector<8x96xf32> to vector<8x32xf32>
    %155 = vector.extract_strided_slice %150 {offsets = [0, 64], sizes = [8, 32], strides = [1, 1]} : vector<8x96xf32> to vector<8x32xf32>
    %c0_80 = arith.constant 0 : index
    %c0_81 = arith.constant 0 : index
    %156 = vector.load %arg12[%c0_80, %c0_81] : memref<8x32xf32, #tpu.memory_space<vmem>>, vector<8x32xf32>
    %157 = arith.mulf %154, %156 : vector<8x32xf32>
    %158 = arith.mulf %153, %152 : vector<8x32xf32>
    %159 = arith.addf %157, %158 : vector<8x32xf32>
    %160 = math.tanh %159 : vector<8x32xf32>
    %161 = arith.mulf %155, %160 : vector<8x32xf32>
    %c0_82 = arith.constant 0 : index
    %c0_83 = arith.constant 0 : index
    %162 = vector.load %arg12[%c0_82, %c0_83] : memref<8x32xf32, #tpu.memory_space<vmem>>, vector<8x32xf32>
    tpu.vector_store %arg12[%c0_82, %c0_83], %159 {strides = array<i32>} : memref<8x32xf32, #tpu.memory_space<vmem>>, vector<8x32xf32>,
    %c0_84 = arith.constant 0 : index
    %c0_85 = arith.constant 0 : index
    %163 = vector.load %arg11[%c0_84, %c0_85] : memref<8x32xf32, #tpu.memory_space<vmem>>, vector<8x32xf32>
    tpu.vector_store %arg11[%c0_84, %c0_85], %161 {strides = array<i32>} : memref<8x32xf32, #tpu.memory_space<vmem>>, vector<8x32xf32>,
    %164 = arith.truncf %161 : vector<8x32xf32> to vector<8x32xbf16>
    %165 = arith.index_cast %137 : i32 to index
    %c0_86 = arith.constant 0 : index
    %166 = vector.load %arg13[%165, %c0_86] : memref<64x32xbf16, #tpu.memory_space<vmem>>, vector<8x32xbf16>
    tpu.vector_store %arg13[%165, %c0_86], %164 {strides = array<i32>} : memref<64x32xbf16, #tpu.memory_space<vmem>>, vector<8x32xbf16>,
    %c5_i32 = arith.constant 5 : i32
    %c8_i32_87 = arith.constant 8 : i32
    %167 = arith.muli %c5_i32, %c8_i32_87 : i32
    %168 = tpu.assume_multiple %167, 8 : i32
    %169 = arith.index_cast %168 : i32 to index
    %c0_88 = arith.constant 0 : index
    %170 = vector.load %arg10[%169, %c0_88] : memref<64x128xf32, #tpu.memory_space<vmem>>, vector<8x128xf32>
    %c0_89 = arith.constant 0 : index
    %c0_90 = arith.constant 0 : index
    %171 = vector.load %arg11[%c0_89, %c0_90] : memref<8x32xf32, #tpu.memory_space<vmem>>, vector<8x32xf32>
    %172 = arith.truncf %171 : vector<8x32xf32> to vector<8x32xbf16>
    %c0_91 = arith.constant 0 : index
    %c0_92 = arith.constant 0 : index
    %173 = vector.load %arg2[%c0_91, %c0_92] : memref<32x128xbf16, #tpu.memory_space<vmem>>, vector<32x128xbf16>
    %cst_93 = arith.constant dense<0.000000e+00> : vector<8x128xf32>
    %174 = tpu.matmul %172, %173, %cst_93 {dimension_numbers = #tpu.dot_dimension_numbers<[1], [0], [0], [1], [0, 0, 1, 1], [], []>} : vector<8x32xbf16>, vector<32x128xbf16>, vector<8x128xf32> -> vector<8x128xf32>
    %175 = arith.addf %170, %174 : vector<8x128xf32>
    %176 = vector.extract_strided_slice %175 {offsets = [0, 0], sizes = [8, 96], strides = [1, 1]} : vector<8x128xf32> to vector<8x96xf32>
    %177 = arith.negf %176 : vector<8x96xf32>
    %178 = math.exp %177 : vector<8x96xf32>
    %cst_94 = arith.constant 1.000000e+00 : f32
    %179 = vector.broadcast %cst_94 : f32 to vector<8x96xf32>
    %180 = arith.addf %179, %178 : vector<8x96xf32>
    %181 = arith.divf %179, %180 : vector<8x96xf32>
    %182 = vector.extract_strided_slice %175 {offsets = [0, 96], sizes = [8, 32], strides = [1, 1]} : vector<8x128xf32> to vector<8x32xf32>
    %183 = math.tanh %182 : vector<8x32xf32>
    %184 = vector.extract_strided_slice %181 {offsets = [0, 0], sizes = [8, 32], strides = [1, 1]} : vector<8x96xf32> to vector<8x32xf32>
    %185 = vector.extract_strided_slice %181 {offsets = [0, 32], sizes = [8, 32], strides = [1, 1]} : vector<8x96xf32> to vector<8x32xf32>
    %186 = vector.extract_strided_slice %181 {offsets = [0, 64], sizes = [8, 32], strides = [1, 1]} : vector<8x96xf32> to vector<8x32xf32>
    %c0_95 = arith.constant 0 : index
    %c0_96 = arith.constant 0 : index
    %187 = vector.load %arg12[%c0_95, %c0_96] : memref<8x32xf32, #tpu.memory_space<vmem>>, vector<8x32xf32>
    %188 = arith.mulf %185, %187 : vector<8x32xf32>
    %189 = arith.mulf %184, %183 : vector<8x32xf32>
    %190 = arith.addf %188, %189 : vector<8x32xf32>
    %191 = math.tanh %190 : vector<8x32xf32>
    %192 = arith.mulf %186, %191 : vector<8x32xf32>
    %c0_97 = arith.constant 0 : index
    %c0_98 = arith.constant 0 : index
    %193 = vector.load %arg12[%c0_97, %c0_98] : memref<8x32xf32, #tpu.memory_space<vmem>>, vector<8x32xf32>
    tpu.vector_store %arg12[%c0_97, %c0_98], %190 {strides = array<i32>} : memref<8x32xf32, #tpu.memory_space<vmem>>, vector<8x32xf32>,
    %c0_99 = arith.constant 0 : index
    %c0_100 = arith.constant 0 : index
    %194 = vector.load %arg11[%c0_99, %c0_100] : memref<8x32xf32, #tpu.memory_space<vmem>>, vector<8x32xf32>
    tpu.vector_store %arg11[%c0_99, %c0_100], %192 {strides = array<i32>} : memref<8x32xf32, #tpu.memory_space<vmem>>, vector<8x32xf32>,
    %195 = arith.truncf %192 : vector<8x32xf32> to vector<8x32xbf16>
    %196 = arith.index_cast %168 : i32 to index
    %c0_101 = arith.constant 0 : index
    %197 = vector.load %arg13[%196, %c0_101] : memref<64x32xbf16, #tpu.memory_space<vmem>>, vector<8x32xbf16>
    tpu.vector_store %arg13[%196, %c0_101], %195 {strides = array<i32>} : memref<64x32xbf16, #tpu.memory_space<vmem>>, vector<8x32xbf16>,
    %c6_i32 = arith.constant 6 : i32
    %c8_i32_102 = arith.constant 8 : i32
    %198 = arith.muli %c6_i32, %c8_i32_102 : i32
    %199 = tpu.assume_multiple %198, 8 : i32
    %200 = arith.index_cast %199 : i32 to index
    %c0_103 = arith.constant 0 : index
    %201 = vector.load %arg10[%200, %c0_103] : memref<64x128xf32, #tpu.memory_space<vmem>>, vector<8x128xf32>
    %c0_104 = arith.constant 0 : index
    %c0_105 = arith.constant 0 : index
    %202 = vector.load %arg11[%c0_104, %c0_105] : memref<8x32xf32, #tpu.memory_space<vmem>>, vector<8x32xf32>
    %203 = arith.truncf %202 : vector<8x32xf32> to vector<8x32xbf16>
    %c0_106 = arith.constant 0 : index
    %c0_107 = arith.constant 0 : index
    %204 = vector.load %arg2[%c0_106, %c0_107] : memref<32x128xbf16, #tpu.memory_space<vmem>>, vector<32x128xbf16>
    %cst_108 = arith.constant dense<0.000000e+00> : vector<8x128xf32>
    %205 = tpu.matmul %203, %204, %cst_108 {dimension_numbers = #tpu.dot_dimension_numbers<[1], [0], [0], [1], [0, 0, 1, 1], [], []>} : vector<8x32xbf16>, vector<32x128xbf16>, vector<8x128xf32> -> vector<8x128xf32>
    %206 = arith.addf %201, %205 : vector<8x128xf32>
    %207 = vector.extract_strided_slice %206 {offsets = [0, 0], sizes = [8, 96], strides = [1, 1]} : vector<8x128xf32> to vector<8x96xf32>
    %208 = arith.negf %207 : vector<8x96xf32>
    %209 = math.exp %208 : vector<8x96xf32>
    %cst_109 = arith.constant 1.000000e+00 : f32
    %210 = vector.broadcast %cst_109 : f32 to vector<8x96xf32>
    %211 = arith.addf %210, %209 : vector<8x96xf32>
    %212 = arith.divf %210, %211 : vector<8x96xf32>
    %213 = vector.extract_strided_slice %206 {offsets = [0, 96], sizes = [8, 32], strides = [1, 1]} : vector<8x128xf32> to vector<8x32xf32>
    %214 = math.tanh %213 : vector<8x32xf32>
    %215 = vector.extract_strided_slice %212 {offsets = [0, 0], sizes = [8, 32], strides = [1, 1]} : vector<8x96xf32> to vector<8x32xf32>
    %216 = vector.extract_strided_slice %212 {offsets = [0, 32], sizes = [8, 32], strides = [1, 1]} : vector<8x96xf32> to vector<8x32xf32>
    %217 = vector.extract_strided_slice %212 {offsets = [0, 64], sizes = [8, 32], strides = [1, 1]} : vector<8x96xf32> to vector<8x32xf32>
    %c0_110 = arith.constant 0 : index
    %c0_111 = arith.constant 0 : index
    %218 = vector.load %arg12[%c0_110, %c0_111] : memref<8x32xf32, #tpu.memory_space<vmem>>, vector<8x32xf32>
    %219 = arith.mulf %216, %218 : vector<8x32xf32>
    %220 = arith.mulf %215, %214 : vector<8x32xf32>
    %221 = arith.addf %219, %220 : vector<8x32xf32>
    %222 = math.tanh %221 : vector<8x32xf32>
    %223 = arith.mulf %217, %222 : vector<8x32xf32>
    %c0_112 = arith.constant 0 : index
    %c0_113 = arith.constant 0 : index
    %224 = vector.load %arg12[%c0_112, %c0_113] : memref<8x32xf32, #tpu.memory_space<vmem>>, vector<8x32xf32>
    tpu.vector_store %arg12[%c0_112, %c0_113], %221 {strides = array<i32>} : memref<8x32xf32, #tpu.memory_space<vmem>>, vector<8x32xf32>,
    %c0_114 = arith.constant 0 : index
    %c0_115 = arith.constant 0 : index
    %225 = vector.load %arg11[%c0_114, %c0_115] : memref<8x32xf32, #tpu.memory_space<vmem>>, vector<8x32xf32>
    tpu.vector_store %arg11[%c0_114, %c0_115], %223 {strides = array<i32>} : memref<8x32xf32, #tpu.memory_space<vmem>>, vector<8x32xf32>,
    %226 = arith.truncf %223 : vector<8x32xf32> to vector<8x32xbf16>
    %227 = arith.index_cast %199 : i32 to index
    %c0_116 = arith.constant 0 : index
    %228 = vector.load %arg13[%227, %c0_116] : memref<64x32xbf16, #tpu.memory_space<vmem>>, vector<8x32xbf16>
    tpu.vector_store %arg13[%227, %c0_116], %226 {strides = array<i32>} : memref<64x32xbf16, #tpu.memory_space<vmem>>, vector<8x32xbf16>,
    %c7_i32 = arith.constant 7 : i32
    %c8_i32_117 = arith.constant 8 : i32
    %229 = arith.muli %c7_i32, %c8_i32_117 : i32
    %230 = tpu.assume_multiple %229, 8 : i32
    %231 = arith.index_cast %230 : i32 to index
    %c0_118 = arith.constant 0 : index
    %232 = vector.load %arg10[%231, %c0_118] : memref<64x128xf32, #tpu.memory_space<vmem>>, vector<8x128xf32>
    %c0_119 = arith.constant 0 : index
    %c0_120 = arith.constant 0 : index
    %233 = vector.load %arg11[%c0_119, %c0_120] : memref<8x32xf32, #tpu.memory_space<vmem>>, vector<8x32xf32>
    %234 = arith.truncf %233 : vector<8x32xf32> to vector<8x32xbf16>
    %c0_121 = arith.constant 0 : index
    %c0_122 = arith.constant 0 : index
    %235 = vector.load %arg2[%c0_121, %c0_122] : memref<32x128xbf16, #tpu.memory_space<vmem>>, vector<32x128xbf16>
    %cst_123 = arith.constant dense<0.000000e+00> : vector<8x128xf32>
    %236 = tpu.matmul %234, %235, %cst_123 {dimension_numbers = #tpu.dot_dimension_numbers<[1], [0], [0], [1], [0, 0, 1, 1], [], []>} : vector<8x32xbf16>, vector<32x128xbf16>, vector<8x128xf32> -> vector<8x128xf32>
    %237 = arith.addf %232, %236 : vector<8x128xf32>
    %238 = vector.extract_strided_slice %237 {offsets = [0, 0], sizes = [8, 96], strides = [1, 1]} : vector<8x128xf32> to vector<8x96xf32>
    %239 = arith.negf %238 : vector<8x96xf32>
    %240 = math.exp %239 : vector<8x96xf32>
    %cst_124 = arith.constant 1.000000e+00 : f32
    %241 = vector.broadcast %cst_124 : f32 to vector<8x96xf32>
    %242 = arith.addf %241, %240 : vector<8x96xf32>
    %243 = arith.divf %241, %242 : vector<8x96xf32>
    %244 = vector.extract_strided_slice %237 {offsets = [0, 96], sizes = [8, 32], strides = [1, 1]} : vector<8x128xf32> to vector<8x32xf32>
    %245 = math.tanh %244 : vector<8x32xf32>
    %246 = vector.extract_strided_slice %243 {offsets = [0, 0], sizes = [8, 32], strides = [1, 1]} : vector<8x96xf32> to vector<8x32xf32>
    %247 = vector.extract_strided_slice %243 {offsets = [0, 32], sizes = [8, 32], strides = [1, 1]} : vector<8x96xf32> to vector<8x32xf32>
    %248 = vector.extract_strided_slice %243 {offsets = [0, 64], sizes = [8, 32], strides = [1, 1]} : vector<8x96xf32> to vector<8x32xf32>
    %c0_125 = arith.constant 0 : index
    %c0_126 = arith.constant 0 : index
    %249 = vector.load %arg12[%c0_125, %c0_126] : memref<8x32xf32, #tpu.memory_space<vmem>>, vector<8x32xf32>
    %250 = arith.mulf %247, %249 : vector<8x32xf32>
    %251 = arith.mulf %246, %245 : vector<8x32xf32>
    %252 = arith.addf %250, %251 : vector<8x32xf32>
    %253 = math.tanh %252 : vector<8x32xf32>
    %254 = arith.mulf %248, %253 : vector<8x32xf32>
    %c0_127 = arith.constant 0 : index
    %c0_128 = arith.constant 0 : index
    %255 = vector.load %arg12[%c0_127, %c0_128] : memref<8x32xf32, #tpu.memory_space<vmem>>, vector<8x32xf32>
    tpu.vector_store %arg12[%c0_127, %c0_128], %252 {strides = array<i32>} : memref<8x32xf32, #tpu.memory_space<vmem>>, vector<8x32xf32>,
    %c0_129 = arith.constant 0 : index
    %c0_130 = arith.constant 0 : index
    %256 = vector.load %arg11[%c0_129, %c0_130] : memref<8x32xf32, #tpu.memory_space<vmem>>, vector<8x32xf32>
    tpu.vector_store %arg11[%c0_129, %c0_130], %254 {strides = array<i32>} : memref<8x32xf32, #tpu.memory_space<vmem>>, vector<8x32xf32>,
    %257 = arith.truncf %254 : vector<8x32xf32> to vector<8x32xbf16>
    %258 = arith.index_cast %230 : i32 to index
    %c0_131 = arith.constant 0 : index
    %259 = vector.load %arg13[%258, %c0_131] : memref<64x32xbf16, #tpu.memory_space<vmem>>, vector<8x32xbf16>
    tpu.vector_store %arg13[%258, %c0_131], %257 {strides = array<i32>} : memref<64x32xbf16, #tpu.memory_space<vmem>>, vector<8x32xbf16>,
    %c8_i32_132 = arith.constant 8 : i32
    %c0_133 = arith.constant 0 : index
    %c0_134 = arith.constant 0 : index
    %260 = vector.load %arg13[%c0_133, %c0_134] : memref<64x32xbf16, #tpu.memory_space<vmem>>, vector<64x32xbf16>
    %c0_135 = arith.constant 0 : index
    %c0_136 = arith.constant 0 : index
    %261 = vector.load %arg4[%c0_135, %c0_136] : memref<32x128xbf16, #tpu.memory_space<vmem>>, vector<32x128xbf16>
    %cst_137 = arith.constant dense<0.000000e+00> : vector<64x128xf32>
    %262 = tpu.matmul %260, %261, %cst_137 {dimension_numbers = #tpu.dot_dimension_numbers<[1], [0], [0], [1], [0, 0, 1, 1], [], []>} : vector<64x32xbf16>, vector<32x128xbf16>, vector<64x128xf32> -> vector<64x128xf32>
    %c0_138 = arith.constant 0 : index
    %c0_139 = arith.constant 0 : index
    %263 = vector.load %arg6[%c0_138, %c0_139] : memref<1x128xf32, #tpu.memory_space<vmem>>, vector<1x128xf32>
    %264 = vector.broadcast %263 : vector<1x128xf32> to vector<64x128xf32>
    %265 = arith.addf %262, %264 : vector<64x128xf32>
    %c0_140 = arith.constant 0 : index
    %c0_141 = arith.constant 0 : index
    %266 = vector.load %arg10[%c0_140, %c0_141] : memref<64x128xf32, #tpu.memory_space<vmem>>, vector<64x128xf32>
    tpu.vector_store %arg10[%c0_140, %c0_141], %265 {strides = array<i32>} : memref<64x128xf32, #tpu.memory_space<vmem>>, vector<64x128xf32>,
    %cst_142 = arith.constant 0.000000e+00 : f32
    %267 = vector.broadcast %cst_142 : f32 to vector<8x32xf32>
    %c0_143 = arith.constant 0 : index
    %c0_144 = arith.constant 0 : index
    %268 = vector.load %arg11[%c0_143, %c0_144] : memref<8x32xf32, #tpu.memory_space<vmem>>, vector<8x32xf32>
    tpu.vector_store %arg11[%c0_143, %c0_144], %267 {strides = array<i32>} : memref<8x32xf32, #tpu.memory_space<vmem>>, vector<8x32xf32>,
    %cst_145 = arith.constant 0.000000e+00 : f32
    %269 = vector.broadcast %cst_145 : f32 to vector<8x32xf32>
    %c0_146 = arith.constant 0 : index
    %c0_147 = arith.constant 0 : index
    %270 = vector.load %arg12[%c0_146, %c0_147] : memref<8x32xf32, #tpu.memory_space<vmem>>, vector<8x32xf32>
    tpu.vector_store %arg12[%c0_146, %c0_147], %269 {strides = array<i32>} : memref<8x32xf32, #tpu.memory_space<vmem>>, vector<8x32xf32>,
    %c0_i32_148 = arith.constant 0 : i32
    %c8_i32_149 = arith.constant 8 : i32
    %271 = arith.muli %c0_i32_148, %c8_i32_149 : i32
    %272 = tpu.assume_multiple %271, 8 : i32
    %273 = arith.index_cast %272 : i32 to index
    %c0_150 = arith.constant 0 : index
    %274 = vector.load %arg10[%273, %c0_150] : memref<64x128xf32, #tpu.memory_space<vmem>>, vector<8x128xf32>
    %c0_151 = arith.constant 0 : index
    %c0_152 = arith.constant 0 : index
    %275 = vector.load %arg11[%c0_151, %c0_152] : memref<8x32xf32, #tpu.memory_space<vmem>>, vector<8x32xf32>
    %276 = arith.truncf %275 : vector<8x32xf32> to vector<8x32xbf16>
    %c0_153 = arith.constant 0 : index
    %c0_154 = arith.constant 0 : index
    %277 = vector.load %arg5[%c0_153, %c0_154] : memref<32x128xbf16, #tpu.memory_space<vmem>>, vector<32x128xbf16>
    %cst_155 = arith.constant dense<0.000000e+00> : vector<8x128xf32>
    %278 = tpu.matmul %276, %277, %cst_155 {dimension_numbers = #tpu.dot_dimension_numbers<[1], [0], [0], [1], [0, 0, 1, 1], [], []>} : vector<8x32xbf16>, vector<32x128xbf16>, vector<8x128xf32> -> vector<8x128xf32>
    %279 = arith.addf %274, %278 : vector<8x128xf32>
    %280 = vector.extract_strided_slice %279 {offsets = [0, 0], sizes = [8, 96], strides = [1, 1]} : vector<8x128xf32> to vector<8x96xf32>
    %281 = arith.negf %280 : vector<8x96xf32>
    %282 = math.exp %281 : vector<8x96xf32>
    %cst_156 = arith.constant 1.000000e+00 : f32
    %283 = vector.broadcast %cst_156 : f32 to vector<8x96xf32>
    %284 = arith.addf %283, %282 : vector<8x96xf32>
    %285 = arith.divf %283, %284 : vector<8x96xf32>
    %286 = vector.extract_strided_slice %279 {offsets = [0, 96], sizes = [8, 32], strides = [1, 1]} : vector<8x128xf32> to vector<8x32xf32>
    %287 = math.tanh %286 : vector<8x32xf32>
    %288 = vector.extract_strided_slice %285 {offsets = [0, 0], sizes = [8, 32], strides = [1, 1]} : vector<8x96xf32> to vector<8x32xf32>
    %289 = vector.extract_strided_slice %285 {offsets = [0, 32], sizes = [8, 32], strides = [1, 1]} : vector<8x96xf32> to vector<8x32xf32>
    %290 = vector.extract_strided_slice %285 {offsets = [0, 64], sizes = [8, 32], strides = [1, 1]} : vector<8x96xf32> to vector<8x32xf32>
    %c0_157 = arith.constant 0 : index
    %c0_158 = arith.constant 0 : index
    %291 = vector.load %arg12[%c0_157, %c0_158] : memref<8x32xf32, #tpu.memory_space<vmem>>, vector<8x32xf32>
    %292 = arith.mulf %289, %291 : vector<8x32xf32>
    %293 = arith.mulf %288, %287 : vector<8x32xf32>
    %294 = arith.addf %292, %293 : vector<8x32xf32>
    %295 = math.tanh %294 : vector<8x32xf32>
    %296 = arith.mulf %290, %295 : vector<8x32xf32>
    %c0_159 = arith.constant 0 : index
    %c0_160 = arith.constant 0 : index
    %297 = vector.load %arg12[%c0_159, %c0_160] : memref<8x32xf32, #tpu.memory_space<vmem>>, vector<8x32xf32>
    tpu.vector_store %arg12[%c0_159, %c0_160], %294 {strides = array<i32>} : memref<8x32xf32, #tpu.memory_space<vmem>>, vector<8x32xf32>,
    %c0_161 = arith.constant 0 : index
    %c0_162 = arith.constant 0 : index
    %298 = vector.load %arg11[%c0_161, %c0_162] : memref<8x32xf32, #tpu.memory_space<vmem>>, vector<8x32xf32>
    tpu.vector_store %arg11[%c0_161, %c0_162], %296 {strides = array<i32>} : memref<8x32xf32, #tpu.memory_space<vmem>>, vector<8x32xf32>,
    %c1_i32_163 = arith.constant 1 : i32
    %c8_i32_164 = arith.constant 8 : i32
    %299 = arith.muli %c1_i32_163, %c8_i32_164 : i32
    %300 = tpu.assume_multiple %299, 8 : i32
    %301 = arith.index_cast %300 : i32 to index
    %c0_165 = arith.constant 0 : index
    %302 = vector.load %arg10[%301, %c0_165] : memref<64x128xf32, #tpu.memory_space<vmem>>, vector<8x128xf32>
    %c0_166 = arith.constant 0 : index
    %c0_167 = arith.constant 0 : index
    %303 = vector.load %arg11[%c0_166, %c0_167] : memref<8x32xf32, #tpu.memory_space<vmem>>, vector<8x32xf32>
    %304 = arith.truncf %303 : vector<8x32xf32> to vector<8x32xbf16>
    %c0_168 = arith.constant 0 : index
    %c0_169 = arith.constant 0 : index
    %305 = vector.load %arg5[%c0_168, %c0_169] : memref<32x128xbf16, #tpu.memory_space<vmem>>, vector<32x128xbf16>
    %cst_170 = arith.constant dense<0.000000e+00> : vector<8x128xf32>
    %306 = tpu.matmul %304, %305, %cst_170 {dimension_numbers = #tpu.dot_dimension_numbers<[1], [0], [0], [1], [0, 0, 1, 1], [], []>} : vector<8x32xbf16>, vector<32x128xbf16>, vector<8x128xf32> -> vector<8x128xf32>
    %307 = arith.addf %302, %306 : vector<8x128xf32>
    %308 = vector.extract_strided_slice %307 {offsets = [0, 0], sizes = [8, 96], strides = [1, 1]} : vector<8x128xf32> to vector<8x96xf32>
    %309 = arith.negf %308 : vector<8x96xf32>
    %310 = math.exp %309 : vector<8x96xf32>
    %cst_171 = arith.constant 1.000000e+00 : f32
    %311 = vector.broadcast %cst_171 : f32 to vector<8x96xf32>
    %312 = arith.addf %311, %310 : vector<8x96xf32>
    %313 = arith.divf %311, %312 : vector<8x96xf32>
    %314 = vector.extract_strided_slice %307 {offsets = [0, 96], sizes = [8, 32], strides = [1, 1]} : vector<8x128xf32> to vector<8x32xf32>
    %315 = math.tanh %314 : vector<8x32xf32>
    %316 = vector.extract_strided_slice %313 {offsets = [0, 0], sizes = [8, 32], strides = [1, 1]} : vector<8x96xf32> to vector<8x32xf32>
    %317 = vector.extract_strided_slice %313 {offsets = [0, 32], sizes = [8, 32], strides = [1, 1]} : vector<8x96xf32> to vector<8x32xf32>
    %318 = vector.extract_strided_slice %313 {offsets = [0, 64], sizes = [8, 32], strides = [1, 1]} : vector<8x96xf32> to vector<8x32xf32>
    %c0_172 = arith.constant 0 : index
    %c0_173 = arith.constant 0 : index
    %319 = vector.load %arg12[%c0_172, %c0_173] : memref<8x32xf32, #tpu.memory_space<vmem>>, vector<8x32xf32>
    %320 = arith.mulf %317, %319 : vector<8x32xf32>
    %321 = arith.mulf %316, %315 : vector<8x32xf32>
    %322 = arith.addf %320, %321 : vector<8x32xf32>
    %323 = math.tanh %322 : vector<8x32xf32>
    %324 = arith.mulf %318, %323 : vector<8x32xf32>
    %c0_174 = arith.constant 0 : index
    %c0_175 = arith.constant 0 : index
    %325 = vector.load %arg12[%c0_174, %c0_175] : memref<8x32xf32, #tpu.memory_space<vmem>>, vector<8x32xf32>
    tpu.vector_store %arg12[%c0_174, %c0_175], %322 {strides = array<i32>} : memref<8x32xf32, #tpu.memory_space<vmem>>, vector<8x32xf32>,
    %c0_176 = arith.constant 0 : index
    %c0_177 = arith.constant 0 : index
    %326 = vector.load %arg11[%c0_176, %c0_177] : memref<8x32xf32, #tpu.memory_space<vmem>>, vector<8x32xf32>
    tpu.vector_store %arg11[%c0_176, %c0_177], %324 {strides = array<i32>} : memref<8x32xf32, #tpu.memory_space<vmem>>, vector<8x32xf32>,
    %c2_i32_178 = arith.constant 2 : i32
    %c8_i32_179 = arith.constant 8 : i32
    %327 = arith.muli %c2_i32_178, %c8_i32_179 : i32
    %328 = tpu.assume_multiple %327, 8 : i32
    %329 = arith.index_cast %328 : i32 to index
    %c0_180 = arith.constant 0 : index
    %330 = vector.load %arg10[%329, %c0_180] : memref<64x128xf32, #tpu.memory_space<vmem>>, vector<8x128xf32>
    %c0_181 = arith.constant 0 : index
    %c0_182 = arith.constant 0 : index
    %331 = vector.load %arg11[%c0_181, %c0_182] : memref<8x32xf32, #tpu.memory_space<vmem>>, vector<8x32xf32>
    %332 = arith.truncf %331 : vector<8x32xf32> to vector<8x32xbf16>
    %c0_183 = arith.constant 0 : index
    %c0_184 = arith.constant 0 : index
    %333 = vector.load %arg5[%c0_183, %c0_184] : memref<32x128xbf16, #tpu.memory_space<vmem>>, vector<32x128xbf16>
    %cst_185 = arith.constant dense<0.000000e+00> : vector<8x128xf32>
    %334 = tpu.matmul %332, %333, %cst_185 {dimension_numbers = #tpu.dot_dimension_numbers<[1], [0], [0], [1], [0, 0, 1, 1], [], []>} : vector<8x32xbf16>, vector<32x128xbf16>, vector<8x128xf32> -> vector<8x128xf32>
    %335 = arith.addf %330, %334 : vector<8x128xf32>
    %336 = vector.extract_strided_slice %335 {offsets = [0, 0], sizes = [8, 96], strides = [1, 1]} : vector<8x128xf32> to vector<8x96xf32>
    %337 = arith.negf %336 : vector<8x96xf32>
    %338 = math.exp %337 : vector<8x96xf32>
    %cst_186 = arith.constant 1.000000e+00 : f32
    %339 = vector.broadcast %cst_186 : f32 to vector<8x96xf32>
    %340 = arith.addf %339, %338 : vector<8x96xf32>
    %341 = arith.divf %339, %340 : vector<8x96xf32>
    %342 = vector.extract_strided_slice %335 {offsets = [0, 96], sizes = [8, 32], strides = [1, 1]} : vector<8x128xf32> to vector<8x32xf32>
    %343 = math.tanh %342 : vector<8x32xf32>
    %344 = vector.extract_strided_slice %341 {offsets = [0, 0], sizes = [8, 32], strides = [1, 1]} : vector<8x96xf32> to vector<8x32xf32>
    %345 = vector.extract_strided_slice %341 {offsets = [0, 32], sizes = [8, 32], strides = [1, 1]} : vector<8x96xf32> to vector<8x32xf32>
    %346 = vector.extract_strided_slice %341 {offsets = [0, 64], sizes = [8, 32], strides = [1, 1]} : vector<8x96xf32> to vector<8x32xf32>
    %c0_187 = arith.constant 0 : index
    %c0_188 = arith.constant 0 : index
    %347 = vector.load %arg12[%c0_187, %c0_188] : memref<8x32xf32, #tpu.memory_space<vmem>>, vector<8x32xf32>
    %348 = arith.mulf %345, %347 : vector<8x32xf32>
    %349 = arith.mulf %344, %343 : vector<8x32xf32>
    %350 = arith.addf %348, %349 : vector<8x32xf32>
    %351 = math.tanh %350 : vector<8x32xf32>
    %352 = arith.mulf %346, %351 : vector<8x32xf32>
    %c0_189 = arith.constant 0 : index
    %c0_190 = arith.constant 0 : index
    %353 = vector.load %arg12[%c0_189, %c0_190] : memref<8x32xf32, #tpu.memory_space<vmem>>, vector<8x32xf32>
    tpu.vector_store %arg12[%c0_189, %c0_190], %350 {strides = array<i32>} : memref<8x32xf32, #tpu.memory_space<vmem>>, vector<8x32xf32>,
    %c0_191 = arith.constant 0 : index
    %c0_192 = arith.constant 0 : index
    %354 = vector.load %arg11[%c0_191, %c0_192] : memref<8x32xf32, #tpu.memory_space<vmem>>, vector<8x32xf32>
    tpu.vector_store %arg11[%c0_191, %c0_192], %352 {strides = array<i32>} : memref<8x32xf32, #tpu.memory_space<vmem>>, vector<8x32xf32>,
    %c3_i32_193 = arith.constant 3 : i32
    %c8_i32_194 = arith.constant 8 : i32
    %355 = arith.muli %c3_i32_193, %c8_i32_194 : i32
    %356 = tpu.assume_multiple %355, 8 : i32
    %357 = arith.index_cast %356 : i32 to index
    %c0_195 = arith.constant 0 : index
    %358 = vector.load %arg10[%357, %c0_195] : memref<64x128xf32, #tpu.memory_space<vmem>>, vector<8x128xf32>
    %c0_196 = arith.constant 0 : index
    %c0_197 = arith.constant 0 : index
    %359 = vector.load %arg11[%c0_196, %c0_197] : memref<8x32xf32, #tpu.memory_space<vmem>>, vector<8x32xf32>
    %360 = arith.truncf %359 : vector<8x32xf32> to vector<8x32xbf16>
    %c0_198 = arith.constant 0 : index
    %c0_199 = arith.constant 0 : index
    %361 = vector.load %arg5[%c0_198, %c0_199] : memref<32x128xbf16, #tpu.memory_space<vmem>>, vector<32x128xbf16>
    %cst_200 = arith.constant dense<0.000000e+00> : vector<8x128xf32>
    %362 = tpu.matmul %360, %361, %cst_200 {dimension_numbers = #tpu.dot_dimension_numbers<[1], [0], [0], [1], [0, 0, 1, 1], [], []>} : vector<8x32xbf16>, vector<32x128xbf16>, vector<8x128xf32> -> vector<8x128xf32>
    %363 = arith.addf %358, %362 : vector<8x128xf32>
    %364 = vector.extract_strided_slice %363 {offsets = [0, 0], sizes = [8, 96], strides = [1, 1]} : vector<8x128xf32> to vector<8x96xf32>
    %365 = arith.negf %364 : vector<8x96xf32>
    %366 = math.exp %365 : vector<8x96xf32>
    %cst_201 = arith.constant 1.000000e+00 : f32
    %367 = vector.broadcast %cst_201 : f32 to vector<8x96xf32>
    %368 = arith.addf %367, %366 : vector<8x96xf32>
    %369 = arith.divf %367, %368 : vector<8x96xf32>
    %370 = vector.extract_strided_slice %363 {offsets = [0, 96], sizes = [8, 32], strides = [1, 1]} : vector<8x128xf32> to vector<8x32xf32>
    %371 = math.tanh %370 : vector<8x32xf32>
    %372 = vector.extract_strided_slice %369 {offsets = [0, 0], sizes = [8, 32], strides = [1, 1]} : vector<8x96xf32> to vector<8x32xf32>
    %373 = vector.extract_strided_slice %369 {offsets = [0, 32], sizes = [8, 32], strides = [1, 1]} : vector<8x96xf32> to vector<8x32xf32>
    %374 = vector.extract_strided_slice %369 {offsets = [0, 64], sizes = [8, 32], strides = [1, 1]} : vector<8x96xf32> to vector<8x32xf32>
    %c0_202 = arith.constant 0 : index
    %c0_203 = arith.constant 0 : index
    %375 = vector.load %arg12[%c0_202, %c0_203] : memref<8x32xf32, #tpu.memory_space<vmem>>, vector<8x32xf32>
    %376 = arith.mulf %373, %375 : vector<8x32xf32>
    %377 = arith.mulf %372, %371 : vector<8x32xf32>
    %378 = arith.addf %376, %377 : vector<8x32xf32>
    %379 = math.tanh %378 : vector<8x32xf32>
    %380 = arith.mulf %374, %379 : vector<8x32xf32>
    %c0_204 = arith.constant 0 : index
    %c0_205 = arith.constant 0 : index
    %381 = vector.load %arg12[%c0_204, %c0_205] : memref<8x32xf32, #tpu.memory_space<vmem>>, vector<8x32xf32>
    tpu.vector_store %arg12[%c0_204, %c0_205], %378 {strides = array<i32>} : memref<8x32xf32, #tpu.memory_space<vmem>>, vector<8x32xf32>,
    %c0_206 = arith.constant 0 : index
    %c0_207 = arith.constant 0 : index
    %382 = vector.load %arg11[%c0_206, %c0_207] : memref<8x32xf32, #tpu.memory_space<vmem>>, vector<8x32xf32>
    tpu.vector_store %arg11[%c0_206, %c0_207], %380 {strides = array<i32>} : memref<8x32xf32, #tpu.memory_space<vmem>>, vector<8x32xf32>,
    %c4_i32_208 = arith.constant 4 : i32
    %c8_i32_209 = arith.constant 8 : i32
    %383 = arith.muli %c4_i32_208, %c8_i32_209 : i32
    %384 = tpu.assume_multiple %383, 8 : i32
    %385 = arith.index_cast %384 : i32 to index
    %c0_210 = arith.constant 0 : index
    %386 = vector.load %arg10[%385, %c0_210] : memref<64x128xf32, #tpu.memory_space<vmem>>, vector<8x128xf32>
    %c0_211 = arith.constant 0 : index
    %c0_212 = arith.constant 0 : index
    %387 = vector.load %arg11[%c0_211, %c0_212] : memref<8x32xf32, #tpu.memory_space<vmem>>, vector<8x32xf32>
    %388 = arith.truncf %387 : vector<8x32xf32> to vector<8x32xbf16>
    %c0_213 = arith.constant 0 : index
    %c0_214 = arith.constant 0 : index
    %389 = vector.load %arg5[%c0_213, %c0_214] : memref<32x128xbf16, #tpu.memory_space<vmem>>, vector<32x128xbf16>
    %cst_215 = arith.constant dense<0.000000e+00> : vector<8x128xf32>
    %390 = tpu.matmul %388, %389, %cst_215 {dimension_numbers = #tpu.dot_dimension_numbers<[1], [0], [0], [1], [0, 0, 1, 1], [], []>} : vector<8x32xbf16>, vector<32x128xbf16>, vector<8x128xf32> -> vector<8x128xf32>
    %391 = arith.addf %386, %390 : vector<8x128xf32>
    %392 = vector.extract_strided_slice %391 {offsets = [0, 0], sizes = [8, 96], strides = [1, 1]} : vector<8x128xf32> to vector<8x96xf32>
    %393 = arith.negf %392 : vector<8x96xf32>
    %394 = math.exp %393 : vector<8x96xf32>
    %cst_216 = arith.constant 1.000000e+00 : f32
    %395 = vector.broadcast %cst_216 : f32 to vector<8x96xf32>
    %396 = arith.addf %395, %394 : vector<8x96xf32>
    %397 = arith.divf %395, %396 : vector<8x96xf32>
    %398 = vector.extract_strided_slice %391 {offsets = [0, 96], sizes = [8, 32], strides = [1, 1]} : vector<8x128xf32> to vector<8x32xf32>
    %399 = math.tanh %398 : vector<8x32xf32>
    %400 = vector.extract_strided_slice %397 {offsets = [0, 0], sizes = [8, 32], strides = [1, 1]} : vector<8x96xf32> to vector<8x32xf32>
    %401 = vector.extract_strided_slice %397 {offsets = [0, 32], sizes = [8, 32], strides = [1, 1]} : vector<8x96xf32> to vector<8x32xf32>
    %402 = vector.extract_strided_slice %397 {offsets = [0, 64], sizes = [8, 32], strides = [1, 1]} : vector<8x96xf32> to vector<8x32xf32>
    %c0_217 = arith.constant 0 : index
    %c0_218 = arith.constant 0 : index
    %403 = vector.load %arg12[%c0_217, %c0_218] : memref<8x32xf32, #tpu.memory_space<vmem>>, vector<8x32xf32>
    %404 = arith.mulf %401, %403 : vector<8x32xf32>
    %405 = arith.mulf %400, %399 : vector<8x32xf32>
    %406 = arith.addf %404, %405 : vector<8x32xf32>
    %407 = math.tanh %406 : vector<8x32xf32>
    %408 = arith.mulf %402, %407 : vector<8x32xf32>
    %c0_219 = arith.constant 0 : index
    %c0_220 = arith.constant 0 : index
    %409 = vector.load %arg12[%c0_219, %c0_220] : memref<8x32xf32, #tpu.memory_space<vmem>>, vector<8x32xf32>
    tpu.vector_store %arg12[%c0_219, %c0_220], %406 {strides = array<i32>} : memref<8x32xf32, #tpu.memory_space<vmem>>, vector<8x32xf32>,
    %c0_221 = arith.constant 0 : index
    %c0_222 = arith.constant 0 : index
    %410 = vector.load %arg11[%c0_221, %c0_222] : memref<8x32xf32, #tpu.memory_space<vmem>>, vector<8x32xf32>
    tpu.vector_store %arg11[%c0_221, %c0_222], %408 {strides = array<i32>} : memref<8x32xf32, #tpu.memory_space<vmem>>, vector<8x32xf32>,
    %c5_i32_223 = arith.constant 5 : i32
    %c8_i32_224 = arith.constant 8 : i32
    %411 = arith.muli %c5_i32_223, %c8_i32_224 : i32
    %412 = tpu.assume_multiple %411, 8 : i32
    %413 = arith.index_cast %412 : i32 to index
    %c0_225 = arith.constant 0 : index
    %414 = vector.load %arg10[%413, %c0_225] : memref<64x128xf32, #tpu.memory_space<vmem>>, vector<8x128xf32>
    %c0_226 = arith.constant 0 : index
    %c0_227 = arith.constant 0 : index
    %415 = vector.load %arg11[%c0_226, %c0_227] : memref<8x32xf32, #tpu.memory_space<vmem>>, vector<8x32xf32>
    %416 = arith.truncf %415 : vector<8x32xf32> to vector<8x32xbf16>
    %c0_228 = arith.constant 0 : index
    %c0_229 = arith.constant 0 : index
    %417 = vector.load %arg5[%c0_228, %c0_229] : memref<32x128xbf16, #tpu.memory_space<vmem>>, vector<32x128xbf16>
    %cst_230 = arith.constant dense<0.000000e+00> : vector<8x128xf32>
    %418 = tpu.matmul %416, %417, %cst_230 {dimension_numbers = #tpu.dot_dimension_numbers<[1], [0], [0], [1], [0, 0, 1, 1], [], []>} : vector<8x32xbf16>, vector<32x128xbf16>, vector<8x128xf32> -> vector<8x128xf32>
    %419 = arith.addf %414, %418 : vector<8x128xf32>
    %420 = vector.extract_strided_slice %419 {offsets = [0, 0], sizes = [8, 96], strides = [1, 1]} : vector<8x128xf32> to vector<8x96xf32>
    %421 = arith.negf %420 : vector<8x96xf32>
    %422 = math.exp %421 : vector<8x96xf32>
    %cst_231 = arith.constant 1.000000e+00 : f32
    %423 = vector.broadcast %cst_231 : f32 to vector<8x96xf32>
    %424 = arith.addf %423, %422 : vector<8x96xf32>
    %425 = arith.divf %423, %424 : vector<8x96xf32>
    %426 = vector.extract_strided_slice %419 {offsets = [0, 96], sizes = [8, 32], strides = [1, 1]} : vector<8x128xf32> to vector<8x32xf32>
    %427 = math.tanh %426 : vector<8x32xf32>
    %428 = vector.extract_strided_slice %425 {offsets = [0, 0], sizes = [8, 32], strides = [1, 1]} : vector<8x96xf32> to vector<8x32xf32>
    %429 = vector.extract_strided_slice %425 {offsets = [0, 32], sizes = [8, 32], strides = [1, 1]} : vector<8x96xf32> to vector<8x32xf32>
    %430 = vector.extract_strided_slice %425 {offsets = [0, 64], sizes = [8, 32], strides = [1, 1]} : vector<8x96xf32> to vector<8x32xf32>
    %c0_232 = arith.constant 0 : index
    %c0_233 = arith.constant 0 : index
    %431 = vector.load %arg12[%c0_232, %c0_233] : memref<8x32xf32, #tpu.memory_space<vmem>>, vector<8x32xf32>
    %432 = arith.mulf %429, %431 : vector<8x32xf32>
    %433 = arith.mulf %428, %427 : vector<8x32xf32>
    %434 = arith.addf %432, %433 : vector<8x32xf32>
    %435 = math.tanh %434 : vector<8x32xf32>
    %436 = arith.mulf %430, %435 : vector<8x32xf32>
    %c0_234 = arith.constant 0 : index
    %c0_235 = arith.constant 0 : index
    %437 = vector.load %arg12[%c0_234, %c0_235] : memref<8x32xf32, #tpu.memory_space<vmem>>, vector<8x32xf32>
    tpu.vector_store %arg12[%c0_234, %c0_235], %434 {strides = array<i32>} : memref<8x32xf32, #tpu.memory_space<vmem>>, vector<8x32xf32>,
    %c0_236 = arith.constant 0 : index
    %c0_237 = arith.constant 0 : index
    %438 = vector.load %arg11[%c0_236, %c0_237] : memref<8x32xf32, #tpu.memory_space<vmem>>, vector<8x32xf32>
    tpu.vector_store %arg11[%c0_236, %c0_237], %436 {strides = array<i32>} : memref<8x32xf32, #tpu.memory_space<vmem>>, vector<8x32xf32>,
    %c6_i32_238 = arith.constant 6 : i32
    %c8_i32_239 = arith.constant 8 : i32
    %439 = arith.muli %c6_i32_238, %c8_i32_239 : i32
    %440 = tpu.assume_multiple %439, 8 : i32
    %441 = arith.index_cast %440 : i32 to index
    %c0_240 = arith.constant 0 : index
    %442 = vector.load %arg10[%441, %c0_240] : memref<64x128xf32, #tpu.memory_space<vmem>>, vector<8x128xf32>
    %c0_241 = arith.constant 0 : index
    %c0_242 = arith.constant 0 : index
    %443 = vector.load %arg11[%c0_241, %c0_242] : memref<8x32xf32, #tpu.memory_space<vmem>>, vector<8x32xf32>
    %444 = arith.truncf %443 : vector<8x32xf32> to vector<8x32xbf16>
    %c0_243 = arith.constant 0 : index
    %c0_244 = arith.constant 0 : index
    %445 = vector.load %arg5[%c0_243, %c0_244] : memref<32x128xbf16, #tpu.memory_space<vmem>>, vector<32x128xbf16>
    %cst_245 = arith.constant dense<0.000000e+00> : vector<8x128xf32>
    %446 = tpu.matmul %444, %445, %cst_245 {dimension_numbers = #tpu.dot_dimension_numbers<[1], [0], [0], [1], [0, 0, 1, 1], [], []>} : vector<8x32xbf16>, vector<32x128xbf16>, vector<8x128xf32> -> vector<8x128xf32>
    %447 = arith.addf %442, %446 : vector<8x128xf32>
    %448 = vector.extract_strided_slice %447 {offsets = [0, 0], sizes = [8, 96], strides = [1, 1]} : vector<8x128xf32> to vector<8x96xf32>
    %449 = arith.negf %448 : vector<8x96xf32>
    %450 = math.exp %449 : vector<8x96xf32>
    %cst_246 = arith.constant 1.000000e+00 : f32
    %451 = vector.broadcast %cst_246 : f32 to vector<8x96xf32>
    %452 = arith.addf %451, %450 : vector<8x96xf32>
    %453 = arith.divf %451, %452 : vector<8x96xf32>
    %454 = vector.extract_strided_slice %447 {offsets = [0, 96], sizes = [8, 32], strides = [1, 1]} : vector<8x128xf32> to vector<8x32xf32>
    %455 = math.tanh %454 : vector<8x32xf32>
    %456 = vector.extract_strided_slice %453 {offsets = [0, 0], sizes = [8, 32], strides = [1, 1]} : vector<8x96xf32> to vector<8x32xf32>
    %457 = vector.extract_strided_slice %453 {offsets = [0, 32], sizes = [8, 32], strides = [1, 1]} : vector<8x96xf32> to vector<8x32xf32>
    %458 = vector.extract_strided_slice %453 {offsets = [0, 64], sizes = [8, 32], strides = [1, 1]} : vector<8x96xf32> to vector<8x32xf32>
    %c0_247 = arith.constant 0 : index
    %c0_248 = arith.constant 0 : index
    %459 = vector.load %arg12[%c0_247, %c0_248] : memref<8x32xf32, #tpu.memory_space<vmem>>, vector<8x32xf32>
    %460 = arith.mulf %457, %459 : vector<8x32xf32>
    %461 = arith.mulf %456, %455 : vector<8x32xf32>
    %462 = arith.addf %460, %461 : vector<8x32xf32>
    %463 = math.tanh %462 : vector<8x32xf32>
    %464 = arith.mulf %458, %463 : vector<8x32xf32>
    %c0_249 = arith.constant 0 : index
    %c0_250 = arith.constant 0 : index
    %465 = vector.load %arg12[%c0_249, %c0_250] : memref<8x32xf32, #tpu.memory_space<vmem>>, vector<8x32xf32>
    tpu.vector_store %arg12[%c0_249, %c0_250], %462 {strides = array<i32>} : memref<8x32xf32, #tpu.memory_space<vmem>>, vector<8x32xf32>,
    %c0_251 = arith.constant 0 : index
    %c0_252 = arith.constant 0 : index
    %466 = vector.load %arg11[%c0_251, %c0_252] : memref<8x32xf32, #tpu.memory_space<vmem>>, vector<8x32xf32>
    tpu.vector_store %arg11[%c0_251, %c0_252], %464 {strides = array<i32>} : memref<8x32xf32, #tpu.memory_space<vmem>>, vector<8x32xf32>,
    %c7_i32_253 = arith.constant 7 : i32
    %c8_i32_254 = arith.constant 8 : i32
    %467 = arith.muli %c7_i32_253, %c8_i32_254 : i32
    %468 = tpu.assume_multiple %467, 8 : i32
    %469 = arith.index_cast %468 : i32 to index
    %c0_255 = arith.constant 0 : index
    %470 = vector.load %arg10[%469, %c0_255] : memref<64x128xf32, #tpu.memory_space<vmem>>, vector<8x128xf32>
    %c0_256 = arith.constant 0 : index
    %c0_257 = arith.constant 0 : index
    %471 = vector.load %arg11[%c0_256, %c0_257] : memref<8x32xf32, #tpu.memory_space<vmem>>, vector<8x32xf32>
    %472 = arith.truncf %471 : vector<8x32xf32> to vector<8x32xbf16>
    %c0_258 = arith.constant 0 : index
    %c0_259 = arith.constant 0 : index
    %473 = vector.load %arg5[%c0_258, %c0_259] : memref<32x128xbf16, #tpu.memory_space<vmem>>, vector<32x128xbf16>
    %cst_260 = arith.constant dense<0.000000e+00> : vector<8x128xf32>
    %474 = tpu.matmul %472, %473, %cst_260 {dimension_numbers = #tpu.dot_dimension_numbers<[1], [0], [0], [1], [0, 0, 1, 1], [], []>} : vector<8x32xbf16>, vector<32x128xbf16>, vector<8x128xf32> -> vector<8x128xf32>
    %475 = arith.addf %470, %474 : vector<8x128xf32>
    %476 = vector.extract_strided_slice %475 {offsets = [0, 0], sizes = [8, 96], strides = [1, 1]} : vector<8x128xf32> to vector<8x96xf32>
    %477 = arith.negf %476 : vector<8x96xf32>
    %478 = math.exp %477 : vector<8x96xf32>
    %cst_261 = arith.constant 1.000000e+00 : f32
    %479 = vector.broadcast %cst_261 : f32 to vector<8x96xf32>
    %480 = arith.addf %479, %478 : vector<8x96xf32>
    %481 = arith.divf %479, %480 : vector<8x96xf32>
    %482 = vector.extract_strided_slice %475 {offsets = [0, 96], sizes = [8, 32], strides = [1, 1]} : vector<8x128xf32> to vector<8x32xf32>
    %483 = math.tanh %482 : vector<8x32xf32>
    %484 = vector.extract_strided_slice %481 {offsets = [0, 0], sizes = [8, 32], strides = [1, 1]} : vector<8x96xf32> to vector<8x32xf32>
    %485 = vector.extract_strided_slice %481 {offsets = [0, 32], sizes = [8, 32], strides = [1, 1]} : vector<8x96xf32> to vector<8x32xf32>
    %486 = vector.extract_strided_slice %481 {offsets = [0, 64], sizes = [8, 32], strides = [1, 1]} : vector<8x96xf32> to vector<8x32xf32>
    %c0_262 = arith.constant 0 : index
    %c0_263 = arith.constant 0 : index
    %487 = vector.load %arg12[%c0_262, %c0_263] : memref<8x32xf32, #tpu.memory_space<vmem>>, vector<8x32xf32>
    %488 = arith.mulf %485, %487 : vector<8x32xf32>
    %489 = arith.mulf %484, %483 : vector<8x32xf32>
    %490 = arith.addf %488, %489 : vector<8x32xf32>
    %491 = math.tanh %490 : vector<8x32xf32>
    %492 = arith.mulf %486, %491 : vector<8x32xf32>
    %c0_264 = arith.constant 0 : index
    %c0_265 = arith.constant 0 : index
    %493 = vector.load %arg12[%c0_264, %c0_265] : memref<8x32xf32, #tpu.memory_space<vmem>>, vector<8x32xf32>
    tpu.vector_store %arg12[%c0_264, %c0_265], %490 {strides = array<i32>} : memref<8x32xf32, #tpu.memory_space<vmem>>, vector<8x32xf32>,
    %c0_266 = arith.constant 0 : index
    %c0_267 = arith.constant 0 : index
    %494 = vector.load %arg11[%c0_266, %c0_267] : memref<8x32xf32, #tpu.memory_space<vmem>>, vector<8x32xf32>
    tpu.vector_store %arg11[%c0_266, %c0_267], %492 {strides = array<i32>} : memref<8x32xf32, #tpu.memory_space<vmem>>, vector<8x32xf32>,
    %c8_i32_268 = arith.constant 8 : i32
    %c0_269 = arith.constant 0 : index
    %c0_270 = arith.constant 0 : index
    %495 = vector.load %arg11[%c0_269, %c0_270] : memref<8x32xf32, #tpu.memory_space<vmem>>, vector<8x32xf32>
    %496 = arith.truncf %495 : vector<8x32xf32> to vector<8x32xbf16>
    %c0_271 = arith.constant 0 : index
    %c0_272 = arith.constant 0 : index
    %497 = vector.load %arg7[%c0_271, %c0_272] : memref<32x8xbf16, #tpu.memory_space<vmem>>, vector<32x8xbf16>
    %cst_273 = arith.constant dense<0.000000e+00> : vector<8x8xf32>
    %498 = tpu.matmul %496, %497, %cst_273 {dimension_numbers = #tpu.dot_dimension_numbers<[1], [0], [0], [1], [0, 0, 1, 1], [], []>} : vector<8x32xbf16>, vector<32x8xbf16>, vector<8x8xf32> -> vector<8x8xf32>
    %c0_274 = arith.constant 0 : index
    %c0_275 = arith.constant 0 : index
    %499 = vector.load %arg8[%c0_274, %c0_275] : memref<1x8xf32, #tpu.memory_space<vmem>>, vector<1x8xf32>
    %500 = vector.broadcast %499 : vector<1x8xf32> to vector<8x8xf32>
    %501 = arith.addf %498, %500 : vector<8x8xf32>
    %c0_276 = arith.constant 0 : index
    %c0_277 = arith.constant 0 : index
    %502 = vector.load %arg9[%c0_276, %c0_277] : memref<8x8xf32, #tpu.memory_space<vmem>>, vector<8x8xf32>
    tpu.vector_store %arg9[%c0_276, %c0_277], %501 {strides = array<i32>} : memref<8x8xf32, #tpu.memory_space<vmem>>, vector<8x8xf32>,
    return
  }
}

</mosaic_0001>

<llo_original>
// kernel: rnn_forward.1
$region0: #{rnn_forward.1}
  #allocation0 [shape = 'u32[]', space=smem, size = 0x4, offset = 0x4, fixed_abs, tag = 'smem constant byte address 0x4 - core index']
  #allocation1 [shape = 'u32[144,128]{1,0:T(1,128)}', space=vmem, size = 0x12000, scoped, tag = 'internal scratch']
  #allocation2 [shape = 'f32[64,128]{1,0:T(8,128)}', space=vmem, size = 0x8000, scoped, tag = 'scratch operand']
  #allocation3 [shape = 'f32[8,32]{1,0:T(8,128)}', space=vmem, size = 0x1000, scoped, tag = 'scratch operand']
  #allocation4 [shape = 'f32[8,32]{1,0:T(8,128)}', space=vmem, size = 0x1000, scoped, tag = 'scratch operand']
  #allocation5 [shape = 'bf16[64,32]{1,0:T(8,128)(2,1)}', space=vmem, size = 0x4000, scoped, tag = 'scratch operand']
  %s0 = inlined_call_operand.vmem [shape: f32[64,16], index: 0, kind: input, shape index: {}]
  %s1 = inlined_call_operand.vmem [shape: bf16[16,128], index: 1, kind: input, shape index: {}]
  %s2 = inlined_call_operand.vmem [shape: bf16[32,128], index: 2, kind: input, shape index: {}]
  %s3 = inlined_call_operand.vmem [shape: f32[1,128], index: 3, kind: input, shape index: {}]
  %s4 = inlined_call_operand.vmem [shape: bf16[32,128], index: 4, kind: input, shape index: {}]
  %s5 = inlined_call_operand.vmem [shape: bf16[32,128], index: 5, kind: input, shape index: {}]
  %s6 = inlined_call_operand.vmem [shape: f32[1,128], index: 6, kind: input, shape index: {}]
  %s7 = inlined_call_operand.vmem [shape: bf16[32,8], index: 7, kind: input, shape index: {}]
  %s8 = inlined_call_operand.vmem [shape: f32[1,8], index: 8, kind: input, shape index: {}]
  %s9 = inlined_call_operand.hbm [shape: f32[8,8], index: 9, kind: output, shape index: {}]
  %s10 = sld [smem:[#allocation0]]
  $region46: #{rnn_forward.1} parent=0
    _
  %s12 = ssub.s32 1, %s10
  %s13 = scalar_select 0, %s12, %s10
  $region1: #{rnn_forward.1} parent=0
    #allocation6 [shape = 'u8[4096]{0}', space=vmem, size = 0x1000, scoped, tag = 'output window, operand 0, single buffered']
    #allocation7 [shape = 's32[1]{0}', space=sflag, size = 0x4, scoped, tag = 'scoped memory for rnn_forward.1']
    %14 = vsyncpa [#allocation7], 0
    // Predicated region
    $region2: #{rnn_forward.1} parent=1 // pred_check
      _
    $region3: #{rnn_forward.1} parent=1 // pred_check_branch
      %16 = sbr.rel (0) target = $region5
    $region4: #{rnn_forward.1} parent=1 // pred_region
      _
    $region5: #{rnn_forward.1} parent=1 // pred_fallthru
      _
    // Predicated region
    $region6: #{rnn_forward.1} parent=1 // pred_check
      _
    $region7: #{rnn_forward.1} parent=1 // pred_check_branch
      %18 = sbr.rel (0) target = $region9
    $region8: #{rnn_forward.1} parent=1 // pred_region
      _
    $region9: #{rnn_forward.1} parent=1 // pred_fallthru
      _
    // Predicated region
    $region10: #{rnn_forward.1} parent=1 // pred_check
      _
    $region11: #{rnn_forward.1} parent=1 // pred_check_branch
      %20 = sbr.rel (0) target = $region13
    $region12: #{rnn_forward.1} parent=1 // pred_region
      _
    $region13: #{rnn_forward.1} parent=1 // pred_fallthru
      _
    // Predicated region
    $region14: #{rnn_forward.1} parent=1 // pred_check
      _
    $region15: #{rnn_forward.1} parent=1 // pred_check_branch
      %22 = sbr.rel (0) target = $region17
    $region16: #{rnn_forward.1} parent=1 // pred_region
      _
    $region17: #{rnn_forward.1} parent=1 // pred_fallthru
      _
    // Predicated region
    $region18: #{rnn_forward.1} parent=1 // pred_check
      _
    $region19: #{rnn_forward.1} parent=1 // pred_check_branch
      %24 = sbr.rel (0) target = $region21
    $region20: #{rnn_forward.1} parent=1 // pred_region
      _
    $region21: #{rnn_forward.1} parent=1 // pred_fallthru
      _
    // Predicated region
    $region22: #{rnn_forward.1} parent=1 // pred_check
      _
    $region23: #{rnn_forward.1} parent=1 // pred_check_branch
      %26 = sbr.rel (0) target = $region25
    $region24: #{rnn_forward.1} parent=1 // pred_region
      _
    $region25: #{rnn_forward.1} parent=1 // pred_fallthru
      _
    // Predicated region
    $region26: #{rnn_forward.1} parent=1 // pred_check
      _
    $region27: #{rnn_forward.1} parent=1 // pred_check_branch
      %28 = sbr.rel (0) target = $region29
    $region28: #{rnn_forward.1} parent=1 // pred_region
      _
    $region29: #{rnn_forward.1} parent=1 // pred_fallthru
      _
    // Predicated region
    $region30: #{rnn_forward.1} parent=1 // pred_check
      _
    $region31: #{rnn_forward.1} parent=1 // pred_check_branch
      %30 = sbr.rel (0) target = $region33
    $region32: #{rnn_forward.1} parent=1 // pred_region
      _
    $region33: #{rnn_forward.1} parent=1 // pred_fallthru
      _
    // Predicated region
    $region34: #{rnn_forward.1} parent=1 // pred_check
      _
    $region35: #{rnn_forward.1} parent=1 // pred_check_branch
      %32 = sbr.rel (0) target = $region37
    $region36: #{rnn_forward.1} parent=1 // pred_region
      _
    $region37: #{rnn_forward.1} parent=1 // pred_fallthru
      _
    %v34 = vld [vmem:[%s0] sm:$0xff]
    %v35 = vld [vmem:[%s0 + $0x8] sm:$0xff]
    %v36 = vld [vmem:[%s0 + $0x10] sm:$0xff]
    %v37 = vld [vmem:[%s0 + $0x18] sm:$0xff]
    %v38 = vld [vmem:[%s0 + $0x20] sm:$0xff]
    %v39 = vld [vmem:[%s0 + $0x28] sm:$0xff]
    %v40 = vld [vmem:[%s0 + $0x30] sm:$0xff]
    %v41 = vld [vmem:[%s0 + $0x38] sm:$0xff]
    %v42 = vpack.c.bf16 %v35, %v34
    %v43 = vpack.c.bf16 %v37, %v36
    %v44 = vpack.c.bf16 %v39, %v38
    %v45 = vpack.c.bf16 %v41, %v40
    %v46 = vld [vmem:[%s1] sm:$0xf]
    %v47 = vld [vmem:[%s1 + $0x4] sm:$0xf]
    %v48 = vld [vmem:[%s3] sm:$0x1]
    %v50 = vlaneseq
    %v51 = vshrl.u32 %v50, 7
    %v52 = vsub.s32 0, %v51
    %v53 = vrot.slane %v48, %v52
    %v57 = vunpack.c.l.b16 %v46
    %v58 = vunpack.c.l.b16 %v47
    %v59 = vpack.c.b16 %v58, %v57
    %vm61 = vcmask 130048
    %v63 = vsel %vm61, %v42, 0
    %v66 = vsel %vm61, %v43, 0
    %v69 = vsel %vm61, %v44, 0
    %v72 = vsel %vm61, %v45, 0
    %74 = vmatprep.subr.bf16.mxu0 0
    %75 = vmatpush1.bf16.msra.mxu0 0
    %76 = vmatprep.subr.bf16.mxu0 0
    %77 = vmatpush1.bf16.msra.mxu0 0
    %78 = vmatprep.subr.bf16.mxu0 0
    %79 = vmatpush1.bf16.msra.mxu0 0
    %80 = vmatprep.subr.bf16.mxu0 0
    %81 = vmatpush1.bf16.msra.mxu0 0
    %82 = vmatprep.subr.bf16.mxu0 0
    %83 = vmatpush1.bf16.msra.mxu0 0
    %84 = vmatprep.subr.bf16.mxu0 0
    %85 = vmatpush1.bf16.msra.mxu0 0
    %86 = vmatprep.subr.bf16.mxu0 0
    %87 = vmatpush1.bf16.msra.mxu0 0
    %88 = vmatprep.subr.bf16.mxu0 0
    %89 = vmatpush1.bf16.msra.mxu0 %v59
    %90 = vmatprep.subr.bf16.mxu0 0
    %91 = vmatpush2.bf16.msra.mxu0 0
    %92 = vmatprep.subr.bf16.mxu0 0
    %93 = vmatpush2.bf16.msra.mxu0 0
    %94 = vmatprep.subr.bf16.mxu0 0
    %95 = vmatpush2.bf16.msra.mxu0 0
    %96 = vmatprep.subr.bf16.mxu0 0
    %97 = vmatpush2.bf16.msra.mxu0 0
    %98 = vmatprep.subr.bf16.mxu0 0
    %99 = vmatpush2.bf16.msra.mxu0 0
    %100 = vmatprep.subr.bf16.mxu0 0
    %101 = vmatpush2.bf16.msra.mxu0 0
    %102 = vmatprep.subr.bf16.mxu0 0
    %103 = vmatpush2.bf16.msra.mxu0 0
    %104 = vmatprep.subr.bf16.mxu0 0
    %105 = vmatpush2.bf16.msra.mxu0 0
    %106 = vmatprep.mubr.bf16.mxu0 0
    %107 = vmatmul.mubr.bf16.gmra.mxu0 %v63
    %v108 = vpop.f32.mrf.mxu0
    %v109 = vadd.f32 %v53, %v108
    %v110 = vpop.f32.mrf.mxu0
    %v111 = vpop.f32.mrf.mxu0
    %v112 = vadd.f32 %v53, %v111
    %v113 = vpop.f32.mrf.mxu0
    %114 = vmatprep.mubr.bf16.mxu0 0
    %115 = vmatmul.mubr.bf16.gmra.mxu0 %v66
    %v116 = vpop.f32.mrf.mxu0
    %v117 = vadd.f32 %v53, %v116
    %v118 = vpop.f32.mrf.mxu0
    %v119 = vpop.f32.mrf.mxu0
    %v120 = vadd.f32 %v53, %v119
    %v121 = vpop.f32.mrf.mxu0
    %122 = vmatprep.mubr.bf16.mxu0 0
    %123 = vmatmul.mubr.bf16.gmra.mxu0 %v69
    %v124 = vpop.f32.mrf.mxu0
    %v125 = vadd.f32 %v53, %v124
    %v126 = vpop.f32.mrf.mxu0
    %v127 = vpop.f32.mrf.mxu0
    %v128 = vadd.f32 %v53, %v127
    %v129 = vpop.f32.mrf.mxu0
    %130 = vmatprep.mubr.bf16.mxu0 0
    %131 = vmatmul.mubr.bf16.gmra.mxu0 %v72
    %v132 = vpop.f32.mrf.mxu0
    %v133 = vadd.f32 %v53, %v132
    %v134 = vpop.f32.mrf.mxu0
    %v135 = vpop.f32.mrf.mxu0
    %v136 = vadd.f32 %v53, %v135
    %v137 = vpop.f32.mrf.mxu0
    %138 = vdwg.mxu0
    %139 = vst [vmem:[#allocation2] sm:$0xff] %v109
    %140 = vst [vmem:[#allocation2 + $0x8] sm:$0xff] %v112
    %141 = vst [vmem:[#allocation2 + $0x10] sm:$0xff] %v117
    %142 = vst [vmem:[#allocation2 + $0x18] sm:$0xff] %v120
    %143 = vst [vmem:[#allocation2 + $0x20] sm:$0xff] %v125
    %144 = vst [vmem:[#allocation2 + $0x28] sm:$0xff] %v128
    %145 = vst [vmem:[#allocation2 + $0x30] sm:$0xff] %v133
    %146 = vst [vmem:[#allocation2 + $0x38] sm:$0xff] %v136
    %vm147 = vcmask 261120
    %148 = vst.msk [vmem:[#allocation3] sm:$0xff] %vm147, 0.0
    %149 = vst.msk [vmem:[#allocation4] sm:$0xff] %vm147, 0.0
    %v150 = vld [vmem:[#allocation2] sm:$0xff]
    %v151 = vld [vmem:[#allocation3] sm:$0xff]
    %v152 = vpack.c.bf16 %v151, %v151
    %v153 = vld [vmem:[%s2] sm:$0xf]
    %v154 = vld [vmem:[%s2 + $0x4] sm:$0xf]
    %v155 = vld [vmem:[%s2 + $0x8] sm:$0xf]
    %v156 = vld [vmem:[%s2 + $0xc] sm:$0xf]
    %v161 = vunpack.c.l.b16 %v153
    %v162 = vunpack.c.l.b16 %v154
    %v163 = vunpack.c.l.b16 %v155
    %v164 = vunpack.c.l.b16 %v156
    %v165 = vpack.c.b16 %v162, %v161
    %v166 = vpack.c.b16 %v164, %v163
    %v170 = vsel %vm147, %v152, 0
    %172 = vmatprep.subr.bf16.mxu0 0
    %173 = vmatpush1.bf16.msra.mxu0 0
    %174 = vmatprep.subr.bf16.mxu0 0
    %175 = vmatpush1.bf16.msra.mxu0 0
    %176 = vmatprep.subr.bf16.mxu0 0
    %177 = vmatpush1.bf16.msra.mxu0 0
    %178 = vmatprep.subr.bf16.mxu0 0
    %179 = vmatpush1.bf16.msra.mxu0 0
    %180 = vmatprep.subr.bf16.mxu0 0
    %181 = vmatpush1.bf16.msra.mxu0 0
    %182 = vmatprep.subr.bf16.mxu0 0
    %183 = vmatpush1.bf16.msra.mxu0 0
    %184 = vmatprep.subr.bf16.mxu0 0
    %185 = vmatpush1.bf16.msra.mxu0 %v166
    %186 = vmatprep.subr.bf16.mxu0 0
    %187 = vmatpush1.bf16.msra.mxu0 %v165
    %188 = vmatprep.subr.bf16.mxu0 0
    %189 = vmatpush2.bf16.msra.mxu0 0
    %190 = vmatprep.subr.bf16.mxu0 0
    %191 = vmatpush2.bf16.msra.mxu0 0
    %192 = vmatprep.subr.bf16.mxu0 0
    %193 = vmatpush2.bf16.msra.mxu0 0
    %194 = vmatprep.subr.bf16.mxu0 0
    %195 = vmatpush2.bf16.msra.mxu0 0
    %196 = vmatprep.subr.bf16.mxu0 0
    %197 = vmatpush2.bf16.msra.mxu0 0
    %198 = vmatprep.subr.bf16.mxu0 0
    %199 = vmatpush2.bf16.msra.mxu0 0
    %200 = vmatprep.subr.bf16.mxu0 0
    %201 = vmatpush2.bf16.msra.mxu0 0
    %202 = vmatprep.subr.bf16.mxu0 0
    %203 = vmatpush2.bf16.msra.mxu0 0
    %204 = vmatprep.mubr.bf16.mxu0 0
    %205 = vmatmul.mubr.bf16.gmra.mxu0 %v170
    %v206 = vpop.f32.mrf.mxu0
    %v207 = vadd.f32 0.0, %v206
    %v208 = vpop.f32.mrf.mxu0
    %v209 = vpop.f32.mrf.mxu0
    %v210 = vpop.f32.mrf.mxu0
    %211 = vdwg.mxu0
    %v212 = vadd.f32 %v150, %v207
    %v213 = vxor.u32 %v212, 2147483648
    %v214 = vmul.f32 %v213, 1.442695
    %v215 = vpow.pop %v214
    %v216 = vadd.f32 %v215, 1.0
    %v217 = vrcp.pop %v216
    %v218 = vmul.f32 1.0, %v217
    %v219 = vtanh.pop %v212
    %v220 = vld [vmem:[#allocation4] sm:$0xff]
    %222 = vrot.lane.b32.xlu0 %v220, 32
    %v223 = vpop.permute.xlu0 %222
    %v225 = vmul.f32 %v218, %v223
    %227 = vrot.lane.b32.xlu0 %v219, 32
    %v228 = vpop.permute.xlu0 %227
    %v230 = vmul.f32 %v218, %v228
    %232 = vrot.lane.b32.xlu0 %v230, 32
    %v233 = vpop.permute.xlu0 %232
    %v235 = vadd.f32 %v225, %v233
    %v236 = vtanh.pop %v235
    %238 = vrot.lane.b32.xlu0 %v236, 32
    %v239 = vpop.permute.xlu0 %238
    %v241 = vmul.f32 %v218, %v239
    %243 = vrot.lane.b32.xlu0 %v235, 96
    %v244 = vpop.permute.xlu0 %243
    %246 = vst.msk [vmem:[#allocation4] sm:$0xff] %vm147, %v244
    %248 = vrot.lane.b32.xlu0 %v241, 64
    %v249 = vpop.permute.xlu0 %248
    %251 = vst.msk [vmem:[#allocation3] sm:$0xff] %vm147, %v249
    %v252 = vpack.c.bf16 %v241, %v241
    %v254 = vunpack.c.l.b16 %v252
    %v255 = vpack.c.b16 %v254, %v254
    %256 = vrot.lane.b32.xlu0 %v255, 64
    %v257 = vpop.permute.xlu0 %256
    %vm259 = vcmask 257024
    %260 = vst.msk [vmem:[#allocation5] sm:$0xf] %vm259, %v257
    %s261 = scalar_lea.vmem [#allocation2], 8
    %v262 = vld [vmem:[%s261] sm:$0xff]
    %v263 = vld [vmem:[#allocation3] sm:$0xff]
    %v264 = vpack.c.bf16 %v263, %v263
    %v265 = vld [vmem:[%s2] sm:$0xf]
    %v266 = vld [vmem:[%s2 + $0x4] sm:$0xf]
    %v267 = vld [vmem:[%s2 + $0x8] sm:$0xf]
    %v268 = vld [vmem:[%s2 + $0xc] sm:$0xf]
    %v273 = vunpack.c.l.b16 %v265
    %v274 = vunpack.c.l.b16 %v266
    %v275 = vunpack.c.l.b16 %v267
    %v276 = vunpack.c.l.b16 %v268
    %v277 = vpack.c.b16 %v274, %v273
    %v278 = vpack.c.b16 %v276, %v275
    %v282 = vsel %vm147, %v264, 0
    %284 = vmatprep.subr.bf16.mxu0 0
    %285 = vmatpush1.bf16.msra.mxu0 0
    %286 = vmatprep.subr.bf16.mxu0 0
    %287 = vmatpush1.bf16.msra.mxu0 0
    %288 = vmatprep.subr.bf16.mxu0 0
    %289 = vmatpush1.bf16.msra.mxu0 0
    %290 = vmatprep.subr.bf16.mxu0 0
    %291 = vmatpush1.bf16.msra.mxu0 0
    %292 = vmatprep.subr.bf16.mxu0 0
    %293 = vmatpush1.bf16.msra.mxu0 0
    %294 = vmatprep.subr.bf16.mxu0 0
    %295 = vmatpush1.bf16.msra.mxu0 0
    %296 = vmatprep.subr.bf16.mxu0 0
    %297 = vmatpush1.bf16.msra.mxu0 %v278
    %298 = vmatprep.subr.bf16.mxu0 0
    %299 = vmatpush1.bf16.msra.mxu0 %v277
    %300 = vmatprep.subr.bf16.mxu0 0
    %301 = vmatpush2.bf16.msra.mxu0 0
    %302 = vmatprep.subr.bf16.mxu0 0
    %303 = vmatpush2.bf16.msra.mxu0 0
    %304 = vmatprep.subr.bf16.mxu0 0
    %305 = vmatpush2.bf16.msra.mxu0 0
    %306 = vmatprep.subr.bf16.mxu0 0
    %307 = vmatpush2.bf16.msra.mxu0 0
    %308 = vmatprep.subr.bf16.mxu0 0
    %309 = vmatpush2.bf16.msra.mxu0 0
    %310 = vmatprep.subr.bf16.mxu0 0
    %311 = vmatpush2.bf16.msra.mxu0 0
    %312 = vmatprep.subr.bf16.mxu0 0
    %313 = vmatpush2.bf16.msra.mxu0 0
    %314 = vmatprep.subr.bf16.mxu0 0
    %315 = vmatpush2.bf16.msra.mxu0 0
    %316 = vmatprep.mubr.bf16.mxu0 0
    %317 = vmatmul.mubr.bf16.gmra.mxu0 %v282
    %v318 = vpop.f32.mrf.mxu0
    %v319 = vadd.f32 0.0, %v318
    %v320 = vpop.f32.mrf.mxu0
    %v321 = vpop.f32.mrf.mxu0
    %v322 = vpop.f32.mrf.mxu0
    %323 = vdwg.mxu0
    %v324 = vadd.f32 %v262, %v319
    %v325 = vxor.u32 %v324, 2147483648
    %v326 = vmul.f32 %v325, 1.442695
    %v327 = vpow.pop %v326
    %v328 = vadd.f32 %v327, 1.0
    %v329 = vrcp.pop %v328
    %v330 = vmul.f32 1.0, %v329
    %v331 = vtanh.pop %v324
    %v332 = vld [vmem:[#allocation4] sm:$0xff]
    %334 = vrot.lane.b32.xlu0 %v332, 32
    %v335 = vpop.permute.xlu0 %334
    %v337 = vmul.f32 %v330, %v335
    %339 = vrot.lane.b32.xlu0 %v331, 32
    %v340 = vpop.permute.xlu0 %339
    %v342 = vmul.f32 %v330, %v340
    %344 = vrot.lane.b32.xlu0 %v342, 32
    %v345 = vpop.permute.xlu0 %344
    %v347 = vadd.f32 %v337, %v345
    %v348 = vtanh.pop %v347
    %350 = vrot.lane.b32.xlu0 %v348, 32
    %v351 = vpop.permute.xlu0 %350
    %v353 = vmul.f32 %v330, %v351
    %355 = vrot.lane.b32.xlu0 %v347, 96
    %v356 = vpop.permute.xlu0 %355
    %358 = vst.msk [vmem:[#allocation4] sm:$0xff] %vm147, %v356
    %360 = vrot.lane.b32.xlu0 %v353, 64
    %v361 = vpop.permute.xlu0 %360
    %363 = vst.msk [vmem:[#allocation3] sm:$0xff] %vm147, %v361
    %v364 = vpack.c.bf16 %v353, %v353
    %v366 = vunpack.c.l.b16 %v364
    %v367 = vpack.c.b16 %v366, %v366
    %368 = vrot.lane.b32.xlu0 %v367, 64
    %v369 = vpop.permute.xlu0 %368
    %s371 = scalar_lea.vmem [#allocation5], 4
    %372 = vst.msk [vmem:[%s371] sm:$0xf] %vm259, %v369
    %s373 = scalar_lea.vmem [#allocation2], 16
    %v374 = vld [vmem:[%s373] sm:$0xff]
    %v375 = vld [vmem:[#allocation3] sm:$0xff]
    %v376 = vpack.c.bf16 %v375, %v375
    %v377 = vld [vmem:[%s2] sm:$0xf]
    %v378 = vld [vmem:[%s2 + $0x4] sm:$0xf]
    %v379 = vld [vmem:[%s2 + $0x8] sm:$0xf]
    %v380 = vld [vmem:[%s2 + $0xc] sm:$0xf]
    %v385 = vunpack.c.l.b16 %v377
    %v386 = vunpack.c.l.b16 %v378
    %v387 = vunpack.c.l.b16 %v379
    %v388 = vunpack.c.l.b16 %v380
    %v389 = vpack.c.b16 %v386, %v385
    %v390 = vpack.c.b16 %v388, %v387
    %v394 = vsel %vm147, %v376, 0
    %396 = vmatprep.subr.bf16.mxu0 0
    %397 = vmatpush1.bf16.msra.mxu0 0
    %398 = vmatprep.subr.bf16.mxu0 0
    %399 = vmatpush1.bf16.msra.mxu0 0
    %400 = vmatprep.subr.bf16.mxu0 0
    %401 = vmatpush1.bf16.msra.mxu0 0
    %402 = vmatprep.subr.bf16.mxu0 0
    %403 = vmatpush1.bf16.msra.mxu0 0
    %404 = vmatprep.subr.bf16.mxu0 0
    %405 = vmatpush1.bf16.msra.mxu0 0
    %406 = vmatprep.subr.bf16.mxu0 0
    %407 = vmatpush1.bf16.msra.mxu0 0
    %408 = vmatprep.subr.bf16.mxu0 0
    %409 = vmatpush1.bf16.msra.mxu0 %v390
    %410 = vmatprep.subr.bf16.mxu0 0
    %411 = vmatpush1.bf16.msra.mxu0 %v389
    %412 = vmatprep.subr.bf16.mxu0 0
    %413 = vmatpush2.bf16.msra.mxu0 0
    %414 = vmatprep.subr.bf16.mxu0 0
    %415 = vmatpush2.bf16.msra.mxu0 0
    %416 = vmatprep.subr.bf16.mxu0 0
    %417 = vmatpush2.bf16.msra.mxu0 0
    %418 = vmatprep.subr.bf16.mxu0 0
    %419 = vmatpush2.bf16.msra.mxu0 0
    %420 = vmatprep.subr.bf16.mxu0 0
    %421 = vmatpush2.bf16.msra.mxu0 0
    %422 = vmatprep.subr.bf16.mxu0 0
    %423 = vmatpush2.bf16.msra.mxu0 0
    %424 = vmatprep.subr.bf16.mxu0 0
    %425 = vmatpush2.bf16.msra.mxu0 0
    %426 = vmatprep.subr.bf16.mxu0 0
    %427 = vmatpush2.bf16.msra.mxu0 0
    %428 = vmatprep.mubr.bf16.mxu0 0
    %429 = vmatmul.mubr.bf16.gmra.mxu0 %v394
    %v430 = vpop.f32.mrf.mxu0
    %v431 = vadd.f32 0.0, %v430
    %v432 = vpop.f32.mrf.mxu0
    %v433 = vpop.f32.mrf.mxu0
    %v434 = vpop.f32.mrf.mxu0
    %435 = vdwg.mxu0
    %v436 = vadd.f32 %v374, %v431
    %v437 = vxor.u32 %v436, 2147483648
    %v438 = vmul.f32 %v437, 1.442695
    %v439 = vpow.pop %v438
    %v440 = vadd.f32 %v439, 1.0
    %v441 = vrcp.pop %v440
    %v442 = vmul.f32 1.0, %v441
    %v443 = vtanh.pop %v436
    %v444 = vld [vmem:[#allocation4] sm:$0xff]
    %446 = vrot.lane.b32.xlu0 %v444, 32
    %v447 = vpop.permute.xlu0 %446
    %v449 = vmul.f32 %v442, %v447
    %451 = vrot.lane.b32.xlu0 %v443, 32
    %v452 = vpop.permute.xlu0 %451
    %v454 = vmul.f32 %v442, %v452
    %456 = vrot.lane.b32.xlu0 %v454, 32
    %v457 = vpop.permute.xlu0 %456
    %v459 = vadd.f32 %v449, %v457
    %v460 = vtanh.pop %v459
    %462 = vrot.lane.b32.xlu0 %v460, 32
    %v463 = vpop.permute.xlu0 %462
    %v465 = vmul.f32 %v442, %v463
    %467 = vrot.lane.b32.xlu0 %v459, 96
    %v468 = vpop.permute.xlu0 %467
    %470 = vst.msk [vmem:[#allocation4] sm:$0xff] %vm147, %v468
    %472 = vrot.lane.b32.xlu0 %v465, 64
    %v473 = vpop.permute.xlu0 %472
    %475 = vst.msk [vmem:[#allocation3] sm:$0xff] %vm147, %v473
    %v476 = vpack.c.bf16 %v465, %v465
    %v478 = vunpack.c.l.b16 %v476
    %v479 = vpack.c.b16 %v478, %v478
    %480 = vrot.lane.b32.xlu0 %v479, 64
    %v481 = vpop.permute.xlu0 %480
    %s483 = scalar_lea.vmem [#allocation5], 8
    %484 = vst.msk [vmem:[%s483] sm:$0xf] %vm259, %v481
    %s485 = scalar_lea.vmem [#allocation2], 24
    %v486 = vld [vmem:[%s485] sm:$0xff]
    %v487 = vld [vmem:[#allocation3] sm:$0xff]
    %v488 = vpack.c.bf16 %v487, %v487
    %v489 = vld [vmem:[%s2] sm:$0xf]
    %v490 = vld [vmem:[%s2 + $0x4] sm:$0xf]
    %v491 = vld [vmem:[%s2 + $0x8] sm:$0xf]
    %v492 = vld [vmem:[%s2 + $0xc] sm:$0xf]
    %v497 = vunpack.c.l.b16 %v489
    %v498 = vunpack.c.l.b16 %v490
    %v499 = vunpack.c.l.b16 %v491
    %v500 = vunpack.c.l.b16 %v492
    %v501 = vpack.c.b16 %v498, %v497
    %v502 = vpack.c.b16 %v500, %v499
    %v506 = vsel %vm147, %v488, 0
    %508 = vmatprep.subr.bf16.mxu0 0
    %509 = vmatpush1.bf16.msra.mxu0 0
    %510 = vmatprep.subr.bf16.mxu0 0
    %511 = vmatpush1.bf16.msra.mxu0 0
    %512 = vmatprep.subr.bf16.mxu0 0
    %513 = vmatpush1.bf16.msra.mxu0 0
    %514 = vmatprep.subr.bf16.mxu0 0
    %515 = vmatpush1.bf16.msra.mxu0 0
    %516 = vmatprep.subr.bf16.mxu0 0
    %517 = vmatpush1.bf16.msra.mxu0 0
    %518 = vmatprep.subr.bf16.mxu0 0
    %519 = vmatpush1.bf16.msra.mxu0 0
    %520 = vmatprep.subr.bf16.mxu0 0
    %521 = vmatpush1.bf16.msra.mxu0 %v502
    %522 = vmatprep.subr.bf16.mxu0 0
    %523 = vmatpush1.bf16.msra.mxu0 %v501
    %524 = vmatprep.subr.bf16.mxu0 0
    %525 = vmatpush2.bf16.msra.mxu0 0
    %526 = vmatprep.subr.bf16.mxu0 0
    %527 = vmatpush2.bf16.msra.mxu0 0
    %528 = vmatprep.subr.bf16.mxu0 0
    %529 = vmatpush2.bf16.msra.mxu0 0
    %530 = vmatprep.subr.bf16.mxu0 0
    %531 = vmatpush2.bf16.msra.mxu0 0
    %532 = vmatprep.subr.bf16.mxu0 0
    %533 = vmatpush2.bf16.msra.mxu0 0
    %534 = vmatprep.subr.bf16.mxu0 0
    %535 = vmatpush2.bf16.msra.mxu0 0
    %536 = vmatprep.subr.bf16.mxu0 0
    %537 = vmatpush2.bf16.msra.mxu0 0
    %538 = vmatprep.subr.bf16.mxu0 0
    %539 = vmatpush2.bf16.msra.mxu0 0
    %540 = vmatprep.mubr.bf16.mxu0 0
    %541 = vmatmul.mubr.bf16.gmra.mxu0 %v506
    %v542 = vpop.f32.mrf.mxu0
    %v543 = vadd.f32 0.0, %v542
    %v544 = vpop.f32.mrf.mxu0
    %v545 = vpop.f32.mrf.mxu0
    %v546 = vpop.f32.mrf.mxu0
    %547 = vdwg.mxu0
    %v548 = vadd.f32 %v486, %v543
    %v549 = vxor.u32 %v548, 2147483648
    %v550 = vmul.f32 %v549, 1.442695
    %v551 = vpow.pop %v550
    %v552 = vadd.f32 %v551, 1.0
    %v553 = vrcp.pop %v552
    %v554 = vmul.f32 1.0, %v553
    %v555 = vtanh.pop %v548
    %v556 = vld [vmem:[#allocation4] sm:$0xff]
    %558 = vrot.lane.b32.xlu0 %v556, 32
    %v559 = vpop.permute.xlu0 %558
    %v561 = vmul.f32 %v554, %v559
    %563 = vrot.lane.b32.xlu0 %v555, 32
    %v564 = vpop.permute.xlu0 %563
    %v566 = vmul.f32 %v554, %v564
    %568 = vrot.lane.b32.xlu0 %v566, 32
    %v569 = vpop.permute.xlu0 %568
    %v571 = vadd.f32 %v561, %v569
    %v572 = vtanh.pop %v571
    %574 = vrot.lane.b32.xlu0 %v572, 32
    %v575 = vpop.permute.xlu0 %574
    %v577 = vmul.f32 %v554, %v575
    %579 = vrot.lane.b32.xlu0 %v571, 96
    %v580 = vpop.permute.xlu0 %579
    %582 = vst.msk [vmem:[#allocation4] sm:$0xff] %vm147, %v580
    %584 = vrot.lane.b32.xlu0 %v577, 64
    %v585 = vpop.permute.xlu0 %584
    %587 = vst.msk [vmem:[#allocation3] sm:$0xff] %vm147, %v585
    %v588 = vpack.c.bf16 %v577, %v577
    %v590 = vunpack.c.l.b16 %v588
    %v591 = vpack.c.b16 %v590, %v590
    %592 = vrot.lane.b32.xlu0 %v591, 64
    %v593 = vpop.permute.xlu0 %592
    %s595 = scalar_lea.vmem [#allocation5], 12
    %596 = vst.msk [vmem:[%s595] sm:$0xf] %vm259, %v593
    %s597 = scalar_lea.vmem [#allocation2], 32
    %v598 = vld [vmem:[%s597] sm:$0xff]
    %v599 = vld [vmem:[#allocation3] sm:$0xff]
    %v600 = vpack.c.bf16 %v599, %v599
    %v601 = vld [vmem:[%s2] sm:$0xf]
    %v602 = vld [vmem:[%s2 + $0x4] sm:$0xf]
    %v603 = vld [vmem:[%s2 + $0x8] sm:$0xf]
    %v604 = vld [vmem:[%s2 + $0xc] sm:$0xf]
    %v609 = vunpack.c.l.b16 %v601
    %v610 = vunpack.c.l.b16 %v602
    %v611 = vunpack.c.l.b16 %v603
    %v612 = vunpack.c.l.b16 %v604
    %v613 = vpack.c.b16 %v610, %v609
    %v614 = vpack.c.b16 %v612, %v611
    %v618 = vsel %vm147, %v600, 0
    %620 = vmatprep.subr.bf16.mxu0 0
    %621 = vmatpush1.bf16.msra.mxu0 0
    %622 = vmatprep.subr.bf16.mxu0 0
    %623 = vmatpush1.bf16.msra.mxu0 0
    %624 = vmatprep.subr.bf16.mxu0 0
    %625 = vmatpush1.bf16.msra.mxu0 0
    %626 = vmatprep.subr.bf16.mxu0 0
    %627 = vmatpush1.bf16.msra.mxu0 0
    %628 = vmatprep.subr.bf16.mxu0 0
    %629 = vmatpush1.bf16.msra.mxu0 0
    %630 = vmatprep.subr.bf16.mxu0 0
    %631 = vmatpush1.bf16.msra.mxu0 0
    %632 = vmatprep.subr.bf16.mxu0 0
    %633 = vmatpush1.bf16.msra.mxu0 %v614
    %634 = vmatprep.subr.bf16.mxu0 0
    %635 = vmatpush1.bf16.msra.mxu0 %v613
    %636 = vmatprep.subr.bf16.mxu0 0
    %637 = vmatpush2.bf16.msra.mxu0 0
    %638 = vmatprep.subr.bf16.mxu0 0
    %639 = vmatpush2.bf16.msra.mxu0 0
    %640 = vmatprep.subr.bf16.mxu0 0
    %641 = vmatpush2.bf16.msra.mxu0 0
    %642 = vmatprep.subr.bf16.mxu0 0
    %643 = vmatpush2.bf16.msra.mxu0 0
    %644 = vmatprep.subr.bf16.mxu0 0
    %645 = vmatpush2.bf16.msra.mxu0 0
    %646 = vmatprep.subr.bf16.mxu0 0
    %647 = vmatpush2.bf16.msra.mxu0 0
    %648 = vmatprep.subr.bf16.mxu0 0
    %649 = vmatpush2.bf16.msra.mxu0 0
    %650 = vmatprep.subr.bf16.mxu0 0
    %651 = vmatpush2.bf16.msra.mxu0 0
    %652 = vmatprep.mubr.bf16.mxu0 0
    %653 = vmatmul.mubr.bf16.gmra.mxu0 %v618
    %v654 = vpop.f32.mrf.mxu0
    %v655 = vadd.f32 0.0, %v654
    %v656 = vpop.f32.mrf.mxu0
    %v657 = vpop.f32.mrf.mxu0
    %v658 = vpop.f32.mrf.mxu0
    %659 = vdwg.mxu0
    %v660 = vadd.f32 %v598, %v655
    %v661 = vxor.u32 %v660, 2147483648
    %v662 = vmul.f32 %v661, 1.442695
    %v663 = vpow.pop %v662
    %v664 = vadd.f32 %v663, 1.0
    %v665 = vrcp.pop %v664
    %v666 = vmul.f32 1.0, %v665
    %v667 = vtanh.pop %v660
    %v668 = vld [vmem:[#allocation4] sm:$0xff]
    %670 = vrot.lane.b32.xlu0 %v668, 32
    %v671 = vpop.permute.xlu0 %670
    %v673 = vmul.f32 %v666, %v671
    %675 = vrot.lane.b32.xlu0 %v667, 32
    %v676 = vpop.permute.xlu0 %675
    %v678 = vmul.f32 %v666, %v676
    %680 = vrot.lane.b32.xlu0 %v678, 32
    %v681 = vpop.permute.xlu0 %680
    %v683 = vadd.f32 %v673, %v681
    %v684 = vtanh.pop %v683
    %686 = vrot.lane.b32.xlu0 %v684, 32
    %v687 = vpop.permute.xlu0 %686
    %v689 = vmul.f32 %v666, %v687
    %691 = vrot.lane.b32.xlu0 %v683, 96
    %v692 = vpop.permute.xlu0 %691
    %694 = vst.msk [vmem:[#allocation4] sm:$0xff] %vm147, %v692
    %696 = vrot.lane.b32.xlu0 %v689, 64
    %v697 = vpop.permute.xlu0 %696
    %699 = vst.msk [vmem:[#allocation3] sm:$0xff] %vm147, %v697
    %v700 = vpack.c.bf16 %v689, %v689
    %v702 = vunpack.c.l.b16 %v700
    %v703 = vpack.c.b16 %v702, %v702
    %704 = vrot.lane.b32.xlu0 %v703, 64
    %v705 = vpop.permute.xlu0 %704
    %s707 = scalar_lea.vmem [#allocation5], 16
    %708 = vst.msk [vmem:[%s707] sm:$0xf] %vm259, %v705
    %s709 = scalar_lea.vmem [#allocation2], 40
    %v710 = vld [vmem:[%s709] sm:$0xff]
    %v711 = vld [vmem:[#allocation3] sm:$0xff]
    %v712 = vpack.c.bf16 %v711, %v711
    %v713 = vld [vmem:[%s2] sm:$0xf]
    %v714 = vld [vmem:[%s2 + $0x4] sm:$0xf]
    %v715 = vld [vmem:[%s2 + $0x8] sm:$0xf]
    %v716 = vld [vmem:[%s2 + $0xc] sm:$0xf]
    %v721 = vunpack.c.l.b16 %v713
    %v722 = vunpack.c.l.b16 %v714
    %v723 = vunpack.c.l.b16 %v715
    %v724 = vunpack.c.l.b16 %v716
    %v725 = vpack.c.b16 %v722, %v721
    %v726 = vpack.c.b16 %v724, %v723
    %v730 = vsel %vm147, %v712, 0
    %732 = vmatprep.subr.bf16.mxu0 0
    %733 = vmatpush1.bf16.msra.mxu0 0
    %734 = vmatprep.subr.bf16.mxu0 0
    %735 = vmatpush1.bf16.msra.mxu0 0
    %736 = vmatprep.subr.bf16.mxu0 0
    %737 = vmatpush1.bf16.msra.mxu0 0
    %738 = vmatprep.subr.bf16.mxu0 0
    %739 = vmatpush1.bf16.msra.mxu0 0
    %740 = vmatprep.subr.bf16.mxu0 0
    %741 = vmatpush1.bf16.msra.mxu0 0
    %742 = vmatprep.subr.bf16.mxu0 0
    %743 = vmatpush1.bf16.msra.mxu0 0
    %744 = vmatprep.subr.bf16.mxu0 0
    %745 = vmatpush1.bf16.msra.mxu0 %v726
    %746 = vmatprep.subr.bf16.mxu0 0
    %747 = vmatpush1.bf16.msra.mxu0 %v725
    %748 = vmatprep.subr.bf16.mxu0 0
    %749 = vmatpush2.bf16.msra.mxu0 0
    %750 = vmatprep.subr.bf16.mxu0 0
    %751 = vmatpush2.bf16.msra.mxu0 0
    %752 = vmatprep.subr.bf16.mxu0 0
    %753 = vmatpush2.bf16.msra.mxu0 0
    %754 = vmatprep.subr.bf16.mxu0 0
    %755 = vmatpush2.bf16.msra.mxu0 0
    %756 = vmatprep.subr.bf16.mxu0 0
    %757 = vmatpush2.bf16.msra.mxu0 0
    %758 = vmatprep.subr.bf16.mxu0 0
    %759 = vmatpush2.bf16.msra.mxu0 0
    %760 = vmatprep.subr.bf16.mxu0 0
    %761 = vmatpush2.bf16.msra.mxu0 0
    %762 = vmatprep.subr.bf16.mxu0 0
    %763 = vmatpush2.bf16.msra.mxu0 0
    %764 = vmatprep.mubr.bf16.mxu0 0
    %765 = vmatmul.mubr.bf16.gmra.mxu0 %v730
    %v766 = vpop.f32.mrf.mxu0
    %v767 = vadd.f32 0.0, %v766
    %v768 = vpop.f32.mrf.mxu0
    %v769 = vpop.f32.mrf.mxu0
    %v770 = vpop.f32.mrf.mxu0
    %771 = vdwg.mxu0
    %v772 = vadd.f32 %v710, %v767
    %v773 = vxor.u32 %v772, 2147483648
    %v774 = vmul.f32 %v773, 1.442695
    %v775 = vpow.pop %v774
    %v776 = vadd.f32 %v775, 1.0
    %v777 = vrcp.pop %v776
    %v778 = vmul.f32 1.0, %v777
    %v779 = vtanh.pop %v772
    %v780 = vld [vmem:[#allocation4] sm:$0xff]
    %782 = vrot.lane.b32.xlu0 %v780, 32
    %v783 = vpop.permute.xlu0 %782
    %v785 = vmul.f32 %v778, %v783
    %787 = vrot.lane.b32.xlu0 %v779, 32
    %v788 = vpop.permute.xlu0 %787
    %v790 = vmul.f32 %v778, %v788
    %792 = vrot.lane.b32.xlu0 %v790, 32
    %v793 = vpop.permute.xlu0 %792
    %v795 = vadd.f32 %v785, %v793
    %v796 = vtanh.pop %v795
    %798 = vrot.lane.b32.xlu0 %v796, 32
    %v799 = vpop.permute.xlu0 %798
    %v801 = vmul.f32 %v778, %v799
    %803 = vrot.lane.b32.xlu0 %v795, 96
    %v804 = vpop.permute.xlu0 %803
    %806 = vst.msk [vmem:[#allocation4] sm:$0xff] %vm147, %v804
    %808 = vrot.lane.b32.xlu0 %v801, 64
    %v809 = vpop.permute.xlu0 %808
    %811 = vst.msk [vmem:[#allocation3] sm:$0xff] %vm147, %v809
    %v812 = vpack.c.bf16 %v801, %v801
    %v814 = vunpack.c.l.b16 %v812
    %v815 = vpack.c.b16 %v814, %v814
    %816 = vrot.lane.b32.xlu0 %v815, 64
    %v817 = vpop.permute.xlu0 %816
    %s819 = scalar_lea.vmem [#allocation5], 20
    %820 = vst.msk [vmem:[%s819] sm:$0xf] %vm259, %v817
    %s821 = scalar_lea.vmem [#allocation2], 48
    %v822 = vld [vmem:[%s821] sm:$0xff]
    %v823 = vld [vmem:[#allocation3] sm:$0xff]
    %v824 = vpack.c.bf16 %v823, %v823
    %v825 = vld [vmem:[%s2] sm:$0xf]
    %v826 = vld [vmem:[%s2 + $0x4] sm:$0xf]
    %v827 = vld [vmem:[%s2 + $0x8] sm:$0xf]
    %v828 = vld [vmem:[%s2 + $0xc] sm:$0xf]
    %v833 = vunpack.c.l.b16 %v825
    %v834 = vunpack.c.l.b16 %v826
    %v835 = vunpack.c.l.b16 %v827
    %v836 = vunpack.c.l.b16 %v828
    %v837 = vpack.c.b16 %v834, %v833
    %v838 = vpack.c.b16 %v836, %v835
    %v842 = vsel %vm147, %v824, 0
    %844 = vmatprep.subr.bf16.mxu0 0
    %845 = vmatpush1.bf16.msra.mxu0 0
    %846 = vmatprep.subr.bf16.mxu0 0
    %847 = vmatpush1.bf16.msra.mxu0 0
    %848 = vmatprep.subr.bf16.mxu0 0
    %849 = vmatpush1.bf16.msra.mxu0 0
    %850 = vmatprep.subr.bf16.mxu0 0
    %851 = vmatpush1.bf16.msra.mxu0 0
    %852 = vmatprep.subr.bf16.mxu0 0
    %853 = vmatpush1.bf16.msra.mxu0 0
    %854 = vmatprep.subr.bf16.mxu0 0
    %855 = vmatpush1.bf16.msra.mxu0 0
    %856 = vmatprep.subr.bf16.mxu0 0
    %857 = vmatpush1.bf16.msra.mxu0 %v838
    %858 = vmatprep.subr.bf16.mxu0 0
    %859 = vmatpush1.bf16.msra.mxu0 %v837
    %860 = vmatprep.subr.bf16.mxu0 0
    %861 = vmatpush2.bf16.msra.mxu0 0
    %862 = vmatprep.subr.bf16.mxu0 0
    %863 = vmatpush2.bf16.msra.mxu0 0
    %864 = vmatprep.subr.bf16.mxu0 0
    %865 = vmatpush2.bf16.msra.mxu0 0
    %866 = vmatprep.subr.bf16.mxu0 0
    %867 = vmatpush2.bf16.msra.mxu0 0
    %868 = vmatprep.subr.bf16.mxu0 0
    %869 = vmatpush2.bf16.msra.mxu0 0
    %870 = vmatprep.subr.bf16.mxu0 0
    %871 = vmatpush2.bf16.msra.mxu0 0
    %872 = vmatprep.subr.bf16.mxu0 0
    %873 = vmatpush2.bf16.msra.mxu0 0
    %874 = vmatprep.subr.bf16.mxu0 0
    %875 = vmatpush2.bf16.msra.mxu0 0
    %876 = vmatprep.mubr.bf16.mxu0 0
    %877 = vmatmul.mubr.bf16.gmra.mxu0 %v842
    %v878 = vpop.f32.mrf.mxu0
    %v879 = vadd.f32 0.0, %v878
    %v880 = vpop.f32.mrf.mxu0
    %v881 = vpop.f32.mrf.mxu0
    %v882 = vpop.f32.mrf.mxu0
    %883 = vdwg.mxu0
    %v884 = vadd.f32 %v822, %v879
    %v885 = vxor.u32 %v884, 2147483648
    %v886 = vmul.f32 %v885, 1.442695
    %v887 = vpow.pop %v886
    %v888 = vadd.f32 %v887, 1.0
    %v889 = vrcp.pop %v888
    %v890 = vmul.f32 1.0, %v889
    %v891 = vtanh.pop %v884
    %v892 = vld [vmem:[#allocation4] sm:$0xff]
    %894 = vrot.lane.b32.xlu0 %v892, 32
    %v895 = vpop.permute.xlu0 %894
    %v897 = vmul.f32 %v890, %v895
    %899 = vrot.lane.b32.xlu0 %v891, 32
    %v900 = vpop.permute.xlu0 %899
    %v902 = vmul.f32 %v890, %v900
    %904 = vrot.lane.b32.xlu0 %v902, 32
    %v905 = vpop.permute.xlu0 %904
    %v907 = vadd.f32 %v897, %v905
    %v908 = vtanh.pop %v907
    %910 = vrot.lane.b32.xlu0 %v908, 32
    %v911 = vpop.permute.xlu0 %910
    %v913 = vmul.f32 %v890, %v911
    %915 = vrot.lane.b32.xlu0 %v907, 96
    %v916 = vpop.permute.xlu0 %915
    %918 = vst.msk [vmem:[#allocation4] sm:$0xff] %vm147, %v916
    %920 = vrot.lane.b32.xlu0 %v913, 64
    %v921 = vpop.permute.xlu0 %920
    %923 = vst.msk [vmem:[#allocation3] sm:$0xff] %vm147, %v921
    %v924 = vpack.c.bf16 %v913, %v913
    %v926 = vunpack.c.l.b16 %v924
    %v927 = vpack.c.b16 %v926, %v926
    %928 = vrot.lane.b32.xlu0 %v927, 64
    %v929 = vpop.permute.xlu0 %928
    %s931 = scalar_lea.vmem [#allocation5], 24
    %932 = vst.msk [vmem:[%s931] sm:$0xf] %vm259, %v929
    %s933 = scalar_lea.vmem [#allocation2], 56
    %v934 = vld [vmem:[%s933] sm:$0xff]
    %v935 = vld [vmem:[#allocation3] sm:$0xff]
    %v936 = vpack.c.bf16 %v935, %v935
    %v937 = vld [vmem:[%s2] sm:$0xf]
    %v938 = vld [vmem:[%s2 + $0x4] sm:$0xf]
    %v939 = vld [vmem:[%s2 + $0x8] sm:$0xf]
    %v940 = vld [vmem:[%s2 + $0xc] sm:$0xf]
    %v945 = vunpack.c.l.b16 %v937
    %v946 = vunpack.c.l.b16 %v938
    %v947 = vunpack.c.l.b16 %v939
    %v948 = vunpack.c.l.b16 %v940
    %v949 = vpack.c.b16 %v946, %v945
    %v950 = vpack.c.b16 %v948, %v947
    %v954 = vsel %vm147, %v936, 0
    %956 = vmatprep.subr.bf16.mxu0 0
    %957 = vmatpush1.bf16.msra.mxu0 0
    %958 = vmatprep.subr.bf16.mxu0 0
    %959 = vmatpush1.bf16.msra.mxu0 0
    %960 = vmatprep.subr.bf16.mxu0 0
    %961 = vmatpush1.bf16.msra.mxu0 0
    %962 = vmatprep.subr.bf16.mxu0 0
    %963 = vmatpush1.bf16.msra.mxu0 0
    %964 = vmatprep.subr.bf16.mxu0 0
    %965 = vmatpush1.bf16.msra.mxu0 0
    %966 = vmatprep.subr.bf16.mxu0 0
    %967 = vmatpush1.bf16.msra.mxu0 0
    %968 = vmatprep.subr.bf16.mxu0 0
    %969 = vmatpush1.bf16.msra.mxu0 %v950
    %970 = vmatprep.subr.bf16.mxu0 0
    %971 = vmatpush1.bf16.msra.mxu0 %v949
    %972 = vmatprep.subr.bf16.mxu0 0
    %973 = vmatpush2.bf16.msra.mxu0 0
    %974 = vmatprep.subr.bf16.mxu0 0
    %975 = vmatpush2.bf16.msra.mxu0 0
    %976 = vmatprep.subr.bf16.mxu0 0
    %977 = vmatpush2.bf16.msra.mxu0 0
    %978 = vmatprep.subr.bf16.mxu0 0
    %979 = vmatpush2.bf16.msra.mxu0 0
    %980 = vmatprep.subr.bf16.mxu0 0
    %981 = vmatpush2.bf16.msra.mxu0 0
    %982 = vmatprep.subr.bf16.mxu0 0
    %983 = vmatpush2.bf16.msra.mxu0 0
    %984 = vmatprep.subr.bf16.mxu0 0
    %985 = vmatpush2.bf16.msra.mxu0 0
    %986 = vmatprep.subr.bf16.mxu0 0
    %987 = vmatpush2.bf16.msra.mxu0 0
    %988 = vmatprep.mubr.bf16.mxu0 0
    %989 = vmatmul.mubr.bf16.gmra.mxu0 %v954
    %v990 = vpop.f32.mrf.mxu0
    %v991 = vadd.f32 0.0, %v990
    %v992 = vpop.f32.mrf.mxu0
    %v993 = vpop.f32.mrf.mxu0
    %v994 = vpop.f32.mrf.mxu0
    %995 = vdwg.mxu0
    %v996 = vadd.f32 %v934, %v991
    %v997 = vxor.u32 %v996, 2147483648
    %v998 = vmul.f32 %v997, 1.442695
    %v999 = vpow.pop %v998
    %v1000 = vadd.f32 %v999, 1.0
    %v1001 = vrcp.pop %v1000
    %v1002 = vmul.f32 1.0, %v1001
    %v1003 = vtanh.pop %v996
    %v1004 = vld [vmem:[#allocation4] sm:$0xff]
    %1006 = vrot.lane.b32.xlu0 %v1004, 32
    %v1007 = vpop.permute.xlu0 %1006
    %v1009 = vmul.f32 %v1002, %v1007
    %1011 = vrot.lane.b32.xlu0 %v1003, 32
    %v1012 = vpop.permute.xlu0 %1011
    %v1014 = vmul.f32 %v1002, %v1012
    %1016 = vrot.lane.b32.xlu0 %v1014, 32
    %v1017 = vpop.permute.xlu0 %1016
    %v1019 = vadd.f32 %v1009, %v1017
    %v1020 = vtanh.pop %v1019
    %1022 = vrot.lane.b32.xlu0 %v1020, 32
    %v1023 = vpop.permute.xlu0 %1022
    %v1025 = vmul.f32 %v1002, %v1023
    %1027 = vrot.lane.b32.xlu0 %v1019, 96
    %v1028 = vpop.permute.xlu0 %1027
    %1030 = vst.msk [vmem:[#allocation4] sm:$0xff] %vm147, %v1028
    %1032 = vrot.lane.b32.xlu0 %v1025, 64
    %v1033 = vpop.permute.xlu0 %1032
    %1035 = vst.msk [vmem:[#allocation3] sm:$0xff] %vm147, %v1033
    %v1036 = vpack.c.bf16 %v1025, %v1025
    %v1038 = vunpack.c.l.b16 %v1036
    %v1039 = vpack.c.b16 %v1038, %v1038
    %1040 = vrot.lane.b32.xlu0 %v1039, 64
    %v1041 = vpop.permute.xlu0 %1040
    %s1043 = scalar_lea.vmem [#allocation5], 28
    %1044 = vst.msk [vmem:[%s1043] sm:$0xf] %vm259, %v1041
    %v1045 = vld [vmem:[#allocation5] sm:$0xf]
    %v1046 = vld [vmem:[#allocation5 + $0x4] sm:$0xf]
    %v1047 = vld [vmem:[#allocation5 + $0x8] sm:$0xf]
    %v1048 = vld [vmem:[#allocation5 + $0xc] sm:$0xf]
    %v1049 = vld [vmem:[#allocation5 + $0x10] sm:$0xf]
    %v1050 = vld [vmem:[#allocation5 + $0x14] sm:$0xf]
    %v1051 = vld [vmem:[#allocation5 + $0x18] sm:$0xf]
    %v1052 = vld [vmem:[#allocation5 + $0x1c] sm:$0xf]
    %v1053 = vld [vmem:[%s4] sm:$0xf]
    %v1054 = vld [vmem:[%s4 + $0x4] sm:$0xf]
    %v1055 = vld [vmem:[%s4 + $0x8] sm:$0xf]
    %v1056 = vld [vmem:[%s4 + $0xc] sm:$0xf]
    %v1057 = vld [vmem:[%s6] sm:$0x1]
    %v1059 = vlaneseq
    %v1060 = vshrl.u32 %v1059, 7
    %v1061 = vsub.s32 0, %v1060
    %v1062 = vrot.slane %v1057, %v1061
    %v1072 = vunpack.c.l.b16 %v1045
    %v1073 = vunpack.c.l.b16 %v1046
    %v1074 = vunpack.c.l.b16 %v1047
    %v1075 = vunpack.c.l.b16 %v1048
    %v1076 = vunpack.c.l.b16 %v1049
    %v1077 = vunpack.c.l.b16 %v1050
    %v1078 = vunpack.c.l.b16 %v1051
    %v1079 = vunpack.c.l.b16 %v1052
    %v1080 = vpack.c.b16 %v1073, %v1072
    %v1081 = vpack.c.b16 %v1075, %v1074
    %v1082 = vpack.c.b16 %v1077, %v1076
    %v1083 = vpack.c.b16 %v1079, %v1078
    %v1088 = vunpack.c.l.b16 %v1053
    %v1089 = vunpack.c.l.b16 %v1054
    %v1090 = vunpack.c.l.b16 %v1055
    %v1091 = vunpack.c.l.b16 %v1056
    %v1092 = vpack.c.b16 %v1089, %v1088
    %v1093 = vpack.c.b16 %v1091, %v1090
    %v1097 = vsel %vm147, %v1080, 0
    %v1100 = vsel %vm147, %v1081, 0
    %v1103 = vsel %vm147, %v1082, 0
    %v1106 = vsel %vm147, %v1083, 0
    %1108 = vmatprep.subr.bf16.mxu0 0
    %1109 = vmatpush1.bf16.msra.mxu0 0
    %1110 = vmatprep.subr.bf16.mxu0 0
    %1111 = vmatpush1.bf16.msra.mxu0 0
    %1112 = vmatprep.subr.bf16.mxu0 0
    %1113 = vmatpush1.bf16.msra.mxu0 0
    %1114 = vmatprep.subr.bf16.mxu0 0
    %1115 = vmatpush1.bf16.msra.mxu0 0
    %1116 = vmatprep.subr.bf16.mxu0 0
    %1117 = vmatpush1.bf16.msra.mxu0 0
    %1118 = vmatprep.subr.bf16.mxu0 0
    %1119 = vmatpush1.bf16.msra.mxu0 0
    %1120 = vmatprep.subr.bf16.mxu0 0
    %1121 = vmatpush1.bf16.msra.mxu0 %v1093
    %1122 = vmatprep.subr.bf16.mxu0 0
    %1123 = vmatpush1.bf16.msra.mxu0 %v1092
    %1124 = vmatprep.subr.bf16.mxu0 0
    %1125 = vmatpush2.bf16.msra.mxu0 0
    %1126 = vmatprep.subr.bf16.mxu0 0
    %1127 = vmatpush2.bf16.msra.mxu0 0
    %1128 = vmatprep.subr.bf16.mxu0 0
    %1129 = vmatpush2.bf16.msra.mxu0 0
    %1130 = vmatprep.subr.bf16.mxu0 0
    %1131 = vmatpush2.bf16.msra.mxu0 0
    %1132 = vmatprep.subr.bf16.mxu0 0
    %1133 = vmatpush2.bf16.msra.mxu0 0
    %1134 = vmatprep.subr.bf16.mxu0 0
    %1135 = vmatpush2.bf16.msra.mxu0 0
    %1136 = vmatprep.subr.bf16.mxu0 0
    %1137 = vmatpush2.bf16.msra.mxu0 0
    %1138 = vmatprep.subr.bf16.mxu0 0
    %1139 = vmatpush2.bf16.msra.mxu0 0
    %1140 = vmatprep.mubr.bf16.mxu0 0
    %1141 = vmatmul.mubr.bf16.gmra.mxu0 %v1097
    %v1142 = vpop.f32.mrf.mxu0
    %v1143 = vadd.f32 %v1062, %v1142
    %v1144 = vpop.f32.mrf.mxu0
    %v1145 = vpop.f32.mrf.mxu0
    %v1146 = vadd.f32 %v1062, %v1145
    %v1147 = vpop.f32.mrf.mxu0
    %1148 = vmatprep.mubr.bf16.mxu0 0
    %1149 = vmatmul.mubr.bf16.gmra.mxu0 %v1100
    %v1150 = vpop.f32.mrf.mxu0
    %v1151 = vadd.f32 %v1062, %v1150
    %v1152 = vpop.f32.mrf.mxu0
    %v1153 = vpop.f32.mrf.mxu0
    %v1154 = vadd.f32 %v1062, %v1153
    %v1155 = vpop.f32.mrf.mxu0
    %1156 = vmatprep.mubr.bf16.mxu0 0
    %1157 = vmatmul.mubr.bf16.gmra.mxu0 %v1103
    %v1158 = vpop.f32.mrf.mxu0
    %v1159 = vadd.f32 %v1062, %v1158
    %v1160 = vpop.f32.mrf.mxu0
    %v1161 = vpop.f32.mrf.mxu0
    %v1162 = vadd.f32 %v1062, %v1161
    %v1163 = vpop.f32.mrf.mxu0
    %1164 = vmatprep.mubr.bf16.mxu0 0
    %1165 = vmatmul.mubr.bf16.gmra.mxu0 %v1106
    %v1166 = vpop.f32.mrf.mxu0
    %v1167 = vadd.f32 %v1062, %v1166
    %v1168 = vpop.f32.mrf.mxu0
    %v1169 = vpop.f32.mrf.mxu0
    %v1170 = vadd.f32 %v1062, %v1169
    %v1171 = vpop.f32.mrf.mxu0
    %1172 = vdwg.mxu0
    %1173 = vst [vmem:[#allocation2] sm:$0xff] %v1143
    %1174 = vst [vmem:[#allocation2 + $0x8] sm:$0xff] %v1146
    %1175 = vst [vmem:[#allocation2 + $0x10] sm:$0xff] %v1151
    %1176 = vst [vmem:[#allocation2 + $0x18] sm:$0xff] %v1154
    %1177 = vst [vmem:[#allocation2 + $0x20] sm:$0xff] %v1159
    %1178 = vst [vmem:[#allocation2 + $0x28] sm:$0xff] %v1162
    %1179 = vst [vmem:[#allocation2 + $0x30] sm:$0xff] %v1167
    %1180 = vst [vmem:[#allocation2 + $0x38] sm:$0xff] %v1170
    %1181 = vst.msk [vmem:[#allocation3] sm:$0xff] %vm147, 0.0
    %1182 = vst.msk [vmem:[#allocation4] sm:$0xff] %vm147, 0.0
    %v1183 = vld [vmem:[#allocation2] sm:$0xff]
    %v1184 = vld [vmem:[#allocation3] sm:$0xff]
    %v1185 = vpack.c.bf16 %v1184, %v1184
    %v1186 = vld [vmem:[%s5] sm:$0xf]
    %v1187 = vld [vmem:[%s5 + $0x4] sm:$0xf]
    %v1188 = vld [vmem:[%s5 + $0x8] sm:$0xf]
    %v1189 = vld [vmem:[%s5 + $0xc] sm:$0xf]
    %v1194 = vunpack.c.l.b16 %v1186
    %v1195 = vunpack.c.l.b16 %v1187
    %v1196 = vunpack.c.l.b16 %v1188
    %v1197 = vunpack.c.l.b16 %v1189
    %v1198 = vpack.c.b16 %v1195, %v1194
    %v1199 = vpack.c.b16 %v1197, %v1196
    %v1203 = vsel %vm147, %v1185, 0
    %1205 = vmatprep.subr.bf16.mxu0 0
    %1206 = vmatpush1.bf16.msra.mxu0 0
    %1207 = vmatprep.subr.bf16.mxu0 0
    %1208 = vmatpush1.bf16.msra.mxu0 0
    %1209 = vmatprep.subr.bf16.mxu0 0
    %1210 = vmatpush1.bf16.msra.mxu0 0
    %1211 = vmatprep.subr.bf16.mxu0 0
    %1212 = vmatpush1.bf16.msra.mxu0 0
    %1213 = vmatprep.subr.bf16.mxu0 0
    %1214 = vmatpush1.bf16.msra.mxu0 0
    %1215 = vmatprep.subr.bf16.mxu0 0
    %1216 = vmatpush1.bf16.msra.mxu0 0
    %1217 = vmatprep.subr.bf16.mxu0 0
    %1218 = vmatpush1.bf16.msra.mxu0 %v1199
    %1219 = vmatprep.subr.bf16.mxu0 0
    %1220 = vmatpush1.bf16.msra.mxu0 %v1198
    %1221 = vmatprep.subr.bf16.mxu0 0
    %1222 = vmatpush2.bf16.msra.mxu0 0
    %1223 = vmatprep.subr.bf16.mxu0 0
    %1224 = vmatpush2.bf16.msra.mxu0 0
    %1225 = vmatprep.subr.bf16.mxu0 0
    %1226 = vmatpush2.bf16.msra.mxu0 0
    %1227 = vmatprep.subr.bf16.mxu0 0
    %1228 = vmatpush2.bf16.msra.mxu0 0
    %1229 = vmatprep.subr.bf16.mxu0 0
    %1230 = vmatpush2.bf16.msra.mxu0 0
    %1231 = vmatprep.subr.bf16.mxu0 0
    %1232 = vmatpush2.bf16.msra.mxu0 0
    %1233 = vmatprep.subr.bf16.mxu0 0
    %1234 = vmatpush2.bf16.msra.mxu0 0
    %1235 = vmatprep.subr.bf16.mxu0 0
    %1236 = vmatpush2.bf16.msra.mxu0 0
    %1237 = vmatprep.mubr.bf16.mxu0 0
    %1238 = vmatmul.mubr.bf16.gmra.mxu0 %v1203
    %v1239 = vpop.f32.mrf.mxu0
    %v1240 = vadd.f32 0.0, %v1239
    %v1241 = vpop.f32.mrf.mxu0
    %v1242 = vpop.f32.mrf.mxu0
    %v1243 = vpop.f32.mrf.mxu0
    %1244 = vdwg.mxu0
    %v1245 = vadd.f32 %v1183, %v1240
    %v1246 = vxor.u32 %v1245, 2147483648
    %v1247 = vmul.f32 %v1246, 1.442695
    %v1248 = vpow.pop %v1247
    %v1249 = vadd.f32 %v1248, 1.0
    %v1250 = vrcp.pop %v1249
    %v1251 = vmul.f32 1.0, %v1250
    %v1252 = vtanh.pop %v1245
    %v1253 = vld [vmem:[#allocation4] sm:$0xff]
    %1255 = vrot.lane.b32.xlu0 %v1253, 32
    %v1256 = vpop.permute.xlu0 %1255
    %v1258 = vmul.f32 %v1251, %v1256
    %1260 = vrot.lane.b32.xlu0 %v1252, 32
    %v1261 = vpop.permute.xlu0 %1260
    %v1263 = vmul.f32 %v1251, %v1261
    %1265 = vrot.lane.b32.xlu0 %v1263, 32
    %v1266 = vpop.permute.xlu0 %1265
    %v1268 = vadd.f32 %v1258, %v1266
    %v1269 = vtanh.pop %v1268
    %1271 = vrot.lane.b32.xlu0 %v1269, 32
    %v1272 = vpop.permute.xlu0 %1271
    %v1274 = vmul.f32 %v1251, %v1272
    %1276 = vrot.lane.b32.xlu0 %v1268, 96
    %v1277 = vpop.permute.xlu0 %1276
    %1279 = vst.msk [vmem:[#allocation4] sm:$0xff] %vm147, %v1277
    %1281 = vrot.lane.b32.xlu0 %v1274, 64
    %v1282 = vpop.permute.xlu0 %1281
    %1284 = vst.msk [vmem:[#allocation3] sm:$0xff] %vm147, %v1282
    %v1285 = vld [vmem:[%s261] sm:$0xff]
    %v1286 = vld [vmem:[#allocation3] sm:$0xff]
    %v1287 = vpack.c.bf16 %v1286, %v1286
    %v1288 = vld [vmem:[%s5] sm:$0xf]
    %v1289 = vld [vmem:[%s5 + $0x4] sm:$0xf]
    %v1290 = vld [vmem:[%s5 + $0x8] sm:$0xf]
    %v1291 = vld [vmem:[%s5 + $0xc] sm:$0xf]
    %v1296 = vunpack.c.l.b16 %v1288
    %v1297 = vunpack.c.l.b16 %v1289
    %v1298 = vunpack.c.l.b16 %v1290
    %v1299 = vunpack.c.l.b16 %v1291
    %v1300 = vpack.c.b16 %v1297, %v1296
    %v1301 = vpack.c.b16 %v1299, %v1298
    %v1305 = vsel %vm147, %v1287, 0
    %1307 = vmatprep.subr.bf16.mxu0 0
    %1308 = vmatpush1.bf16.msra.mxu0 0
    %1309 = vmatprep.subr.bf16.mxu0 0
    %1310 = vmatpush1.bf16.msra.mxu0 0
    %1311 = vmatprep.subr.bf16.mxu0 0
    %1312 = vmatpush1.bf16.msra.mxu0 0
    %1313 = vmatprep.subr.bf16.mxu0 0
    %1314 = vmatpush1.bf16.msra.mxu0 0
    %1315 = vmatprep.subr.bf16.mxu0 0
    %1316 = vmatpush1.bf16.msra.mxu0 0
    %1317 = vmatprep.subr.bf16.mxu0 0
    %1318 = vmatpush1.bf16.msra.mxu0 0
    %1319 = vmatprep.subr.bf16.mxu0 0
    %1320 = vmatpush1.bf16.msra.mxu0 %v1301
    %1321 = vmatprep.subr.bf16.mxu0 0
    %1322 = vmatpush1.bf16.msra.mxu0 %v1300
    %1323 = vmatprep.subr.bf16.mxu0 0
    %1324 = vmatpush2.bf16.msra.mxu0 0
    %1325 = vmatprep.subr.bf16.mxu0 0
    %1326 = vmatpush2.bf16.msra.mxu0 0
    %1327 = vmatprep.subr.bf16.mxu0 0
    %1328 = vmatpush2.bf16.msra.mxu0 0
    %1329 = vmatprep.subr.bf16.mxu0 0
    %1330 = vmatpush2.bf16.msra.mxu0 0
    %1331 = vmatprep.subr.bf16.mxu0 0
    %1332 = vmatpush2.bf16.msra.mxu0 0
    %1333 = vmatprep.subr.bf16.mxu0 0
    %1334 = vmatpush2.bf16.msra.mxu0 0
    %1335 = vmatprep.subr.bf16.mxu0 0
    %1336 = vmatpush2.bf16.msra.mxu0 0
    %1337 = vmatprep.subr.bf16.mxu0 0
    %1338 = vmatpush2.bf16.msra.mxu0 0
    %1339 = vmatprep.mubr.bf16.mxu0 0
    %1340 = vmatmul.mubr.bf16.gmra.mxu0 %v1305
    %v1341 = vpop.f32.mrf.mxu0
    %v1342 = vadd.f32 0.0, %v1341
    %v1343 = vpop.f32.mrf.mxu0
    %v1344 = vpop.f32.mrf.mxu0
    %v1345 = vpop.f32.mrf.mxu0
    %1346 = vdwg.mxu0
    %v1347 = vadd.f32 %v1285, %v1342
    %v1348 = vxor.u32 %v1347, 2147483648
    %v1349 = vmul.f32 %v1348, 1.442695
    %v1350 = vpow.pop %v1349
    %v1351 = vadd.f32 %v1350, 1.0
    %v1352 = vrcp.pop %v1351
    %v1353 = vmul.f32 1.0, %v1352
    %v1354 = vtanh.pop %v1347
    %v1355 = vld [vmem:[#allocation4] sm:$0xff]
    %1357 = vrot.lane.b32.xlu0 %v1355, 32
    %v1358 = vpop.permute.xlu0 %1357
    %v1360 = vmul.f32 %v1353, %v1358
    %1362 = vrot.lane.b32.xlu0 %v1354, 32
    %v1363 = vpop.permute.xlu0 %1362
    %v1365 = vmul.f32 %v1353, %v1363
    %1367 = vrot.lane.b32.xlu0 %v1365, 32
    %v1368 = vpop.permute.xlu0 %1367
    %v1370 = vadd.f32 %v1360, %v1368
    %v1371 = vtanh.pop %v1370
    %1373 = vrot.lane.b32.xlu0 %v1371, 32
    %v1374 = vpop.permute.xlu0 %1373
    %v1376 = vmul.f32 %v1353, %v1374
    %1378 = vrot.lane.b32.xlu0 %v1370, 96
    %v1379 = vpop.permute.xlu0 %1378
    %1381 = vst.msk [vmem:[#allocation4] sm:$0xff] %vm147, %v1379
    %1383 = vrot.lane.b32.xlu0 %v1376, 64
    %v1384 = vpop.permute.xlu0 %1383
    %1386 = vst.msk [vmem:[#allocation3] sm:$0xff] %vm147, %v1384
    %v1387 = vld [vmem:[%s373] sm:$0xff]
    %v1388 = vld [vmem:[#allocation3] sm:$0xff]
    %v1389 = vpack.c.bf16 %v1388, %v1388
    %v1390 = vld [vmem:[%s5] sm:$0xf]
    %v1391 = vld [vmem:[%s5 + $0x4] sm:$0xf]
    %v1392 = vld [vmem:[%s5 + $0x8] sm:$0xf]
    %v1393 = vld [vmem:[%s5 + $0xc] sm:$0xf]
    %v1398 = vunpack.c.l.b16 %v1390
    %v1399 = vunpack.c.l.b16 %v1391
    %v1400 = vunpack.c.l.b16 %v1392
    %v1401 = vunpack.c.l.b16 %v1393
    %v1402 = vpack.c.b16 %v1399, %v1398
    %v1403 = vpack.c.b16 %v1401, %v1400
    %v1407 = vsel %vm147, %v1389, 0
    %1409 = vmatprep.subr.bf16.mxu0 0
    %1410 = vmatpush1.bf16.msra.mxu0 0
    %1411 = vmatprep.subr.bf16.mxu0 0
    %1412 = vmatpush1.bf16.msra.mxu0 0
    %1413 = vmatprep.subr.bf16.mxu0 0
    %1414 = vmatpush1.bf16.msra.mxu0 0
    %1415 = vmatprep.subr.bf16.mxu0 0
    %1416 = vmatpush1.bf16.msra.mxu0 0
    %1417 = vmatprep.subr.bf16.mxu0 0
    %1418 = vmatpush1.bf16.msra.mxu0 0
    %1419 = vmatprep.subr.bf16.mxu0 0
    %1420 = vmatpush1.bf16.msra.mxu0 0
    %1421 = vmatprep.subr.bf16.mxu0 0
    %1422 = vmatpush1.bf16.msra.mxu0 %v1403
    %1423 = vmatprep.subr.bf16.mxu0 0
    %1424 = vmatpush1.bf16.msra.mxu0 %v1402
    %1425 = vmatprep.subr.bf16.mxu0 0
    %1426 = vmatpush2.bf16.msra.mxu0 0
    %1427 = vmatprep.subr.bf16.mxu0 0
    %1428 = vmatpush2.bf16.msra.mxu0 0
    %1429 = vmatprep.subr.bf16.mxu0 0
    %1430 = vmatpush2.bf16.msra.mxu0 0
    %1431 = vmatprep.subr.bf16.mxu0 0
    %1432 = vmatpush2.bf16.msra.mxu0 0
    %1433 = vmatprep.subr.bf16.mxu0 0
    %1434 = vmatpush2.bf16.msra.mxu0 0
    %1435 = vmatprep.subr.bf16.mxu0 0
    %1436 = vmatpush2.bf16.msra.mxu0 0
    %1437 = vmatprep.subr.bf16.mxu0 0
    %1438 = vmatpush2.bf16.msra.mxu0 0
    %1439 = vmatprep.subr.bf16.mxu0 0
    %1440 = vmatpush2.bf16.msra.mxu0 0
    %1441 = vmatprep.mubr.bf16.mxu0 0
    %1442 = vmatmul.mubr.bf16.gmra.mxu0 %v1407
    %v1443 = vpop.f32.mrf.mxu0
    %v1444 = vadd.f32 0.0, %v1443
    %v1445 = vpop.f32.mrf.mxu0
    %v1446 = vpop.f32.mrf.mxu0
    %v1447 = vpop.f32.mrf.mxu0
    %1448 = vdwg.mxu0
    %v1449 = vadd.f32 %v1387, %v1444
    %v1450 = vxor.u32 %v1449, 2147483648
    %v1451 = vmul.f32 %v1450, 1.442695
    %v1452 = vpow.pop %v1451
    %v1453 = vadd.f32 %v1452, 1.0
    %v1454 = vrcp.pop %v1453
    %v1455 = vmul.f32 1.0, %v1454
    %v1456 = vtanh.pop %v1449
    %v1457 = vld [vmem:[#allocation4] sm:$0xff]
    %1459 = vrot.lane.b32.xlu0 %v1457, 32
    %v1460 = vpop.permute.xlu0 %1459
    %v1462 = vmul.f32 %v1455, %v1460
    %1464 = vrot.lane.b32.xlu0 %v1456, 32
    %v1465 = vpop.permute.xlu0 %1464
    %v1467 = vmul.f32 %v1455, %v1465
    %1469 = vrot.lane.b32.xlu0 %v1467, 32
    %v1470 = vpop.permute.xlu0 %1469
    %v1472 = vadd.f32 %v1462, %v1470
    %v1473 = vtanh.pop %v1472
    %1475 = vrot.lane.b32.xlu0 %v1473, 32
    %v1476 = vpop.permute.xlu0 %1475
    %v1478 = vmul.f32 %v1455, %v1476
    %1480 = vrot.lane.b32.xlu0 %v1472, 96
    %v1481 = vpop.permute.xlu0 %1480
    %1483 = vst.msk [vmem:[#allocation4] sm:$0xff] %vm147, %v1481
    %1485 = vrot.lane.b32.xlu0 %v1478, 64
    %v1486 = vpop.permute.xlu0 %1485
    %1488 = vst.msk [vmem:[#allocation3] sm:$0xff] %vm147, %v1486
    %v1489 = vld [vmem:[%s485] sm:$0xff]
    %v1490 = vld [vmem:[#allocation3] sm:$0xff]
    %v1491 = vpack.c.bf16 %v1490, %v1490
    %v1492 = vld [vmem:[%s5] sm:$0xf]
    %v1493 = vld [vmem:[%s5 + $0x4] sm:$0xf]
    %v1494 = vld [vmem:[%s5 + $0x8] sm:$0xf]
    %v1495 = vld [vmem:[%s5 + $0xc] sm:$0xf]
    %v1500 = vunpack.c.l.b16 %v1492
    %v1501 = vunpack.c.l.b16 %v1493
    %v1502 = vunpack.c.l.b16 %v1494
    %v1503 = vunpack.c.l.b16 %v1495
    %v1504 = vpack.c.b16 %v1501, %v1500
    %v1505 = vpack.c.b16 %v1503, %v1502
    %v1509 = vsel %vm147, %v1491, 0
    %1511 = vmatprep.subr.bf16.mxu0 0
    %1512 = vmatpush1.bf16.msra.mxu0 0
    %1513 = vmatprep.subr.bf16.mxu0 0
    %1514 = vmatpush1.bf16.msra.mxu0 0
    %1515 = vmatprep.subr.bf16.mxu0 0
    %1516 = vmatpush1.bf16.msra.mxu0 0
    %1517 = vmatprep.subr.bf16.mxu0 0
    %1518 = vmatpush1.bf16.msra.mxu0 0
    %1519 = vmatprep.subr.bf16.mxu0 0
    %1520 = vmatpush1.bf16.msra.mxu0 0
    %1521 = vmatprep.subr.bf16.mxu0 0
    %1522 = vmatpush1.bf16.msra.mxu0 0
    %1523 = vmatprep.subr.bf16.mxu0 0
    %1524 = vmatpush1.bf16.msra.mxu0 %v1505
    %1525 = vmatprep.subr.bf16.mxu0 0
    %1526 = vmatpush1.bf16.msra.mxu0 %v1504
    %1527 = vmatprep.subr.bf16.mxu0 0
    %1528 = vmatpush2.bf16.msra.mxu0 0
    %1529 = vmatprep.subr.bf16.mxu0 0
    %1530 = vmatpush2.bf16.msra.mxu0 0
    %1531 = vmatprep.subr.bf16.mxu0 0
    %1532 = vmatpush2.bf16.msra.mxu0 0
    %1533 = vmatprep.subr.bf16.mxu0 0
    %1534 = vmatpush2.bf16.msra.mxu0 0
    %1535 = vmatprep.subr.bf16.mxu0 0
    %1536 = vmatpush2.bf16.msra.mxu0 0
    %1537 = vmatprep.subr.bf16.mxu0 0
    %1538 = vmatpush2.bf16.msra.mxu0 0
    %1539 = vmatprep.subr.bf16.mxu0 0
    %1540 = vmatpush2.bf16.msra.mxu0 0
    %1541 = vmatprep.subr.bf16.mxu0 0
    %1542 = vmatpush2.bf16.msra.mxu0 0
    %1543 = vmatprep.mubr.bf16.mxu0 0
    %1544 = vmatmul.mubr.bf16.gmra.mxu0 %v1509
    %v1545 = vpop.f32.mrf.mxu0
    %v1546 = vadd.f32 0.0, %v1545
    %v1547 = vpop.f32.mrf.mxu0
    %v1548 = vpop.f32.mrf.mxu0
    %v1549 = vpop.f32.mrf.mxu0
    %1550 = vdwg.mxu0
    %v1551 = vadd.f32 %v1489, %v1546
    %v1552 = vxor.u32 %v1551, 2147483648
    %v1553 = vmul.f32 %v1552, 1.442695
    %v1554 = vpow.pop %v1553
    %v1555 = vadd.f32 %v1554, 1.0
    %v1556 = vrcp.pop %v1555
    %v1557 = vmul.f32 1.0, %v1556
    %v1558 = vtanh.pop %v1551
    %v1559 = vld [vmem:[#allocation4] sm:$0xff]
    %1561 = vrot.lane.b32.xlu0 %v1559, 32
    %v1562 = vpop.permute.xlu0 %1561
    %v1564 = vmul.f32 %v1557, %v1562
    %1566 = vrot.lane.b32.xlu0 %v1558, 32
    %v1567 = vpop.permute.xlu0 %1566
    %v1569 = vmul.f32 %v1557, %v1567
    %1571 = vrot.lane.b32.xlu0 %v1569, 32
    %v1572 = vpop.permute.xlu0 %1571
    %v1574 = vadd.f32 %v1564, %v1572
    %v1575 = vtanh.pop %v1574
    %1577 = vrot.lane.b32.xlu0 %v1575, 32
    %v1578 = vpop.permute.xlu0 %1577
    %v1580 = vmul.f32 %v1557, %v1578
    %1582 = vrot.lane.b32.xlu0 %v1574, 96
    %v1583 = vpop.permute.xlu0 %1582
    %1585 = vst.msk [vmem:[#allocation4] sm:$0xff] %vm147, %v1583
    %1587 = vrot.lane.b32.xlu0 %v1580, 64
    %v1588 = vpop.permute.xlu0 %1587
    %1590 = vst.msk [vmem:[#allocation3] sm:$0xff] %vm147, %v1588
    %v1591 = vld [vmem:[%s597] sm:$0xff]
    %v1592 = vld [vmem:[#allocation3] sm:$0xff]
    %v1593 = vpack.c.bf16 %v1592, %v1592
    %v1594 = vld [vmem:[%s5] sm:$0xf]
    %v1595 = vld [vmem:[%s5 + $0x4] sm:$0xf]
    %v1596 = vld [vmem:[%s5 + $0x8] sm:$0xf]
    %v1597 = vld [vmem:[%s5 + $0xc] sm:$0xf]
    %v1602 = vunpack.c.l.b16 %v1594
    %v1603 = vunpack.c.l.b16 %v1595
    %v1604 = vunpack.c.l.b16 %v1596
    %v1605 = vunpack.c.l.b16 %v1597
    %v1606 = vpack.c.b16 %v1603, %v1602
    %v1607 = vpack.c.b16 %v1605, %v1604
    %v1611 = vsel %vm147, %v1593, 0
    %1613 = vmatprep.subr.bf16.mxu0 0
    %1614 = vmatpush1.bf16.msra.mxu0 0
    %1615 = vmatprep.subr.bf16.mxu0 0
    %1616 = vmatpush1.bf16.msra.mxu0 0
    %1617 = vmatprep.subr.bf16.mxu0 0
    %1618 = vmatpush1.bf16.msra.mxu0 0
    %1619 = vmatprep.subr.bf16.mxu0 0
    %1620 = vmatpush1.bf16.msra.mxu0 0
    %1621 = vmatprep.subr.bf16.mxu0 0
    %1622 = vmatpush1.bf16.msra.mxu0 0
    %1623 = vmatprep.subr.bf16.mxu0 0
    %1624 = vmatpush1.bf16.msra.mxu0 0
    %1625 = vmatprep.subr.bf16.mxu0 0
    %1626 = vmatpush1.bf16.msra.mxu0 %v1607
    %1627 = vmatprep.subr.bf16.mxu0 0
    %1628 = vmatpush1.bf16.msra.mxu0 %v1606
    %1629 = vmatprep.subr.bf16.mxu0 0
    %1630 = vmatpush2.bf16.msra.mxu0 0
    %1631 = vmatprep.subr.bf16.mxu0 0
    %1632 = vmatpush2.bf16.msra.mxu0 0
    %1633 = vmatprep.subr.bf16.mxu0 0
    %1634 = vmatpush2.bf16.msra.mxu0 0
    %1635 = vmatprep.subr.bf16.mxu0 0
    %1636 = vmatpush2.bf16.msra.mxu0 0
    %1637 = vmatprep.subr.bf16.mxu0 0
    %1638 = vmatpush2.bf16.msra.mxu0 0
    %1639 = vmatprep.subr.bf16.mxu0 0
    %1640 = vmatpush2.bf16.msra.mxu0 0
    %1641 = vmatprep.subr.bf16.mxu0 0
    %1642 = vmatpush2.bf16.msra.mxu0 0
    %1643 = vmatprep.subr.bf16.mxu0 0
    %1644 = vmatpush2.bf16.msra.mxu0 0
    %1645 = vmatprep.mubr.bf16.mxu0 0
    %1646 = vmatmul.mubr.bf16.gmra.mxu0 %v1611
    %v1647 = vpop.f32.mrf.mxu0
    %v1648 = vadd.f32 0.0, %v1647
    %v1649 = vpop.f32.mrf.mxu0
    %v1650 = vpop.f32.mrf.mxu0
    %v1651 = vpop.f32.mrf.mxu0
    %1652 = vdwg.mxu0
    %v1653 = vadd.f32 %v1591, %v1648
    %v1654 = vxor.u32 %v1653, 2147483648
    %v1655 = vmul.f32 %v1654, 1.442695
    %v1656 = vpow.pop %v1655
    %v1657 = vadd.f32 %v1656, 1.0
    %v1658 = vrcp.pop %v1657
    %v1659 = vmul.f32 1.0, %v1658
    %v1660 = vtanh.pop %v1653
    %v1661 = vld [vmem:[#allocation4] sm:$0xff]
    %1663 = vrot.lane.b32.xlu0 %v1661, 32
    %v1664 = vpop.permute.xlu0 %1663
    %v1666 = vmul.f32 %v1659, %v1664
    %1668 = vrot.lane.b32.xlu0 %v1660, 32
    %v1669 = vpop.permute.xlu0 %1668
    %v1671 = vmul.f32 %v1659, %v1669
    %1673 = vrot.lane.b32.xlu0 %v1671, 32
    %v1674 = vpop.permute.xlu0 %1673
    %v1676 = vadd.f32 %v1666, %v1674
    %v1677 = vtanh.pop %v1676
    %1679 = vrot.lane.b32.xlu0 %v1677, 32
    %v1680 = vpop.permute.xlu0 %1679
    %v1682 = vmul.f32 %v1659, %v1680
    %1684 = vrot.lane.b32.xlu0 %v1676, 96
    %v1685 = vpop.permute.xlu0 %1684
    %1687 = vst.msk [vmem:[#allocation4] sm:$0xff] %vm147, %v1685
    %1689 = vrot.lane.b32.xlu0 %v1682, 64
    %v1690 = vpop.permute.xlu0 %1689
    %1692 = vst.msk [vmem:[#allocation3] sm:$0xff] %vm147, %v1690
    %v1693 = vld [vmem:[%s709] sm:$0xff]
    %v1694 = vld [vmem:[#allocation3] sm:$0xff]
    %v1695 = vpack.c.bf16 %v1694, %v1694
    %v1696 = vld [vmem:[%s5] sm:$0xf]
    %v1697 = vld [vmem:[%s5 + $0x4] sm:$0xf]
    %v1698 = vld [vmem:[%s5 + $0x8] sm:$0xf]
    %v1699 = vld [vmem:[%s5 + $0xc] sm:$0xf]
    %v1704 = vunpack.c.l.b16 %v1696
    %v1705 = vunpack.c.l.b16 %v1697
    %v1706 = vunpack.c.l.b16 %v1698
    %v1707 = vunpack.c.l.b16 %v1699
    %v1708 = vpack.c.b16 %v1705, %v1704
    %v1709 = vpack.c.b16 %v1707, %v1706
    %v1713 = vsel %vm147, %v1695, 0
    %1715 = vmatprep.subr.bf16.mxu0 0
    %1716 = vmatpush1.bf16.msra.mxu0 0
    %1717 = vmatprep.subr.bf16.mxu0 0
    %1718 = vmatpush1.bf16.msra.mxu0 0
    %1719 = vmatprep.subr.bf16.mxu0 0
    %1720 = vmatpush1.bf16.msra.mxu0 0
    %1721 = vmatprep.subr.bf16.mxu0 0
    %1722 = vmatpush1.bf16.msra.mxu0 0
    %1723 = vmatprep.subr.bf16.mxu0 0
    %1724 = vmatpush1.bf16.msra.mxu0 0
    %1725 = vmatprep.subr.bf16.mxu0 0
    %1726 = vmatpush1.bf16.msra.mxu0 0
    %1727 = vmatprep.subr.bf16.mxu0 0
    %1728 = vmatpush1.bf16.msra.mxu0 %v1709
    %1729 = vmatprep.subr.bf16.mxu0 0
    %1730 = vmatpush1.bf16.msra.mxu0 %v1708
    %1731 = vmatprep.subr.bf16.mxu0 0
    %1732 = vmatpush2.bf16.msra.mxu0 0
    %1733 = vmatprep.subr.bf16.mxu0 0
    %1734 = vmatpush2.bf16.msra.mxu0 0
    %1735 = vmatprep.subr.bf16.mxu0 0
    %1736 = vmatpush2.bf16.msra.mxu0 0
    %1737 = vmatprep.subr.bf16.mxu0 0
    %1738 = vmatpush2.bf16.msra.mxu0 0
    %1739 = vmatprep.subr.bf16.mxu0 0
    %1740 = vmatpush2.bf16.msra.mxu0 0
    %1741 = vmatprep.subr.bf16.mxu0 0
    %1742 = vmatpush2.bf16.msra.mxu0 0
    %1743 = vmatprep.subr.bf16.mxu0 0
    %1744 = vmatpush2.bf16.msra.mxu0 0
    %1745 = vmatprep.subr.bf16.mxu0 0
    %1746 = vmatpush2.bf16.msra.mxu0 0
    %1747 = vmatprep.mubr.bf16.mxu0 0
    %1748 = vmatmul.mubr.bf16.gmra.mxu0 %v1713
    %v1749 = vpop.f32.mrf.mxu0
    %v1750 = vadd.f32 0.0, %v1749
    %v1751 = vpop.f32.mrf.mxu0
    %v1752 = vpop.f32.mrf.mxu0
    %v1753 = vpop.f32.mrf.mxu0
    %1754 = vdwg.mxu0
    %v1755 = vadd.f32 %v1693, %v1750
    %v1756 = vxor.u32 %v1755, 2147483648
    %v1757 = vmul.f32 %v1756, 1.442695
    %v1758 = vpow.pop %v1757
    %v1759 = vadd.f32 %v1758, 1.0
    %v1760 = vrcp.pop %v1759
    %v1761 = vmul.f32 1.0, %v1760
    %v1762 = vtanh.pop %v1755
    %v1763 = vld [vmem:[#allocation4] sm:$0xff]
    %1765 = vrot.lane.b32.xlu0 %v1763, 32
    %v1766 = vpop.permute.xlu0 %1765
    %v1768 = vmul.f32 %v1761, %v1766
    %1770 = vrot.lane.b32.xlu0 %v1762, 32
    %v1771 = vpop.permute.xlu0 %1770
    %v1773 = vmul.f32 %v1761, %v1771
    %1775 = vrot.lane.b32.xlu0 %v1773, 32
    %v1776 = vpop.permute.xlu0 %1775
    %v1778 = vadd.f32 %v1768, %v1776
    %v1779 = vtanh.pop %v1778
    %1781 = vrot.lane.b32.xlu0 %v1779, 32
    %v1782 = vpop.permute.xlu0 %1781
    %v1784 = vmul.f32 %v1761, %v1782
    %1786 = vrot.lane.b32.xlu0 %v1778, 96
    %v1787 = vpop.permute.xlu0 %1786
    %1789 = vst.msk [vmem:[#allocation4] sm:$0xff] %vm147, %v1787
    %1791 = vrot.lane.b32.xlu0 %v1784, 64
    %v1792 = vpop.permute.xlu0 %1791
    %1794 = vst.msk [vmem:[#allocation3] sm:$0xff] %vm147, %v1792
    %v1795 = vld [vmem:[%s821] sm:$0xff]
    %v1796 = vld [vmem:[#allocation3] sm:$0xff]
    %v1797 = vpack.c.bf16 %v1796, %v1796
    %v1798 = vld [vmem:[%s5] sm:$0xf]
    %v1799 = vld [vmem:[%s5 + $0x4] sm:$0xf]
    %v1800 = vld [vmem:[%s5 + $0x8] sm:$0xf]
    %v1801 = vld [vmem:[%s5 + $0xc] sm:$0xf]
    %v1806 = vunpack.c.l.b16 %v1798
    %v1807 = vunpack.c.l.b16 %v1799
    %v1808 = vunpack.c.l.b16 %v1800
    %v1809 = vunpack.c.l.b16 %v1801
    %v1810 = vpack.c.b16 %v1807, %v1806
    %v1811 = vpack.c.b16 %v1809, %v1808
    %v1815 = vsel %vm147, %v1797, 0
    %1817 = vmatprep.subr.bf16.mxu0 0
    %1818 = vmatpush1.bf16.msra.mxu0 0
    %1819 = vmatprep.subr.bf16.mxu0 0
    %1820 = vmatpush1.bf16.msra.mxu0 0
    %1821 = vmatprep.subr.bf16.mxu0 0
    %1822 = vmatpush1.bf16.msra.mxu0 0
    %1823 = vmatprep.subr.bf16.mxu0 0
    %1824 = vmatpush1.bf16.msra.mxu0 0
    %1825 = vmatprep.subr.bf16.mxu0 0
    %1826 = vmatpush1.bf16.msra.mxu0 0
    %1827 = vmatprep.subr.bf16.mxu0 0
    %1828 = vmatpush1.bf16.msra.mxu0 0
    %1829 = vmatprep.subr.bf16.mxu0 0
    %1830 = vmatpush1.bf16.msra.mxu0 %v1811
    %1831 = vmatprep.subr.bf16.mxu0 0
    %1832 = vmatpush1.bf16.msra.mxu0 %v1810
    %1833 = vmatprep.subr.bf16.mxu0 0
    %1834 = vmatpush2.bf16.msra.mxu0 0
    %1835 = vmatprep.subr.bf16.mxu0 0
    %1836 = vmatpush2.bf16.msra.mxu0 0
    %1837 = vmatprep.subr.bf16.mxu0 0
    %1838 = vmatpush2.bf16.msra.mxu0 0
    %1839 = vmatprep.subr.bf16.mxu0 0
    %1840 = vmatpush2.bf16.msra.mxu0 0
    %1841 = vmatprep.subr.bf16.mxu0 0
    %1842 = vmatpush2.bf16.msra.mxu0 0
    %1843 = vmatprep.subr.bf16.mxu0 0
    %1844 = vmatpush2.bf16.msra.mxu0 0
    %1845 = vmatprep.subr.bf16.mxu0 0
    %1846 = vmatpush2.bf16.msra.mxu0 0
    %1847 = vmatprep.subr.bf16.mxu0 0
    %1848 = vmatpush2.bf16.msra.mxu0 0
    %1849 = vmatprep.mubr.bf16.mxu0 0
    %1850 = vmatmul.mubr.bf16.gmra.mxu0 %v1815
    %v1851 = vpop.f32.mrf.mxu0
    %v1852 = vadd.f32 0.0, %v1851
    %v1853 = vpop.f32.mrf.mxu0
    %v1854 = vpop.f32.mrf.mxu0
    %v1855 = vpop.f32.mrf.mxu0
    %1856 = vdwg.mxu0
    %v1857 = vadd.f32 %v1795, %v1852
    %v1858 = vxor.u32 %v1857, 2147483648
    %v1859 = vmul.f32 %v1858, 1.442695
    %v1860 = vpow.pop %v1859
    %v1861 = vadd.f32 %v1860, 1.0
    %v1862 = vrcp.pop %v1861
    %v1863 = vmul.f32 1.0, %v1862
    %v1864 = vtanh.pop %v1857
    %v1865 = vld [vmem:[#allocation4] sm:$0xff]
    %1867 = vrot.lane.b32.xlu0 %v1865, 32
    %v1868 = vpop.permute.xlu0 %1867
    %v1870 = vmul.f32 %v1863, %v1868
    %1872 = vrot.lane.b32.xlu0 %v1864, 32
    %v1873 = vpop.permute.xlu0 %1872
    %v1875 = vmul.f32 %v1863, %v1873
    %1877 = vrot.lane.b32.xlu0 %v1875, 32
    %v1878 = vpop.permute.xlu0 %1877
    %v1880 = vadd.f32 %v1870, %v1878
    %v1881 = vtanh.pop %v1880
    %1883 = vrot.lane.b32.xlu0 %v1881, 32
    %v1884 = vpop.permute.xlu0 %1883
    %v1886 = vmul.f32 %v1863, %v1884
    %1888 = vrot.lane.b32.xlu0 %v1880, 96
    %v1889 = vpop.permute.xlu0 %1888
    %1891 = vst.msk [vmem:[#allocation4] sm:$0xff] %vm147, %v1889
    %1893 = vrot.lane.b32.xlu0 %v1886, 64
    %v1894 = vpop.permute.xlu0 %1893
    %1896 = vst.msk [vmem:[#allocation3] sm:$0xff] %vm147, %v1894
    %v1897 = vld [vmem:[%s933] sm:$0xff]
    %v1898 = vld [vmem:[#allocation3] sm:$0xff]
    %v1899 = vpack.c.bf16 %v1898, %v1898
    %v1900 = vld [vmem:[%s5] sm:$0xf]
    %v1901 = vld [vmem:[%s5 + $0x4] sm:$0xf]
    %v1902 = vld [vmem:[%s5 + $0x8] sm:$0xf]
    %v1903 = vld [vmem:[%s5 + $0xc] sm:$0xf]
    %v1908 = vunpack.c.l.b16 %v1900
    %v1909 = vunpack.c.l.b16 %v1901
    %v1910 = vunpack.c.l.b16 %v1902
    %v1911 = vunpack.c.l.b16 %v1903
    %v1912 = vpack.c.b16 %v1909, %v1908
    %v1913 = vpack.c.b16 %v1911, %v1910
    %v1917 = vsel %vm147, %v1899, 0
    %1919 = vmatprep.subr.bf16.mxu0 0
    %1920 = vmatpush1.bf16.msra.mxu0 0
    %1921 = vmatprep.subr.bf16.mxu0 0
    %1922 = vmatpush1.bf16.msra.mxu0 0
    %1923 = vmatprep.subr.bf16.mxu0 0
    %1924 = vmatpush1.bf16.msra.mxu0 0
    %1925 = vmatprep.subr.bf16.mxu0 0
    %1926 = vmatpush1.bf16.msra.mxu0 0
    %1927 = vmatprep.subr.bf16.mxu0 0
    %1928 = vmatpush1.bf16.msra.mxu0 0
    %1929 = vmatprep.subr.bf16.mxu0 0
    %1930 = vmatpush1.bf16.msra.mxu0 0
    %1931 = vmatprep.subr.bf16.mxu0 0
    %1932 = vmatpush1.bf16.msra.mxu0 %v1913
    %1933 = vmatprep.subr.bf16.mxu0 0
    %1934 = vmatpush1.bf16.msra.mxu0 %v1912
    %1935 = vmatprep.subr.bf16.mxu0 0
    %1936 = vmatpush2.bf16.msra.mxu0 0
    %1937 = vmatprep.subr.bf16.mxu0 0
    %1938 = vmatpush2.bf16.msra.mxu0 0
    %1939 = vmatprep.subr.bf16.mxu0 0
    %1940 = vmatpush2.bf16.msra.mxu0 0
    %1941 = vmatprep.subr.bf16.mxu0 0
    %1942 = vmatpush2.bf16.msra.mxu0 0
    %1943 = vmatprep.subr.bf16.mxu0 0
    %1944 = vmatpush2.bf16.msra.mxu0 0
    %1945 = vmatprep.subr.bf16.mxu0 0
    %1946 = vmatpush2.bf16.msra.mxu0 0
    %1947 = vmatprep.subr.bf16.mxu0 0
    %1948 = vmatpush2.bf16.msra.mxu0 0
    %1949 = vmatprep.subr.bf16.mxu0 0
    %1950 = vmatpush2.bf16.msra.mxu0 0
    %1951 = vmatprep.mubr.bf16.mxu0 0
    %1952 = vmatmul.mubr.bf16.gmra.mxu0 %v1917
    %v1953 = vpop.f32.mrf.mxu0
    %v1954 = vadd.f32 0.0, %v1953
    %v1955 = vpop.f32.mrf.mxu0
    %v1956 = vpop.f32.mrf.mxu0
    %v1957 = vpop.f32.mrf.mxu0
    %1958 = vdwg.mxu0
    %v1959 = vadd.f32 %v1897, %v1954
    %v1960 = vxor.u32 %v1959, 2147483648
    %v1961 = vmul.f32 %v1960, 1.442695
    %v1962 = vpow.pop %v1961
    %v1963 = vadd.f32 %v1962, 1.0
    %v1964 = vrcp.pop %v1963
    %v1965 = vmul.f32 1.0, %v1964
    %v1966 = vtanh.pop %v1959
    %v1967 = vld [vmem:[#allocation4] sm:$0xff]
    %1969 = vrot.lane.b32.xlu0 %v1967, 32
    %v1970 = vpop.permute.xlu0 %1969
    %v1972 = vmul.f32 %v1965, %v1970
    %1974 = vrot.lane.b32.xlu0 %v1966, 32
    %v1975 = vpop.permute.xlu0 %1974
    %v1977 = vmul.f32 %v1965, %v1975
    %1979 = vrot.lane.b32.xlu0 %v1977, 32
    %v1980 = vpop.permute.xlu0 %1979
    %v1982 = vadd.f32 %v1972, %v1980
    %v1983 = vtanh.pop %v1982
    %1985 = vrot.lane.b32.xlu0 %v1983, 32
    %v1986 = vpop.permute.xlu0 %1985
    %v1988 = vmul.f32 %v1965, %v1986
    %1990 = vrot.lane.b32.xlu0 %v1982, 96
    %v1991 = vpop.permute.xlu0 %1990
    %1993 = vst.msk [vmem:[#allocation4] sm:$0xff] %vm147, %v1991
    %1995 = vrot.lane.b32.xlu0 %v1988, 64
    %v1996 = vpop.permute.xlu0 %1995
    %1998 = vst.msk [vmem:[#allocation3] sm:$0xff] %vm147, %v1996
    %v1999 = vld [vmem:[#allocation3] sm:$0xff]
    %v2000 = vpack.c.bf16 %v1999, %v1999
    %v2001 = vld [vmem:[%s7] sm:$0xf]
    %v2002 = vld [vmem:[%s7 + $0x4] sm:$0xf]
    %v2003 = vld [vmem:[%s7 + $0x8] sm:$0xf]
    %v2004 = vld [vmem:[%s7 + $0xc] sm:$0xf]
    %v2005 = vld [vmem:[%s8] sm:$0x1]
    %v2007 = vlaneseq
    %v2008 = vshrl.u32 %v2007, 7
    %v2009 = vsub.s32 0, %v2008
    %v2010 = vrot.slane %v2005, %v2009
    %v2016 = vunpack.c.l.b16 %v2001
    %v2017 = vunpack.c.l.b16 %v2002
    %v2018 = vunpack.c.l.b16 %v2003
    %v2019 = vunpack.c.l.b16 %v2004
    %v2020 = vpack.c.b16 %v2017, %v2016
    %v2021 = vpack.c.b16 %v2019, %v2018
    %v2025 = vsel %vm147, %v2000, 0
    %2027 = vmatprep.subr.bf16.mxu0 0
    %2028 = vmatpush1.bf16.msra.mxu0 0
    %2029 = vmatprep.subr.bf16.mxu0 0
    %2030 = vmatpush1.bf16.msra.mxu0 0
    %2031 = vmatprep.subr.bf16.mxu0 0
    %2032 = vmatpush1.bf16.msra.mxu0 0
    %2033 = vmatprep.subr.bf16.mxu0 0
    %2034 = vmatpush1.bf16.msra.mxu0 0
    %2035 = vmatprep.subr.bf16.mxu0 0
    %2036 = vmatpush1.bf16.msra.mxu0 0
    %2037 = vmatprep.subr.bf16.mxu0 0
    %2038 = vmatpush1.bf16.msra.mxu0 0
    %2039 = vmatprep.subr.bf16.mxu0 0
    %2040 = vmatpush1.bf16.msra.mxu0 %v2021
    %2041 = vmatprep.subr.bf16.mxu0 0
    %2042 = vmatpush1.bf16.msra.mxu0 %v2020
    %2043 = vmatprep.subr.bf16.mxu0 0
    %2044 = vmatpush2.bf16.msra.mxu0 0
    %2045 = vmatprep.subr.bf16.mxu0 0
    %2046 = vmatpush2.bf16.msra.mxu0 0
    %2047 = vmatprep.subr.bf16.mxu0 0
    %2048 = vmatpush2.bf16.msra.mxu0 0
    %2049 = vmatprep.subr.bf16.mxu0 0
    %2050 = vmatpush2.bf16.msra.mxu0 0
    %2051 = vmatprep.subr.bf16.mxu0 0
    %2052 = vmatpush2.bf16.msra.mxu0 0
    %2053 = vmatprep.subr.bf16.mxu0 0
    %2054 = vmatpush2.bf16.msra.mxu0 0
    %2055 = vmatprep.subr.bf16.mxu0 0
    %2056 = vmatpush2.bf16.msra.mxu0 0
    %2057 = vmatprep.subr.bf16.mxu0 0
    %2058 = vmatpush2.bf16.msra.mxu0 0
    %2059 = vmatprep.mubr.bf16.mxu0 0
    %2060 = vmatmul.mubr.bf16.gmra.mxu0 %v2025
    %v2061 = vpop.f32.mrf.mxu0
    %v2062 = vadd.f32 %v2010, %v2061
    %v2063 = vpop.f32.mrf.mxu0
    %v2064 = vpop.f32.mrf.mxu0
    %v2065 = vpop.f32.mrf.mxu0
    %2066 = vdwg.mxu0
    %vm2067 = vcmask 64512
    %2068 = vst.msk [vmem:[#allocation6] sm:$0xff] %vm2067, %v2062
    // Predicated region
    $region38: #{rnn_forward.1} parent=1 // pred_check
      _
    $region39: #{rnn_forward.1} parent=1 // pred_check_branch
      %2070 = sbr.rel (0) target = $region41
    $region40: #{rnn_forward.1} parent=1 // pred_region
      %s2072 = ssub.s32 128, 128
      %2073 = vsyncadd [#allocation7], %s2072
      %s2075 = sshll.u32 [#allocation6], 4
      %s2076 = int_to_ptr.vmem [resolvable:$true] %s2075
      %2078 = dma.vmem_to_hbm [thread:$0]  %s2076, 128, %s9, [#allocation7]
    $region41: #{rnn_forward.1} parent=1 // pred_fallthru
      _
    // Predicated region
    $region42: #{rnn_forward.1} parent=1 // pred_check
      _
    $region43: #{rnn_forward.1} parent=1 // pred_check_branch
      %2080 = sbr.rel (0) target = $region45
    $region44: #{rnn_forward.1} parent=1 // pred_region
      %2081 = dma.done [#allocation7], 128
    $region45: #{rnn_forward.1} parent=1 // pred_fallthru
      _
    %2082 = vsyncpa [#allocation7], 1

</llo_original>
